<compile_context>
chip_gen: v6e
topology: v6e:2x2x1
jax: 0.10.0
libtpu: 0.0.40
codegen_flags: <defaults>
</compile_context>

<pallas_src>
import math

import jax
import jax.numpy as jnp
from jax.experimental import pallas as pl
from jax.experimental.pallas import tpu as pltpu


# ----------------------------------------------------------------------------------
# Fused multi-step kernel.  Grid = (batch_tiles, steps); step axis is "arbitrary".
# ----------------------------------------------------------------------------------
def _mac_fused_kernel(
    # inputs
    state_ref,    # (Bt, 4, D)  rows: [question, control_0, memory_0, memory_mask]
    words_ref,    # (Bt, S, D)  contextual words          (step-invariant)
    know_ref,     # (Bt, K, D)  knowledge base            (step-invariant)
    w_pa_ref,     # (1, D, D)   position_aware weight for the CURRENT step
    b_pa_ref,     # (1, 1, D)   position_aware bias for the CURRENT step
    sq_w_ref,     # (3, D, D)   [w_mem, w_cat_i^T, w_cat_k^T]   (resident)
    cat2_w_ref,   # (2, 2D, D)  [w_cq, w_w]                     (resident)
    vec_w_ref,    # (5, D)      [b_cq, w_ca, b_mem, w_ra, b_w]  (resident)
    # outputs
    control_out_ref,   # (1, Bt, D) -> stacked (T, B, D)
    memory_out_ref,    # (1, Bt, D) -> stacked (T, B, D)
    # VMEM carries (persist across the step axis)
    c_scr, m_scr,      # (Bt, D) f32
):
    f32 = jnp.float32
    t = pl.program_id(1)

    state = state_ref[...]            # (Bt, 4, D)
    question = state[:, 0, :]
    mask = state[:, 3, :]

    # Initialize the recurrent carries at the first step of each batch tile.
    @pl.when(t == 0)
    def _():
        c_scr[...] = state[:, 1, :]   # control_0
        m_scr[...] = state[:, 2, :]   # memory_0

    c_prev = c_scr[...]
    m_prev = m_scr[...]

    words = words_ref[...]            # (Bt, S, D)
    know = know_ref[...]              # (Bt, K, D)

    w_pa = w_pa_ref[0]                # (D, D)
    b_pa = b_pa_ref[0]                # (1, D)
    w_mem = sq_w_ref[0]               # (D, D)
    w_cat_i_t = sq_w_ref[1]           # (D, D)  == w_cat_i^T
    w_cat_k_t = sq_w_ref[2]           # (D, D)  == w_cat_k^T
    w_cq = cat2_w_ref[0]              # (2D, D)
    w_w = cat2_w_ref[1]               # (2D, D)
    vec_w = vec_w_ref[...]            # (5, D)
    b_cq = vec_w[0:1, :]
    w_ca = vec_w[1:2, :]
    b_mem = vec_w[2:3, :]
    w_ra = vec_w[3:4, :]
    b_w = vec_w[4:5, :]

    # ---------------- ControlUnit ----------------
    pa = jnp.dot(question, w_pa, preferred_element_type=f32) + b_pa            # (Bt, D)
    cq = jnp.dot(jnp.concatenate([c_prev, pa], axis=-1), w_cq,
                 preferred_element_type=f32) + b_cq                            # (Bt, D)
    # attn Linear(D,1) weight folded into the query; its bias is a per-row constant
    # on the logits and softmax is shift-invariant -> dropped.
    cq_w = cq * w_ca                                                           # (Bt, D)
    logits_c = jnp.sum(words * cq_w[:, None, :], axis=-1)                      # (Bt, S)
    m_c = jnp.max(logits_c, axis=-1, keepdims=True)
    e_c = jnp.exp(logits_c - m_c)
    attn_c = e_c / jnp.sum(e_c, axis=-1, keepdims=True)
    control = jnp.sum(attn_c[:, :, None] * words, axis=1)                      # (Bt, D)

    # ---------------- ReadUnit (algebraically collapsed) ----------------
    mem_proj = (jnp.dot(m_prev * mask, w_mem, preferred_element_type=f32)
                + b_mem)                                                       # (Bt, D)
    q = control * w_ra                                                         # (Bt, D)
    qi = jnp.dot(q, w_cat_i_t, preferred_element_type=f32)                     # (Bt, D)
    qk = jnp.dot(q, w_cat_k_t, preferred_element_type=f32)                     # (Bt, D)
    r_vec = mem_proj * qi + qk                                                 # (Bt, D)
    # b_cat.q and b_ra are per-row constants on the logits -> softmax-invariant, dropped.
    logits_r = jnp.sum(know * r_vec[:, None, :], axis=-1)                      # (Bt, K)
    m_r = jnp.max(logits_r, axis=-1, keepdims=True)
    e_r = jnp.exp(logits_r - m_r)
    attn_r = e_r / jnp.sum(e_r, axis=-1, keepdims=True)
    read = jnp.sum(attn_r[:, :, None] * know, axis=1)                          # (Bt, D)

    # ---------------- WriteUnit ----------------
    memory = (jnp.dot(jnp.concatenate([read, m_prev], axis=-1), w_w,
                      preferred_element_type=f32) + b_w)                       # (Bt, D)

    # Update carries and emit this step's (control, memory).
    c_scr[...] = control
    m_scr[...] = memory
    control_out_ref[0] = control.astype(control_out_ref.dtype)
    memory_out_ref[0] = memory.astype(memory_out_ref.dtype)


# ----------------------------------------------------------------------------------
# Wrapper
# ----------------------------------------------------------------------------------
def _default_batch_tile(B):
    # v5e / v6e: single TensorCore -> whole batch in one tile (no per-grid-step overhead,
    # biggest matmul M).  v7x: 2 TCs/chip -> split the batch in two so the "parallel"
    # batch axis shards across the cores (only when the halves stay sublane-aligned).
    try:
        kind = jax.devices()[0].device_kind.lower()
        n_tc = 2 if "7" in kind else 1
    except Exception:
        n_tc = 1
    if n_tc > 1 and B % (8 * n_tc) == 0:
        return B // n_tc
    return B


def mac_forward(words, question, img, control_init, memory_init, memory_mask,
                params, *, b_tile=None):
    """Runs the full T-step MAC recurrence (T = params['w_pa'].shape[0]) in ONE
    pallas_call.  Returns stacked (T, B, D) controls and memories -- exactly the
    per-step appends produced by applying MACCell.forward T times."""
    B, S, D = words.shape
    T = params["w_pa"].shape[0]
    _, _, H, W = img.shape
    K = H * W
    know = jnp.transpose(img.reshape(B, D, K), (0, 2, 1))                 # (B, K, D)

    if b_tile is None:
        b_tile = _default_batch_tile(B)
    assert B % b_tile == 0 and (b_tile == B or b_tile % 8 == 0)
    nb = B // b_tile

    # Pack the per-batch (B, D) vectors into one input, and the shared weights into
    # three VMEM-resident slabs (fewer refs -> fewer DMAs / less per-step bookkeeping).
    state_pack = jnp.stack([question, control_init, memory_init, memory_mask], axis=1)
    sq_w = jnp.stack([params["w_mem"], params["w_cat_i"].T, params["w_cat_k"].T])
    cat2_w = jnp.stack([params["w_cq"], params["w_w"]])
    vec_w = jnp.concatenate([params["b_cq"], params["w_ca"], params["b_mem"],
                             params["w_ra"], params["b_w"]], axis=0)

    args = (state_pack, words, know, params["w_pa"], params["b_pa"],
            sq_w, cat2_w, vec_w)

    in_specs = [
        pl.BlockSpec((b_tile, 4, D), lambda b, t: (b, 0, 0)),     # state (step-invariant)
        pl.BlockSpec((b_tile, S, D), lambda b, t: (b, 0, 0)),     # words (step-invariant)
        pl.BlockSpec((b_tile, K, D), lambda b, t: (b, 0, 0)),     # know  (step-invariant)
        pl.BlockSpec((1, D, D), lambda b, t: (t, 0, 0)),          # w_pa[step]
        pl.BlockSpec((1, 1, D), lambda b, t: (t, 0, 0)),          # b_pa[step]
        pl.BlockSpec((3, D, D), lambda b, t: (0, 0, 0)),          # shared square weights
        pl.BlockSpec((2, 2 * D, D), lambda b, t: (0, 0, 0)),      # shared (2D,D) weights
        pl.BlockSpec((5, D), lambda b, t: (0, 0)),                # shared vectors/biases
    ]
    out_specs = (pl.BlockSpec((1, b_tile, D), lambda b, t: (t, b, 0)),
                 pl.BlockSpec((1, b_tile, D), lambda b, t: (t, b, 0)))

    # Honest scoped-VMEM limit: double-buffered blocks + carries + headroom.
    blk_in = 4 * (b_tile * 4 * D + b_tile * S * D + b_tile * K * D
                  + D * D + D + 3 * D * D + 2 * (2 * D) * D + 5 * D)
    blk_out = 2 * b_tile * D * 4
    scratch_bytes = 2 * b_tile * D * 4
    vmem_limit = int(min(48 << 20,
                         max(8 << 20, 2 * (blk_in + blk_out) + scratch_bytes + (4 << 20))))

    flops = T * (16 * B * D * D + 4 * B * D * (S + K))
    bytes_accessed = (sum(int(a.size) * a.dtype.itemsize for a in args)
                      + 2 * T * B * D * 4)

    controls, memories = pl.pallas_call(
        _mac_fused_kernel,
        out_shape=(jax.ShapeDtypeStruct((T, B, D), jnp.float32),
                   jax.ShapeDtypeStruct((T, B, D), jnp.float32)),
        grid_spec=pltpu.PrefetchScalarGridSpec(
            num_scalar_prefetch=0,
            grid=(nb, T),                       # step axis LAST (sequential recurrence)
            in_specs=in_specs,
            out_specs=out_specs,
            scratch_shapes=[pltpu.VMEM((b_tile, D), jnp.float32),   # control carry
                            pltpu.VMEM((b_tile, D), jnp.float32)],  # memory carry
        ),
        compiler_params=pltpu.CompilerParams(
            dimension_semantics=("parallel", "arbitrary"),
            vmem_limit_bytes=vmem_limit,
        ),
        cost_estimate=pl.CostEstimate(flops=flops,
                                      transcendentals=T * B * (S + K),
                                      bytes_accessed=int(bytes_accessed)),
    )(*args)
    return controls, memories


# ----------------------------------------------------------------------------------
# Parameters (PyTorch Linear semantics, xavier_uniform weights), pre-transposed to
# (in, out) so the kernel does x @ W + b.  The attention / concat biases are given
# NONZERO values so the test proves the softmax-shift-invariance used by the kernel.
# ----------------------------------------------------------------------------------
def init_params(key, D, T):
    def xavier(k, shape):
        fan_in, fan_out = shape[-2], shape[-1]
        bound = math.sqrt(6.0 / (fan_in + fan_out))
        return jax.random.uniform(k, shape, jnp.float32, -bound, bound)

    keys = jax.random.split(key, 10)
    zeros = lambda *s: jnp.zeros(s, jnp.float32)
    w_cat = xavier(keys[4], (2 * D, D))      # ReadUnit concat Linear(2D, D), split so the
    return dict(                             # mem*know / know halves can be collapsed.
        # ControlUnit: per-step position_aware Linear(D, D), stacked over steps
        w_pa=xavier(keys[0], (T, D, D)), b_pa=zeros(T, 1, D),
        w_cq=xavier(keys[1], (2 * D, D)), b_cq=zeros(1, D),
        w_ca=jnp.transpose(xavier(keys[2], (D, 1))),
        b_ca=jnp.full((1, 1), 0.1, jnp.float32),          # softmax-shift-invariant
        # ReadUnit
        w_mem=xavier(keys[3], (D, D)), b_mem=zeros(1, D),
        w_cat_i=w_cat[:D], w_cat_k=w_cat[D:],
        b_cat=0.05 * jax.random.normal(keys[5], (1, D), jnp.float32),  # shift-invariant
        w_ra=jnp.transpose(xavier(keys[6], (D, 1))),
        b_ra=jnp.full((1, 1), -0.2, jnp.float32),         # softmax-shift-invariant
        # WriteUnit
        w_w=xavier(keys[7], (2 * D, D)), b_w=zeros(1, D),
    )


# Pure-JAX f32 reference for ONE MACCell step (un-optimized, keeps all biases and the
# full concat Linear) -- applied T times in the test.
def mac_cell_reference(words, question, know, c_prev, m_prev, mask, params, step):
    pa = question @ params["w_pa"][step] + params["b_pa"][step]
    cq = jnp.concatenate([c_prev, pa], -1) @ params["w_cq"] + params["b_cq"]
    logits_c = jnp.sum(cq[:, None, :] * words * params["w_ca"][None], -1) + params["b_ca"][0, 0]
    attn_c = jax.nn.softmax(logits_c, -1)
    control = jnp.sum(attn_c[:, :, None] * words, 1)
    mem_proj = (m_prev * mask) @ params["w_mem"] + params["b_mem"]
    inter = mem_proj[:, None, :] * know
    concat = inter @ params["w_cat_i"] + know @ params["w_cat_k"] + params["b_cat"]
    logits_r = jnp.sum(concat * control[:, None, :] * params["w_ra"][None], -1) + params["b_ra"][0, 0]
    attn_r = jax.nn.softmax(logits_r, -1)
    read = jnp.sum(attn_r[:, :, None] * know, 1)
    memory = jnp.concatenate([read, m_prev], -1) @ params["w_w"] + params["b_w"]
    return control, memory


if __name__ == "__main__":
    key = jax.random.PRNGKey(0)
    B, S, D, H, W, T = 16, 8, 128, 4, 4, 4      # batch, seq, hidden, spatial (K=16), steps
    dropout = 0.15
    k_words, k_q, k_img, k_mask, k_params = jax.random.split(key, 5)

    words = jax.random.normal(k_words, (B, S, D), jnp.float32)       # contextual words
    question = jax.random.normal(k_q, (B, D), jnp.float32)           # question vector
    img = jax.random.normal(k_img, (B, D, H, W), jnp.float32)        # NCHW knowledge base
    params = init_params(k_params, D, T)

    # init_hidden(): control_0 = question (random_control_init=False), mem_0 = zeros,
    # memory_mask = bernoulli(1 - p) / (1 - p)   (variational dropout, reused every step)
    control_0 = question
    memory_0 = jnp.zeros((B, D), jnp.float32)
    memory_mask = (jax.random.bernoulli(k_mask, 1.0 - dropout, (B, D)).astype(jnp.float32)
                   / (1.0 - dropout))

    # All T MAC steps in a single pallas_call.
    controls, memories = mac_forward(words, question, img, control_0, memory_0,
                                     memory_mask, params)
    jax.block_until_ready((controls, memories))
    assert controls.shape == (T, B, D) and memories.shape == (T, B, D)

    # Reference: apply the single-step cell T times; relative-error check per step.
    know_f32 = jnp.transpose(img.reshape(B, D, H * W), (0, 2, 1))
    c_r, m_r = control_0, memory_0
    for step in range(T):
        c_r, m_r = mac_cell_reference(words, question, know_f32, c_r, m_r,
                                      memory_mask, params, step)
        tol = 3e-2 if step == 0 else 8e-2
        for name, got, ref in (("control", controls[step], c_r),
                               ("memory", memories[step], m_r)):
            assert bool(jnp.all(jnp.isfinite(got))), (step, name)
            rel = float(jnp.max(jnp.abs(got - ref)) / (jnp.max(jnp.abs(ref)) + 1e-6))
            assert rel < tol, (step, name, rel)

    # glue: the network would consume controls/memories as the per-step appended lists.
    print("KERNEL_OK")
</pallas_src>

<mosaic_0001>
module attributes {stable_mosaic.version = 11 : i64} {
  func.func @_mac_fused_kernel(%arg0: i32, %arg1: i32, %arg2: memref<16x4x128xf32, #tpu.memory_space<vmem>>, %arg3: memref<16x8x128xf32, #tpu.memory_space<vmem>>, %arg4: memref<16x16x128xf32, #tpu.memory_space<vmem>>, %arg5: memref<1x128x128xf32, #tpu.memory_space<vmem>>, %arg6: memref<1x1x128xf32, #tpu.memory_space<vmem>>, %arg7: memref<3x128x128xf32, #tpu.memory_space<vmem>>, %arg8: memref<2x256x128xf32, #tpu.memory_space<vmem>>, %arg9: memref<5x128xf32, #tpu.memory_space<vmem>>, %arg10: memref<1x16x128xf32, #tpu.memory_space<vmem>>, %arg11: memref<1x16x128xf32, #tpu.memory_space<vmem>>, %arg12: memref<16x128xf32, #tpu.memory_space<vmem>>, %arg13: memref<16x128xf32, #tpu.memory_space<vmem>>) attributes {dimension_semantics = [#tpu.dimension_semantics<parallel>, #tpu.dimension_semantics<arbitrary>], iteration_bounds = array<i64: 1, 4>, scalar_prefetch = 0 : i64, scratch_operands = 2 : i64, tpu.core_type = #tpu.core_type<tc>, window_params = [{transform_indices = @transform_0, window_bounds = array<i64: 16, 4, 128>}, {transform_indices = @transform_1, window_bounds = array<i64: 16, 8, 128>}, {transform_indices = @transform_2, window_bounds = array<i64: 16, 16, 128>}, {transform_indices = @transform_3, window_bounds = array<i64: 1, 128, 128>}, {transform_indices = @transform_4, window_bounds = array<i64: 1, 1, 128>}, {pipeline_mode = #tpu.pipeline_mode<synchronous>, transform_indices = @transform_5, window_bounds = array<i64: 3, 128, 128>}, {pipeline_mode = #tpu.pipeline_mode<synchronous>, transform_indices = @transform_6, window_bounds = array<i64: 2, 256, 128>}, {pipeline_mode = #tpu.pipeline_mode<synchronous>, transform_indices = @transform_7, window_bounds = array<i64: 5, 128>}, {transform_indices = @transform_8, window_bounds = array<i64: 1, 16, 128>}, {transform_indices = @transform_9, window_bounds = array<i64: 1, 16, 128>}]} {
    %c0 = arith.constant 0 : index
    %c0_0 = arith.constant 0 : index
    %c0_1 = arith.constant 0 : index
    %0 = vector.load %arg2[%c0, %c0_0, %c0_1] : memref<16x4x128xf32, #tpu.memory_space<vmem>>, vector<16x4x128xf32>
    %1 = vector.extract_strided_slice %0 {offsets = [0, 0, 0], sizes = [16, 1, 128], strides = [1, 1, 1]} : vector<16x4x128xf32> to vector<16x1x128xf32>
    %2 = vector.shape_cast %1 : vector<16x1x128xf32> to vector<16x128xf32>
    %3 = vector.extract_strided_slice %0 {offsets = [0, 3, 0], sizes = [16, 1, 128], strides = [1, 1, 1]} : vector<16x4x128xf32> to vector<16x1x128xf32>
    %4 = vector.shape_cast %3 : vector<16x1x128xf32> to vector<16x128xf32>
    %c0_i32 = arith.constant 0 : i32
    %5 = arith.cmpi eq, %arg1, %c0_i32 : i32
    %6 = arith.extui %5 : i1 to i32
    %c0_i32_2 = arith.constant 0 : i32
    %7 = arith.cmpi ne, %6, %c0_i32_2 : i32
    scf.if %7 {
      %97 = vector.extract_strided_slice %0 {offsets = [0, 1, 0], sizes = [16, 1, 128], strides = [1, 1, 1]} : vector<16x4x128xf32> to vector<16x1x128xf32>
      %98 = vector.shape_cast %97 : vector<16x1x128xf32> to vector<16x128xf32>
      %c0_57 = arith.constant 0 : index
      %c0_58 = arith.constant 0 : index
      %99 = vector.load %arg12[%c0_57, %c0_58] : memref<16x128xf32, #tpu.memory_space<vmem>>, vector<16x128xf32>
      tpu.vector_store %arg12[%c0_57, %c0_58], %98 {strides = array<i32>} : memref<16x128xf32, #tpu.memory_space<vmem>>, vector<16x128xf32>,
      %100 = vector.extract_strided_slice %0 {offsets = [0, 2, 0], sizes = [16, 1, 128], strides = [1, 1, 1]} : vector<16x4x128xf32> to vector<16x1x128xf32>
      %101 = vector.shape_cast %100 : vector<16x1x128xf32> to vector<16x128xf32>
      %c0_59 = arith.constant 0 : index
      %c0_60 = arith.constant 0 : index
      %102 = vector.load %arg13[%c0_59, %c0_60] : memref<16x128xf32, #tpu.memory_space<vmem>>, vector<16x128xf32>
      tpu.vector_store %arg13[%c0_59, %c0_60], %101 {strides = array<i32>} : memref<16x128xf32, #tpu.memory_space<vmem>>, vector<16x128xf32>,
    } else {
    }
    %c0_3 = arith.constant 0 : index
    %c0_4 = arith.constant 0 : index
    %8 = vector.load %arg12[%c0_3, %c0_4] : memref<16x128xf32, #tpu.memory_space<vmem>>, vector<16x128xf32>
    %c0_5 = arith.constant 0 : index
    %c0_6 = arith.constant 0 : index
    %9 = vector.load %arg13[%c0_5, %c0_6] : memref<16x128xf32, #tpu.memory_space<vmem>>, vector<16x128xf32>
    %c0_7 = arith.constant 0 : index
    %c0_8 = arith.constant 0 : index
    %c0_9 = arith.constant 0 : index
    %10 = vector.load %arg3[%c0_7, %c0_8, %c0_9] : memref<16x8x128xf32, #tpu.memory_space<vmem>>, vector<16x8x128xf32>
    %c0_10 = arith.constant 0 : index
    %c0_11 = arith.constant 0 : index
    %c0_12 = arith.constant 0 : index
    %11 = vector.load %arg4[%c0_10, %c0_11, %c0_12] : memref<16x16x128xf32, #tpu.memory_space<vmem>>, vector<16x16x128xf32>
    %c0_13 = arith.constant 0 : index
    %c0_14 = arith.constant 0 : index
    %c0_15 = arith.constant 0 : index
    %12 = vector.load %arg5[%c0_13, %c0_14, %c0_15] : memref<1x128x128xf32, #tpu.memory_space<vmem>>, vector<1x128x128xf32>
    %13 = vector.shape_cast %12 : vector<1x128x128xf32> to vector<128x128xf32>
    %c0_16 = arith.constant 0 : index
    %c0_17 = arith.constant 0 : index
    %c0_18 = arith.constant 0 : index
    %14 = vector.load %arg6[%c0_16, %c0_17, %c0_18] : memref<1x1x128xf32, #tpu.memory_space<vmem>>, vector<1x1x128xf32>
    %15 = vector.shape_cast %14 : vector<1x1x128xf32> to vector<1x128xf32>
    %c0_19 = arith.constant 0 : index
    %c0_20 = arith.constant 0 : index
    %c0_21 = arith.constant 0 : index
    %16 = vector.load %arg7[%c0_19, %c0_20, %c0_21] : memref<3x128x128xf32, #tpu.memory_space<vmem>>, vector<1x128x128xf32>
    %17 = vector.shape_cast %16 : vector<1x128x128xf32> to vector<128x128xf32>
    %c1 = arith.constant 1 : index
    %c0_22 = arith.constant 0 : index
    %c0_23 = arith.constant 0 : index
    %18 = vector.load %arg7[%c1, %c0_22, %c0_23] : memref<3x128x128xf32, #tpu.memory_space<vmem>>, vector<1x128x128xf32>
    %19 = vector.shape_cast %18 : vector<1x128x128xf32> to vector<128x128xf32>
    %c2 = arith.constant 2 : index
    %c0_24 = arith.constant 0 : index
    %c0_25 = arith.constant 0 : index
    %20 = vector.load %arg7[%c2, %c0_24, %c0_25] : memref<3x128x128xf32, #tpu.memory_space<vmem>>, vector<1x128x128xf32>
    %21 = vector.shape_cast %20 : vector<1x128x128xf32> to vector<128x128xf32>
    %c0_26 = arith.constant 0 : index
    %c0_27 = arith.constant 0 : index
    %c0_28 = arith.constant 0 : index
    %22 = vector.load %arg8[%c0_26, %c0_27, %c0_28] : memref<2x256x128xf32, #tpu.memory_space<vmem>>, vector<1x256x128xf32>
    %23 = vector.shape_cast %22 : vector<1x256x128xf32> to vector<256x128xf32>
    %c1_29 = arith.constant 1 : index
    %c0_30 = arith.constant 0 : index
    %c0_31 = arith.constant 0 : index
    %24 = vector.load %arg8[%c1_29, %c0_30, %c0_31] : memref<2x256x128xf32, #tpu.memory_space<vmem>>, vector<1x256x128xf32>
    %25 = vector.shape_cast %24 : vector<1x256x128xf32> to vector<256x128xf32>
    %c0_32 = arith.constant 0 : index
    %c0_33 = arith.constant 0 : index
    %26 = vector.load %arg9[%c0_32, %c0_33] : memref<5x128xf32, #tpu.memory_space<vmem>>, vector<5x128xf32>
    %27 = vector.extract_strided_slice %26 {offsets = [0, 0], sizes = [1, 128], strides = [1, 1]} : vector<5x128xf32> to vector<1x128xf32>
    %28 = vector.extract_strided_slice %26 {offsets = [1, 0], sizes = [1, 128], strides = [1, 1]} : vector<5x128xf32> to vector<1x128xf32>
    %29 = vector.extract_strided_slice %26 {offsets = [2, 0], sizes = [1, 128], strides = [1, 1]} : vector<5x128xf32> to vector<1x128xf32>
    %30 = vector.extract_strided_slice %26 {offsets = [3, 0], sizes = [1, 128], strides = [1, 1]} : vector<5x128xf32> to vector<1x128xf32>
    %31 = vector.extract_strided_slice %26 {offsets = [4, 0], sizes = [1, 128], strides = [1, 1]} : vector<5x128xf32> to vector<1x128xf32>
    %cst = arith.constant dense<0.000000e+00> : vector<16x128xf32>
    %32 = tpu.matmul %2, %13, %cst {dimension_numbers = #tpu.dot_dimension_numbers<[1], [0], [0], [1], [0, 0, 1, 1], [], []>} : vector<16x128xf32>, vector<128x128xf32>, vector<16x128xf32> -> vector<16x128xf32>
    %33 = vector.broadcast %15 : vector<1x128xf32> to vector<16x128xf32>
    %34 = arith.addf %32, %33 : vector<16x128xf32>
    %35 = tpu.concatenate %8, %34 in 1 : vector<16x128xf32>, vector<16x128xf32> -> vector<16x256xf32>
    %cst_34 = arith.constant dense<0.000000e+00> : vector<16x128xf32>
    %36 = tpu.matmul %35, %23, %cst_34 {dimension_numbers = #tpu.dot_dimension_numbers<[1], [0], [0], [1], [0, 0, 1, 1], [], []>} : vector<16x256xf32>, vector<256x128xf32>, vector<16x128xf32> -> vector<16x128xf32>
    %37 = vector.broadcast %27 : vector<1x128xf32> to vector<16x128xf32>
    %38 = arith.addf %36, %37 : vector<16x128xf32>
    %39 = vector.broadcast %28 : vector<1x128xf32> to vector<16x128xf32>
    %40 = arith.mulf %38, %39 : vector<16x128xf32>
    %41 = vector.shape_cast %40 : vector<16x128xf32> to vector<16x1x128xf32>
    %42 = vector.broadcast %41 : vector<16x1x128xf32> to vector<16x8x128xf32>
    %43 = arith.mulf %10, %42 : vector<16x8x128xf32>
    %cst_35 = arith.constant dense<0.000000e+00> : vector<16x8xf32>
    %44 = vector.multi_reduction <add>, %43, %cst_35 [2] : vector<16x8x128xf32> to vector<16x8xf32>
    %cst_36 = arith.constant dense<0xFF800000> : vector<16xf32>
    %45 = vector.multi_reduction <maximumf>, %44, %cst_36 [1] : vector<16x8xf32> to vector<16xf32>
    %46 = vector.shape_cast %45 : vector<16xf32> to vector<16x1xf32>
    %47 = vector.broadcast %46 : vector<16x1xf32> to vector<16x8xf32>
    %48 = arith.subf %44, %47 : vector<16x8xf32>
    %49 = math.exp %48 : vector<16x8xf32>
    %cst_37 = arith.constant dense<0.000000e+00> : vector<16xf32>
    %50 = vector.multi_reduction <add>, %49, %cst_37 [1] : vector<16x8xf32> to vector<16xf32>
    %51 = vector.shape_cast %50 : vector<16xf32> to vector<16x1xf32>
    %52 = vector.broadcast %51 : vector<16x1xf32> to vector<16x8xf32>
    %53 = arith.divf %49, %52 : vector<16x8xf32>
    %54 = vector.shape_cast %53 : vector<16x8xf32> to vector<16x8x1xf32>
    %55 = vector.broadcast %54 : vector<16x8x1xf32> to vector<16x8x128xf32>
    %56 = arith.mulf %55, %10 : vector<16x8x128xf32>
    %cst_38 = arith.constant dense<0.000000e+00> : vector<16x128xf32>
    %57 = vector.multi_reduction <add>, %56, %cst_38 [1] : vector<16x8x128xf32> to vector<16x128xf32>
    %58 = arith.mulf %9, %4 : vector<16x128xf32>
    %cst_39 = arith.constant dense<0.000000e+00> : vector<16x128xf32>
    %59 = tpu.matmul %58, %17, %cst_39 {dimension_numbers = #tpu.dot_dimension_numbers<[1], [0], [0], [1], [0, 0, 1, 1], [], []>} : vector<16x128xf32>, vector<128x128xf32>, vector<16x128xf32> -> vector<16x128xf32>
    %60 = vector.broadcast %29 : vector<1x128xf32> to vector<16x128xf32>
    %61 = arith.addf %59, %60 : vector<16x128xf32>
    %62 = vector.broadcast %30 : vector<1x128xf32> to vector<16x128xf32>
    %63 = arith.mulf %57, %62 : vector<16x128xf32>
    %cst_40 = arith.constant dense<0.000000e+00> : vector<16x128xf32>
    %64 = tpu.matmul %63, %19, %cst_40 {dimension_numbers = #tpu.dot_dimension_numbers<[1], [0], [0], [1], [0, 0, 1, 1], [], []>} : vector<16x128xf32>, vector<128x128xf32>, vector<16x128xf32> -> vector<16x128xf32>
    %cst_41 = arith.constant dense<0.000000e+00> : vector<16x128xf32>
    %65 = tpu.matmul %63, %21, %cst_41 {dimension_numbers = #tpu.dot_dimension_numbers<[1], [0], [0], [1], [0, 0, 1, 1], [], []>} : vector<16x128xf32>, vector<128x128xf32>, vector<16x128xf32> -> vector<16x128xf32>
    %66 = arith.mulf %61, %64 : vector<16x128xf32>
    %67 = arith.addf %66, %65 : vector<16x128xf32>
    %68 = vector.shape_cast %67 : vector<16x128xf32> to vector<16x1x128xf32>
    %69 = vector.broadcast %68 : vector<16x1x128xf32> to vector<16x16x128xf32>
    %70 = arith.mulf %11, %69 : vector<16x16x128xf32>
    %cst_42 = arith.constant dense<0.000000e+00> : vector<16x16xf32>
    %71 = vector.multi_reduction <add>, %70, %cst_42 [2] : vector<16x16x128xf32> to vector<16x16xf32>
    %cst_43 = arith.constant dense<0xFF800000> : vector<16xf32>
    %72 = vector.multi_reduction <maximumf>, %71, %cst_43 [1] : vector<16x16xf32> to vector<16xf32>
    %73 = vector.shape_cast %72 : vector<16xf32> to vector<16x1xf32>
    %74 = vector.broadcast %73 : vector<16x1xf32> to vector<16x16xf32>
    %75 = arith.subf %71, %74 : vector<16x16xf32>
    %76 = math.exp %75 : vector<16x16xf32>
    %cst_44 = arith.constant dense<0.000000e+00> : vector<16xf32>
    %77 = vector.multi_reduction <add>, %76, %cst_44 [1] : vector<16x16xf32> to vector<16xf32>
    %78 = vector.shape_cast %77 : vector<16xf32> to vector<16x1xf32>
    %79 = vector.broadcast %78 : vector<16x1xf32> to vector<16x16xf32>
    %80 = arith.divf %76, %79 : vector<16x16xf32>
    %81 = vector.shape_cast %80 : vector<16x16xf32> to vector<16x16x1xf32>
    %82 = vector.broadcast %81 : vector<16x16x1xf32> to vector<16x16x128xf32>
    %83 = arith.mulf %82, %11 : vector<16x16x128xf32>
    %cst_45 = arith.constant dense<0.000000e+00> : vector<16x128xf32>
    %84 = vector.multi_reduction <add>, %83, %cst_45 [1] : vector<16x16x128xf32> to vector<16x128xf32>
    %85 = tpu.concatenate %84, %9 in 1 : vector<16x128xf32>, vector<16x128xf32> -> vector<16x256xf32>
    %cst_46 = arith.constant dense<0.000000e+00> : vector<16x128xf32>
    %86 = tpu.matmul %85, %25, %cst_46 {dimension_numbers = #tpu.dot_dimension_numbers<[1], [0], [0], [1], [0, 0, 1, 1], [], []>} : vector<16x256xf32>, vector<256x128xf32>, vector<16x128xf32> -> vector<16x128xf32>
    %87 = vector.broadcast %31 : vector<1x128xf32> to vector<16x128xf32>
    %88 = arith.addf %86, %87 : vector<16x128xf32>
    %c0_47 = arith.constant 0 : index
    %c0_48 = arith.constant 0 : index
    %89 = vector.load %arg12[%c0_47, %c0_48] : memref<16x128xf32, #tpu.memory_space<vmem>>, vector<16x128xf32>
    tpu.vector_store %arg12[%c0_47, %c0_48], %57 {strides = array<i32>} : memref<16x128xf32, #tpu.memory_space<vmem>>, vector<16x128xf32>,
    %c0_49 = arith.constant 0 : index
    %c0_50 = arith.constant 0 : index
    %90 = vector.load %arg13[%c0_49, %c0_50] : memref<16x128xf32, #tpu.memory_space<vmem>>, vector<16x128xf32>
    tpu.vector_store %arg13[%c0_49, %c0_50], %88 {strides = array<i32>} : memref<16x128xf32, #tpu.memory_space<vmem>>, vector<16x128xf32>,
    %c0_51 = arith.constant 0 : index
    %c0_52 = arith.constant 0 : index
    %c0_53 = arith.constant 0 : index
    %91 = vector.load %arg10[%c0_51, %c0_52, %c0_53] : memref<1x16x128xf32, #tpu.memory_space<vmem>>, vector<1x16x128xf32>
    %92 = vector.shape_cast %91 : vector<1x16x128xf32> to vector<16x128xf32>
    %93 = vector.shape_cast %57 : vector<16x128xf32> to vector<1x16x128xf32>
    tpu.vector_store %arg10[%c0_51, %c0_52, %c0_53], %93 {strides = array<i32>} : memref<1x16x128xf32, #tpu.memory_space<vmem>>, vector<1x16x128xf32>,
    %c0_54 = arith.constant 0 : index
    %c0_55 = arith.constant 0 : index
    %c0_56 = arith.constant 0 : index
    %94 = vector.load %arg11[%c0_54, %c0_55, %c0_56] : memref<1x16x128xf32, #tpu.memory_space<vmem>>, vector<1x16x128xf32>
    %95 = vector.shape_cast %94 : vector<1x16x128xf32> to vector<16x128xf32>
    %96 = vector.shape_cast %88 : vector<16x128xf32> to vector<1x16x128xf32>
    tpu.vector_store %arg11[%c0_54, %c0_55, %c0_56], %96 {strides = array<i32>} : memref<1x16x128xf32, #tpu.memory_space<vmem>>, vector<1x16x128xf32>,
    return
  }
  func.func @transform_0(%arg0: i32, %arg1: i32) -> (i32, i32, i32) {
    %c0_i32 = arith.constant 0 : i32
    %c0_i32_0 = arith.constant 0 : i32
    %c0_i32_1 = arith.constant 0 : i32
    return %arg0, %c0_i32, %c0_i32_0 : i32, i32, i32
  }
  func.func @transform_1(%arg0: i32, %arg1: i32) -> (i32, i32, i32) {
    %c0_i32 = arith.constant 0 : i32
    %c0_i32_0 = arith.constant 0 : i32
    %c0_i32_1 = arith.constant 0 : i32
    return %arg0, %c0_i32, %c0_i32_0 : i32, i32, i32
  }
  func.func @transform_2(%arg0: i32, %arg1: i32) -> (i32, i32, i32) {
    %c0_i32 = arith.constant 0 : i32
    %c0_i32_0 = arith.constant 0 : i32
    %c0_i32_1 = arith.constant 0 : i32
    return %arg0, %c0_i32, %c0_i32_0 : i32, i32, i32
  }
  func.func @transform_3(%arg0: i32, %arg1: i32) -> (i32, i32, i32) {
    %c0_i32 = arith.constant 0 : i32
    %c0_i32_0 = arith.constant 0 : i32
    %c0_i32_1 = arith.constant 0 : i32
    return %arg1, %c0_i32, %c0_i32_0 : i32, i32, i32
  }
  func.func @transform_4(%arg0: i32, %arg1: i32) -> (i32, i32, i32) {
    %c0_i32 = arith.constant 0 : i32
    %c0_i32_0 = arith.constant 0 : i32
    %c0_i32_1 = arith.constant 0 : i32
    return %arg1, %c0_i32, %c0_i32_0 : i32, i32, i32
  }
  func.func @transform_5(%arg0: i32, %arg1: i32) -> (i32, i32, i32) {
    %c0_i32 = arith.constant 0 : i32
    %c0_i32_0 = arith.constant 0 : i32
    %c0_i32_1 = arith.constant 0 : i32
    %c0_i32_2 = arith.constant 0 : i32
    return %c0_i32, %c0_i32_0, %c0_i32_1 : i32, i32, i32
  }
  func.func @transform_6(%arg0: i32, %arg1: i32) -> (i32, i32, i32) {
    %c0_i32 = arith.constant 0 : i32
    %c0_i32_0 = arith.constant 0 : i32
    %c0_i32_1 = arith.constant 0 : i32
    %c0_i32_2 = arith.constant 0 : i32
    return %c0_i32, %c0_i32_0, %c0_i32_1 : i32, i32, i32
  }
  func.func @transform_7(%arg0: i32, %arg1: i32) -> (i32, i32) {
    %c0_i32 = arith.constant 0 : i32
    %c0_i32_0 = arith.constant 0 : i32
    %c0_i32_1 = arith.constant 0 : i32
    return %c0_i32, %c0_i32_0 : i32, i32
  }
  func.func @transform_8(%arg0: i32, %arg1: i32) -> (i32, i32, i32) {
    %c0_i32 = arith.constant 0 : i32
    %c0_i32_0 = arith.constant 0 : i32
    return %arg1, %arg0, %c0_i32 : i32, i32, i32
  }
  func.func @transform_9(%arg0: i32, %arg1: i32) -> (i32, i32, i32) {
    %c0_i32 = arith.constant 0 : i32
    %c0_i32_0 = arith.constant 0 : i32
    return %arg1, %arg0, %c0_i32 : i32, i32, i32
  }
}

</mosaic_0001>

<llo_original>
// kernel: tpu_custom_call.1
$region0: #{tpu_custom_call.1}
  #allocation0 [shape = 'u32[]', space=smem, size = 0x4, offset = 0x4, fixed_abs, tag = 'smem constant byte address 0x4 - core index']
  #allocation1 [shape = 'u32[144,128]{1,0:T(1,128)}', space=vmem, size = 0x12000, scoped, tag = 'internal scratch']
  #allocation2 [shape = 'f32[16,128]{1,0:T(8,128)}', space=vmem, size = 0x2000, scoped, tag = 'scratch operand']
  #allocation3 [shape = 'f32[16,128]{1,0:T(8,128)}', space=vmem, size = 0x2000, scoped, tag = 'scratch operand']
  %s0 = inlined_call_operand.hbm [shape: f32[16,4,128], index: 0, kind: input, shape index: {}]
  %s1 = inlined_call_operand.hbm [shape: f32[16,8,128], index: 1, kind: input, shape index: {}]
  %s2 = inlined_call_operand.hbm [shape: f32[16,16,128], index: 2, kind: input, shape index: {}]
  %s3 = inlined_call_operand.hbm [shape: f32[4,128,128], index: 3, kind: input, shape index: {}]
  %s4 = inlined_call_operand.vmem [shape: f32[4,1,128], index: 4, kind: input, shape index: {}]
  %s5 = inlined_call_operand.hbm [shape: f32[3,128,128], index: 5, kind: input, shape index: {}]
  %s6 = inlined_call_operand.hbm [shape: f32[2,256,128], index: 6, kind: input, shape index: {}]
  %s7 = inlined_call_operand.vmem [shape: f32[5,128], index: 7, kind: input, shape index: {}]
  %s8 = inlined_call_operand.hbm [shape: f32[4,16,128], index: 8, kind: output, shape index: {0}]
  %s9 = inlined_call_operand.hbm [shape: f32[4,16,128], index: 9, kind: output, shape index: {1}]
  %10 = xla_tuple %s8, %s9
  %s11 = sld [smem:[#allocation0]]
  $region101: #{tpu_custom_call.1} parent=0
    _
  %s13 = ssub.s32 1, %s11
  %s14 = scalar_select 0, %s13, %s11
  $region1: #{tpu_custom_call.1} parent=0
    #allocation4 [shape = 'u8[32768]{0}', space=vmem, size = 0x8000, scoped, tag = 'input window, operand 0, single buffered']
    #allocation5 [shape = 's32[2]{0}', space=sflag, size = 0x8, scoped, tag = 'scoped memory for tpu_custom_call.1']
    #allocation6 [shape = 's32[2]{0}', space=sflag, size = 0x8, scoped, tag = 'scoped memory for tpu_custom_call.1']
    #allocation7 [shape = 'u8[65536]{0}', space=vmem, size = 0x10000, scoped, tag = 'input window, operand 1, single buffered']
    #allocation8 [shape = 's32[1]{0}', space=sflag, size = 0x4, scoped, tag = 'scoped memory for tpu_custom_call.1']
    #allocation9 [shape = 'u8[131072]{0}', space=vmem, size = 0x20000, scoped, tag = 'input window, operand 2, single buffered']
    #allocation10 [shape = 'u8[131072]{0}', space=vmem, size = 0x20000, scoped, tag = 'input window, operand 3']
    #allocation11 [shape = 's32[2]{0}', space=sflag, size = 0x8, scoped, tag = 'scoped memory for tpu_custom_call.1']
    #allocation12 [shape = 'u8[196608]{0}', space=vmem, size = 0x30000, scoped, tag = 'input window, operand 5, single buffered']
    #allocation13 [shape = 'u8[262144]{0}', space=vmem, size = 0x40000, scoped, tag = 'input window, operand 6, single buffered']
    #allocation14 [shape = 's32[1]{0}', space=sflag, size = 0x4, scoped, tag = 'scoped memory for tpu_custom_call.1']
    #allocation15 [shape = 'u8[16384]{0}', space=vmem, size = 0x4000, scoped, tag = 'output window, operand 0']
    #allocation16 [shape = 'u8[16384]{0}', space=vmem, size = 0x4000, scoped, tag = 'output window, operand 1']
    #allocation17 [shape = 's32[2]{0}', space=sflag, size = 0x8, scoped, tag = 'scoped memory for tpu_custom_call.1']
    %15 = vsyncpa [#allocation5], 0
    %16 = vsyncpa [#allocation8], 0
    %17 = vsyncpa [#allocation11], 0
    %s18 = scalar_lea.sflag [#allocation11], 1
    %19 = vsyncpa %s18, 0
    %20 = vsyncpa [#allocation14], 0
    %21 = vsyncpa [#allocation6], 0
    %s22 = scalar_lea.sflag [#allocation6], 1
    %23 = vsyncpa %s22, 0
    %24 = vsyncpa [#allocation17], 0
    %s25 = scalar_lea.sflag [#allocation17], 1
    %26 = vsyncpa %s25, 0
    loop: start=0, step=1, limit=6
    $region2: #{tpu_custom_call.1} parent=1 // loop_pre_header
      _
    $region3: #{tpu_custom_call.1} parent=1 // loop_header
      %s28 = sphi 0, %s32
      %p29 = scmp.ge.s32.totalorder %s28, 6
      %s35 = sphi 0, %s47
      %s36 = sphi 0, %s43
      %s37 = sphi 0, %s35
      %s38 = sphi 0, %s36
      %s39 = sphi 0, %s37
      %s40 = sphi 0, %s38
      %s50 = sphi 0, %s52
      %s53 = sphi 0, %s50
      %s54 = sphi 0, %s53
      %s70 = sphi 0, %s54
      %s76 = sphi 0, %s78
      %s79 = sphi 0, %s76
      %s80 = sphi 0, %s79
      %s96 = sphi 0, %s80
      %s102 = sphi 0, %s104
      %s105 = sphi 0, %s102
      %s106 = sphi 0, %s105
      %s122 = sphi 0, %s106
      %s128 = sphi 0, %s130
      %s131 = sphi 0, %s128
      %s132 = sphi 0, %s131
      %s148 = sphi 0, %s132
      %s154 = sphi 0, %s156
      %s157 = sphi 0, %s154
      %s158 = sphi 0, %s157
      %s174 = sphi 0, %s158
      %s178 = sphi 0, %s178
      %s180 = sphi 0, %s178
      %s181 = sphi 0, %s180
      %s195 = sphi 0, %s181
      %s199 = sphi 0, %s199
      %s201 = sphi 0, %s199
      %s202 = sphi 0, %s201
      %s216 = sphi 0, %s202
      %s220 = sphi 0, %s220
      %s222 = sphi 0, %s220
      %s223 = sphi 0, %s222
      %s237 = sphi 0, %s223
      %s245 = sphi 0, %s247
      %s248 = sphi 0, %s245
      %s249 = sphi 0, %s248
      %s265 = sphi 0, %s249
      %s273 = sphi 0, %s275
      %s276 = sphi 0, %s273
      %s277 = sphi 0, %s276
      %s293 = sphi 0, %s277
    $region4: #{tpu_custom_call.1} parent=1 // loop_header_branch
      %31 = sbr.rel (%p29) target = $region8
    $region5: #{tpu_custom_call.1} parent=1 // loop_body
      %s33 = ssub.s32 %s28, 1
      %s34 = ssub.s32 %s28, 2
      %s41 = sadd.s32 1, %s36
      %p42 = scmp.ge.s32.totalorder %s41, 4
      %s43 = scalar_select %p42, 0, %s41
      %s44 = sadd.s32 1, %s35
      %s45 = scalar_select %p42, %s44, %s35
      %p46 = scmp.ge.s32.totalorder %s45, 1
      %s47 = scalar_select %p46, 0, %s45
      %s48 = ssub.s32 %s35, %s47
      %p49 = scmp.eq.s32.totalorder %s48, 0
      %s51 = sadd.s32 %s50, 1
      %s52 = scalar_select %p49, %s50, %s51
      %p55 = pneg %p49
      %p56 = scmp.eq.s32.totalorder %s28, 3
      %p57 = por %p55, %p56
      %p58 = scmp.ne.s32.totalorder %s50, %s53
      %p59 = scmp.eq.s32.totalorder %s28, 0
      %p60 = por %p58, %p59
      %p61 = scmp.ne.s32.totalorder %s50, %s53
      %p62 = scmp.eq.s32.totalorder %s33, 3
      %p63 = por %p61, %p62
      %p64 = scmp.ne.s32.totalorder %s53, %s54
      %p65 = scmp.eq.s32.totalorder %s33, 0
      %p66 = por %p64, %p65
      %p67 = scmp.ne.s32.totalorder %s53, %s54
      %p68 = scmp.eq.s32.totalorder %s34, 3
      %p69 = por %p67, %p68
      %p71 = scmp.ne.s32.totalorder %s54, %s70
      %p72 = scmp.eq.s32.totalorder %s34, 0
      %p73 = por %p71, %p72
      %s74 = ssub.s32 %s35, %s47
      %p75 = scmp.eq.s32.totalorder %s74, 0
      %s77 = sadd.s32 %s76, 1
      %s78 = scalar_select %p75, %s76, %s77
      %p81 = pneg %p75
      %p82 = scmp.eq.s32.totalorder %s28, 3
      %p83 = por %p81, %p82
      %p84 = scmp.ne.s32.totalorder %s76, %s79
      %p85 = scmp.eq.s32.totalorder %s28, 0
      %p86 = por %p84, %p85
      %p87 = scmp.ne.s32.totalorder %s76, %s79
      %p88 = scmp.eq.s32.totalorder %s33, 3
      %p89 = por %p87, %p88
      %p90 = scmp.ne.s32.totalorder %s79, %s80
      %p91 = scmp.eq.s32.totalorder %s33, 0
      %p92 = por %p90, %p91
      %p93 = scmp.ne.s32.totalorder %s79, %s80
      %p94 = scmp.eq.s32.totalorder %s34, 3
      %p95 = por %p93, %p94
      %p97 = scmp.ne.s32.totalorder %s80, %s96
      %p98 = scmp.eq.s32.totalorder %s34, 0
      %p99 = por %p97, %p98
      %s100 = ssub.s32 %s35, %s47
      %p101 = scmp.eq.s32.totalorder %s100, 0
      %s103 = sadd.s32 %s102, 1
      %s104 = scalar_select %p101, %s102, %s103
      %p107 = pneg %p101
      %p108 = scmp.eq.s32.totalorder %s28, 3
      %p109 = por %p107, %p108
      %p110 = scmp.ne.s32.totalorder %s102, %s105
      %p111 = scmp.eq.s32.totalorder %s28, 0
      %p112 = por %p110, %p111
      %p113 = scmp.ne.s32.totalorder %s102, %s105
      %p114 = scmp.eq.s32.totalorder %s33, 3
      %p115 = por %p113, %p114
      %p116 = scmp.ne.s32.totalorder %s105, %s106
      %p117 = scmp.eq.s32.totalorder %s33, 0
      %p118 = por %p116, %p117
      %p119 = scmp.ne.s32.totalorder %s105, %s106
      %p120 = scmp.eq.s32.totalorder %s34, 3
      %p121 = por %p119, %p120
      %p123 = scmp.ne.s32.totalorder %s106, %s122
      %p124 = scmp.eq.s32.totalorder %s34, 0
      %p125 = por %p123, %p124
      %s126 = ssub.s32 %s36, %s43
      %p127 = scmp.eq.s32.totalorder %s126, 0
      %s129 = sadd.s32 %s128, 1
      %s130 = scalar_select %p127, %s128, %s129
      %p133 = pneg %p127
      %p134 = scmp.eq.s32.totalorder %s28, 3
      %p135 = por %p133, %p134
      %p136 = scmp.ne.s32.totalorder %s128, %s131
      %p137 = scmp.eq.s32.totalorder %s28, 0
      %p138 = por %p136, %p137
      %p139 = scmp.ne.s32.totalorder %s128, %s131
      %p140 = scmp.eq.s32.totalorder %s33, 3
      %p141 = por %p139, %p140
      %p142 = scmp.ne.s32.totalorder %s131, %s132
      %p143 = scmp.eq.s32.totalorder %s33, 0
      %p144 = por %p142, %p143
      %p145 = scmp.ne.s32.totalorder %s131, %s132
      %p146 = scmp.eq.s32.totalorder %s34, 3
      %p147 = por %p145, %p146
      %p149 = scmp.ne.s32.totalorder %s132, %s148
      %p150 = scmp.eq.s32.totalorder %s34, 0
      %p151 = por %p149, %p150
      %s152 = ssub.s32 %s36, %s43
      %p153 = scmp.eq.s32.totalorder %s152, 0
      %s155 = sadd.s32 %s154, 1
      %s156 = scalar_select %p153, %s154, %s155
      %p159 = pneg %p153
      %p160 = scmp.eq.s32.totalorder %s28, 3
      %p161 = por %p159, %p160
      %p162 = scmp.ne.s32.totalorder %s154, %s157
      %p163 = scmp.eq.s32.totalorder %s28, 0
      %p164 = por %p162, %p163
      %p165 = scmp.ne.s32.totalorder %s154, %s157
      %p166 = scmp.eq.s32.totalorder %s33, 3
      %p167 = por %p165, %p166
      %p168 = scmp.ne.s32.totalorder %s157, %s158
      %p169 = scmp.eq.s32.totalorder %s33, 0
      %p170 = por %p168, %p169
      %p171 = scmp.ne.s32.totalorder %s157, %s158
      %p172 = scmp.eq.s32.totalorder %s34, 3
      %p173 = por %p171, %p172
      %p175 = scmp.ne.s32.totalorder %s158, %s174
      %p176 = scmp.eq.s32.totalorder %s34, 0
      %p177 = por %p175, %p176
      %s179 = sadd.s32 %s178, 1
      %p182 = scmp.eq.s32.totalorder %s28, 3
      %p183 = scmp.ne.s32.totalorder %s178, %s180
      %p184 = scmp.eq.s32.totalorder %s28, 0
      %p185 = por %p183, %p184
      %p186 = scmp.ne.s32.totalorder %s178, %s180
      %p187 = scmp.eq.s32.totalorder %s33, 3
      %p188 = por %p186, %p187
      %p189 = scmp.ne.s32.totalorder %s180, %s181
      %p190 = scmp.eq.s32.totalorder %s33, 0
      %p191 = por %p189, %p190
      %p192 = scmp.ne.s32.totalorder %s180, %s181
      %p193 = scmp.eq.s32.totalorder %s34, 3
      %p194 = por %p192, %p193
      %p196 = scmp.ne.s32.totalorder %s181, %s195
      %p197 = scmp.eq.s32.totalorder %s34, 0
      %p198 = por %p196, %p197
      %s200 = sadd.s32 %s199, 1
      %p203 = scmp.eq.s32.totalorder %s28, 3
      %p204 = scmp.ne.s32.totalorder %s199, %s201
      %p205 = scmp.eq.s32.totalorder %s28, 0
      %p206 = por %p204, %p205
      %p207 = scmp.ne.s32.totalorder %s199, %s201
      %p208 = scmp.eq.s32.totalorder %s33, 3
      %p209 = por %p207, %p208
      %p210 = scmp.ne.s32.totalorder %s201, %s202
      %p211 = scmp.eq.s32.totalorder %s33, 0
      %p212 = por %p210, %p211
      %p213 = scmp.ne.s32.totalorder %s201, %s202
      %p214 = scmp.eq.s32.totalorder %s34, 3
      %p215 = por %p213, %p214
      %p217 = scmp.ne.s32.totalorder %s202, %s216
      %p218 = scmp.eq.s32.totalorder %s34, 0
      %p219 = por %p217, %p218
      %s221 = sadd.s32 %s220, 1
      %p224 = scmp.eq.s32.totalorder %s28, 3
      %p225 = scmp.ne.s32.totalorder %s220, %s222
      %p226 = scmp.eq.s32.totalorder %s28, 0
      %p227 = por %p225, %p226
      %p228 = scmp.ne.s32.totalorder %s220, %s222
      %p229 = scmp.eq.s32.totalorder %s33, 3
      %p230 = por %p228, %p229
      %p231 = scmp.ne.s32.totalorder %s222, %s223
      %p232 = scmp.eq.s32.totalorder %s33, 0
      %p233 = por %p231, %p232
      %p234 = scmp.ne.s32.totalorder %s222, %s223
      %p235 = scmp.eq.s32.totalorder %s34, 3
      %p236 = por %p234, %p235
      %p238 = scmp.ne.s32.totalorder %s223, %s237
      %p239 = scmp.eq.s32.totalorder %s34, 0
      %p240 = por %p238, %p239
      %s241 = ssub.s32 %s36, %s43
      %s242 = ssub.s32 %s35, %s47
      %s243 = sor.u32 %s241, %s242
      %p244 = scmp.eq.s32.totalorder %s243, 0
      %s246 = sadd.s32 %s245, 1
      %s247 = scalar_select %p244, %s245, %s246
      %p250 = pneg %p244
      %p251 = scmp.eq.s32.totalorder %s28, 3
      %p252 = por %p250, %p251
      %p253 = scmp.ne.s32.totalorder %s245, %s248
      %p254 = scmp.eq.s32.totalorder %s28, 0
      %p255 = por %p253, %p254
      %p256 = scmp.ne.s32.totalorder %s245, %s248
      %p257 = scmp.eq.s32.totalorder %s33, 3
      %p258 = por %p256, %p257
      %p259 = scmp.ne.s32.totalorder %s248, %s249
      %p260 = scmp.eq.s32.totalorder %s33, 0
      %p261 = por %p259, %p260
      %p262 = scmp.ne.s32.totalorder %s248, %s249
      %p263 = scmp.eq.s32.totalorder %s34, 3
      %p264 = por %p262, %p263
      %p266 = scmp.ne.s32.totalorder %s249, %s265
      %p267 = scmp.eq.s32.totalorder %s34, 0
      %p268 = por %p266, %p267
      %s269 = ssub.s32 %s36, %s43
      %s270 = ssub.s32 %s35, %s47
      %s271 = sor.u32 %s269, %s270
      %p272 = scmp.eq.s32.totalorder %s271, 0
      %s274 = sadd.s32 %s273, 1
      %s275 = scalar_select %p272, %s273, %s274
      %p278 = pneg %p272
      %p279 = scmp.eq.s32.totalorder %s28, 3
      %p280 = por %p278, %p279
      %p281 = scmp.ne.s32.totalorder %s273, %s276
      %p282 = scmp.eq.s32.totalorder %s28, 0
      %p283 = por %p281, %p282
      %p284 = scmp.ne.s32.totalorder %s273, %s276
      %p285 = scmp.eq.s32.totalorder %s33, 3
      %p286 = por %p284, %p285
      %p287 = scmp.ne.s32.totalorder %s276, %s277
      %p288 = scmp.eq.s32.totalorder %s33, 0
      %p289 = por %p287, %p288
      %p290 = scmp.ne.s32.totalorder %s276, %s277
      %p291 = scmp.eq.s32.totalorder %s34, 3
      %p292 = por %p290, %p291
      %p294 = scmp.ne.s32.totalorder %s277, %s293
      %p295 = scmp.eq.s32.totalorder %s34, 0
      %p296 = por %p294, %p295
      %p297 = scmp.le.s32.totalorder 1, %s28
      %p298 = scmp.lt.s32.totalorder %s28, 5
      %p299 = pnand %p297, %p298
      %p300 = pneg %p299
      // Predicated region
      $region9: #{tpu_custom_call.1} parent=5 // pred_check
        _
      $region10: #{tpu_custom_call.1} parent=5 // pred_check_branch
        %302 = sbr.rel (%p299) target = $region12
      $region11: #{tpu_custom_call.1} parent=5 // pred_region
        %s303 = ssub.s32 %s28, 1
        // Predicated region
        $region13: #{tpu_custom_call.1} parent=11 // pred_check
          %p304 = pneg %p66
        $region14: #{tpu_custom_call.1} parent=11 // pred_check_branch
          %306 = sbr.rel (%p304) target = $region16
        $region15: #{tpu_custom_call.1} parent=11 // pred_region
          %s307 = smul.u32 16, %s37
          %s309 = ssub.s32 1024, 1024
          %310 = vsyncadd [#allocation5], %s309
          %s311 = smul.addr %s307, 64
          %s312 = scalar_lea.hbm %s0, %s311
          %s313 = sshll.u32 [#allocation4], 4
          %s314 = int_to_ptr.vmem [resolvable:$true] %s313
          %319 = dma.hbm_to_vmem [thread:$0]  %s312, 1024, %s314, [#allocation5], 64, 64, 4
        $region16: #{tpu_custom_call.1} parent=11 // pred_fallthru
          _
        // Predicated region
        $region17: #{tpu_custom_call.1} parent=11 // pred_check
          %p320 = pneg %p92
        $region18: #{tpu_custom_call.1} parent=11 // pred_check_branch
          %322 = sbr.rel (%p320) target = $region20
        $region19: #{tpu_custom_call.1} parent=11 // pred_region
          %s323 = smul.u32 16, %s37
          %s325 = ssub.s32 2048, 2048
          %326 = vsyncadd [#allocation8], %s325
          %s327 = smul.addr %s323, 128
          %s328 = scalar_lea.hbm %s1, %s327
          %s329 = sshll.u32 [#allocation7], 4
          %s330 = int_to_ptr.vmem [resolvable:$true] %s329
          %335 = dma.hbm_to_vmem [thread:$0]  %s328, 2048, %s330, [#allocation8], 128, 128, 8
        $region20: #{tpu_custom_call.1} parent=11 // pred_fallthru
          _
        // Predicated region
        $region21: #{tpu_custom_call.1} parent=11 // pred_check
          %p336 = pneg %p118
        $region22: #{tpu_custom_call.1} parent=11 // pred_check_branch
          %338 = sbr.rel (%p336) target = $region24
        $region23: #{tpu_custom_call.1} parent=11 // pred_region
          %s339 = smul.u32 16, %s37
          %s341 = ssub.s32 4096, 4096
          %342 = vsyncadd [#allocation8], %s341
          %s343 = smul.addr %s339, 2
          %s344 = smul.addr %s343, 128
          %s345 = scalar_lea.hbm %s2, %s344
          %s346 = sshll.u32 [#allocation9], 4
          %s347 = int_to_ptr.vmem [resolvable:$true] %s346
          %352 = dma.hbm_to_vmem [thread:$0]  %s345, 4096, %s347, [#allocation8], 128, 128, 8
        $region24: #{tpu_custom_call.1} parent=11 // pred_fallthru
          _
        // Predicated region
        $region25: #{tpu_custom_call.1} parent=11 // pred_check
          %p353 = pneg %p191
        $region26: #{tpu_custom_call.1} parent=11 // pred_check_branch
          %355 = sbr.rel (%p353) target = $region28
        $region27: #{tpu_custom_call.1} parent=11 // pred_region
          %s357 = ssub.s32 6144, 6144
          %358 = vsyncadd [#allocation11], %s357
          %s359 = sshll.u32 [#allocation12], 4
          %s360 = int_to_ptr.vmem [resolvable:$true] %s359
          %365 = dma.hbm_to_vmem [thread:$0]  %s5, 6144, %s360, [#allocation11], 128, 128, 8
        $region28: #{tpu_custom_call.1} parent=11 // pred_fallthru
          _
        // Predicated region
        $region29: #{tpu_custom_call.1} parent=11 // pred_check
          %p366 = pneg %p212
        $region30: #{tpu_custom_call.1} parent=11 // pred_check_branch
          %368 = sbr.rel (%p366) target = $region32
        $region31: #{tpu_custom_call.1} parent=11 // pred_region
          %s370 = ssub.s32 8192, 8192
          %371 = vsyncadd [#allocation14], %s370
          %s372 = sshll.u32 [#allocation13], 4
          %s373 = int_to_ptr.vmem [resolvable:$true] %s372
          %378 = dma.hbm_to_vmem [thread:$0]  %s6, 8192, %s373, [#allocation14], 128, 128, 8
        $region32: #{tpu_custom_call.1} parent=11 // pred_fallthru
          _
        // Predicated region
        $region33: #{tpu_custom_call.1} parent=11 // pred_check
          %p379 = pneg %p233
        $region34: #{tpu_custom_call.1} parent=11 // pred_check_branch
          %381 = sbr.rel (%p379) target = $region36
        $region35: #{tpu_custom_call.1} parent=11 // pred_region
          _
        $region36: #{tpu_custom_call.1} parent=11 // pred_fallthru
          _
      $region12: #{tpu_custom_call.1} parent=5 // pred_fallthru
        _
      %p382 = scmp.lt.s32.totalorder %s28, 4
      // Predicated region
      $region37: #{tpu_custom_call.1} parent=5 // pred_check
        %p383 = pneg %p382
      $region38: #{tpu_custom_call.1} parent=5 // pred_check_branch
        %385 = sbr.rel (%p383) target = $region40
      $region39: #{tpu_custom_call.1} parent=5 // pred_region
        // Predicated region
        $region41: #{tpu_custom_call.1} parent=39 // pred_check
          %p386 = pneg %p138
        $region42: #{tpu_custom_call.1} parent=39 // pred_check_branch
          %388 = sbr.rel (%p386) target = $region44
        $region43: #{tpu_custom_call.1} parent=39 // pred_region
          %s389 = sand.u32 %s28, 1
          %s390 = scalar_lea.sflag [#allocation11], %s389
          %s391 = sand.u32 %s128, 1
          %s392 = smul.addr %s391, 128
          %s393 = scalar_lea.vmem [#allocation10], %s392
          %s395 = ssub.s32 2048, 2048
          %396 = vsyncadd %s390, %s395
          %s397 = smul.addr %s36, 16
          %s398 = smul.addr %s397, 128
          %s399 = scalar_lea.hbm %s3, %s398
          %s400 = sshll.u32 %s393, 4
          %s401 = int_to_ptr.vmem [resolvable:$true] %s400
          %406 = dma.hbm_to_vmem [thread:$0]  %s399, 2048, %s401, %s390, 128, 128, 8
        $region44: #{tpu_custom_call.1} parent=39 // pred_fallthru
          _
        // Predicated region
        $region45: #{tpu_custom_call.1} parent=39 // pred_check
          %p407 = pneg %p164
        $region46: #{tpu_custom_call.1} parent=39 // pred_check_branch
          %409 = sbr.rel (%p407) target = $region48
        $region47: #{tpu_custom_call.1} parent=39 // pred_region
          %p410 = scmp.lt.s32.totalorder %s36, 3
          %s411 = scalar_select %p410, %s36, 3
          %s412 = scalar_lea.vmem %s4, %s411
        $region48: #{tpu_custom_call.1} parent=39 // pred_fallthru
          _
      $region40: #{tpu_custom_call.1} parent=5 // pred_fallthru
        _
      %p413 = scmp.le.s32.totalorder 1, %s28
      %p414 = scmp.lt.s32.totalorder %s28, 5
      %p415 = pnand %p413, %p414
      %p416 = pneg %p415
      // Predicated region
      $region49: #{tpu_custom_call.1} parent=5 // pred_check
        _
      $region50: #{tpu_custom_call.1} parent=5 // pred_check_branch
        %418 = sbr.rel (%p415) target = $region52
      $region51: #{tpu_custom_call.1} parent=5 // pred_region
        %s419 = ssub.s32 %s28, 1
        // Predicated region
        $region53: #{tpu_custom_call.1} parent=51 // pred_check
          %p420 = pneg %p66
        $region54: #{tpu_custom_call.1} parent=51 // pred_check_branch
          %422 = sbr.rel (%p420) target = $region56
        $region55: #{tpu_custom_call.1} parent=51 // pred_region
          %423 = dma.done [#allocation5], 1024
        $region56: #{tpu_custom_call.1} parent=51 // pred_fallthru
          _
        // Predicated region
        $region57: #{tpu_custom_call.1} parent=51 // pred_check
          %p424 = pneg %p92
        $region58: #{tpu_custom_call.1} parent=51 // pred_check_branch
          %426 = sbr.rel (%p424) target = $region60
        $region59: #{tpu_custom_call.1} parent=51 // pred_region
          %427 = dma.done [#allocation8], 2048
        $region60: #{tpu_custom_call.1} parent=51 // pred_fallthru
          _
        // Predicated region
        $region61: #{tpu_custom_call.1} parent=51 // pred_check
          %p428 = pneg %p118
        $region62: #{tpu_custom_call.1} parent=51 // pred_check_branch
          %430 = sbr.rel (%p428) target = $region64
        $region63: #{tpu_custom_call.1} parent=51 // pred_region
          %431 = dma.done [#allocation8], 4096
        $region64: #{tpu_custom_call.1} parent=51 // pred_fallthru
          _
        %s432 = sand.u32 %s33, 1
        %s433 = scalar_lea.sflag [#allocation11], %s432
        %s434 = sand.u32 %s131, 1
        %s435 = smul.addr %s434, 128
        %s436 = scalar_lea.vmem [#allocation10], %s435
        // Predicated region
        $region65: #{tpu_custom_call.1} parent=51 // pred_check
          %p437 = pneg %p144
        $region66: #{tpu_custom_call.1} parent=51 // pred_check_branch
          %439 = sbr.rel (%p437) target = $region68
        $region67: #{tpu_custom_call.1} parent=51 // pred_region
          %440 = dma.done %s433, 2048
        $region68: #{tpu_custom_call.1} parent=51 // pred_fallthru
          _
        // Predicated region
        $region69: #{tpu_custom_call.1} parent=51 // pred_check
          %p441 = pneg %p191
        $region70: #{tpu_custom_call.1} parent=51 // pred_check_branch
          %443 = sbr.rel (%p441) target = $region72
        $region71: #{tpu_custom_call.1} parent=51 // pred_region
          %444 = dma.done [#allocation11], 6144
        $region72: #{tpu_custom_call.1} parent=51 // pred_fallthru
          _
        // Predicated region
        $region73: #{tpu_custom_call.1} parent=51 // pred_check
          %p445 = pneg %p212
        $region74: #{tpu_custom_call.1} parent=51 // pred_check_branch
          %447 = sbr.rel (%p445) target = $region76
        $region75: #{tpu_custom_call.1} parent=51 // pred_region
          %448 = dma.done [#allocation14], 8192
        $region76: #{tpu_custom_call.1} parent=51 // pred_fallthru
          _
        %p449 = pneg %p66
        %p450 = pneg %p63
        %p451 = pneg %p92
        %p452 = pneg %p89
        %p453 = pneg %p118
        %p454 = pneg %p115
        %s455 = sand.u32 %s33, 1
        %s456 = scalar_lea.sflag [#allocation11], %s455
        %s457 = sand.u32 %s131, 1
        %s458 = smul.addr %s457, 128
        %s459 = scalar_lea.vmem [#allocation10], %s458
        %p460 = pneg %p144
        %p461 = pneg %p141
        %p462 = scmp.lt.s32.totalorder %s38, 3
        %s463 = scalar_select %p462, %s38, 3
        %s464 = scalar_lea.vmem %s4, %s463
        %p465 = pneg %p170
        %p466 = pneg %p167
        %p467 = pneg %p191
        %p468 = pneg %p188
        %p469 = pneg %p212
        %p470 = pneg %p209
        %p471 = pneg %p233
        %p472 = pneg %p230
        %p473 = pneg %p261
        %p474 = pneg %p258
        %s475 = sand.u32 %s248, 1
        %s476 = scalar_lea.sflag [#allocation6], %s475
        %s477 = sand.u32 %s248, 1
        %s478 = smul.addr %s477, 16
        %s479 = scalar_lea.vmem [#allocation15], %s478
        %p480 = pneg %p289
        %p481 = pneg %p286
        %s482 = sand.u32 %s276, 1
        %s483 = scalar_lea.sflag [#allocation17], %s482
        %s484 = sand.u32 %s276, 1
        %s485 = smul.addr %s484, 16
        %s486 = scalar_lea.vmem [#allocation16], %s485
        %s487 = smul.u32 16, %s37
        %s488 = smul.u32 16, %s37
        %s489 = smul.u32 16, %s37
        %p490 = scmp.lt.s32.totalorder %s38, 3
        %s491 = scalar_select %p490, %s38, 3
        %s492 = scalar_lea.vmem %s4, %s491
        %s493 = smul.u32 2, %s37
        %s494 = smul.u32 2, %s37
        %v495 = vld [vmem:[#allocation4] sm:$0xf]
        %v496 = vld [vmem:[#allocation4 + $0x4] sm:$0xf]
        %v497 = vld [vmem:[#allocation4 + $0x8] sm:$0xf]
        %v498 = vld [vmem:[#allocation4 + $0xc] sm:$0xf]
        %v499 = vld [vmem:[#allocation4 + $0x10] sm:$0xf]
        %v500 = vld [vmem:[#allocation4 + $0x14] sm:$0xf]
        %v501 = vld [vmem:[#allocation4 + $0x18] sm:$0xf]
        %v502 = vld [vmem:[#allocation4 + $0x1c] sm:$0xf]
        %v503 = vld [vmem:[#allocation4 + $0x20] sm:$0xf]
        %v504 = vld [vmem:[#allocation4 + $0x24] sm:$0xf]
        %v505 = vld [vmem:[#allocation4 + $0x28] sm:$0xf]
        %v506 = vld [vmem:[#allocation4 + $0x2c] sm:$0xf]
        %v507 = vld [vmem:[#allocation4 + $0x30] sm:$0xf]
        %v508 = vld [vmem:[#allocation4 + $0x34] sm:$0xf]
        %v509 = vld [vmem:[#allocation4 + $0x38] sm:$0xf]
        %v510 = vld [vmem:[#allocation4 + $0x3c] sm:$0xf]
        %p511 = scmp.eq.s32.totalorder %s38, 0
        // Predicated region
        $region77: #{tpu_custom_call.1} parent=51 // pred_check
          %p512 = pneg %p511
        $region78: #{tpu_custom_call.1} parent=51 // pred_check_branch
          %514 = sbr.rel (%p512) target = $region80
        $region79: #{tpu_custom_call.1} parent=51 // pred_region
          %v531 = vrot.slane %v496, 7
          %vm532 = vcmask 1042434
          %v533 = vsel %vm532, %v531, %v495
          %v534 = vrot.slane %v497, 6
          %vm535 = vcmask 1043459
          %v536 = vsel %vm535, %v534, %v533
          %v537 = vrot.slane %v498, 5
          %vm538 = vcmask 1044484
          %v539 = vsel %vm538, %v537, %v536
          %v540 = vrot.slane %v499, 4
          %vm541 = vcmask 1045509
          %v542 = vsel %vm541, %v540, %v539
          %v543 = vrot.slane %v500, 3
          %vm544 = vcmask 1046534
          %v545 = vsel %vm544, %v543, %v542
          %v546 = vrot.slane %v501, 2
          %vm547 = vcmask 1047559
          %v548 = vsel %vm547, %v546, %v545
          %v549 = vrot.slane %v502, 1
          %vm550 = vcmask 1041409
          %v551 = vsel %vm550, %v503, %v549
          %v552 = vrot.slane %v504, 7
          %v553 = vsel %vm532, %v552, %v551
          %v554 = vrot.slane %v505, 6
          %v555 = vsel %vm535, %v554, %v553
          %v556 = vrot.slane %v506, 5
          %v557 = vsel %vm538, %v556, %v555
          %v558 = vrot.slane %v507, 4
          %v559 = vsel %vm541, %v558, %v557
          %v560 = vrot.slane %v508, 3
          %v561 = vsel %vm544, %v560, %v559
          %v562 = vrot.slane %v509, 2
          %v563 = vsel %vm547, %v562, %v561
          %v564 = vrot.slane %v510, 1
          %568 = vst [vmem:[#allocation2 - $0x1] sm:$0xfe] %v548
          %569 = vst [vmem:[#allocation2 + $0x7] sm:$0xff] %v563
          %570 = vst [vmem:[#allocation2 + $0xf] sm:$0x1] %v564
          %v571 = vsel %vm535, %v531, %v495
          %v572 = vsel %vm538, %v534, %v571
          %v573 = vsel %vm541, %v537, %v572
          %v574 = vsel %vm544, %v540, %v573
          %v575 = vsel %vm547, %v543, %v574
          %v576 = vsel %vm550, %v549, %v546
          %v577 = vsel %vm532, %v503, %v576
          %v578 = vsel %vm535, %v552, %v577
          %v579 = vsel %vm538, %v554, %v578
          %v580 = vsel %vm541, %v556, %v579
          %v581 = vsel %vm544, %v558, %v580
          %v582 = vsel %vm547, %v560, %v581
          %v583 = vsel %vm550, %v564, %v562
          %587 = vst [vmem:[#allocation3 - $0x2] sm:$0xfc] %v575
          %588 = vst [vmem:[#allocation3 + $0x6] sm:$0xff] %v582
          %589 = vst [vmem:[#allocation3 + $0xe] sm:$0x3] %v583
        $region80: #{tpu_custom_call.1} parent=51 // pred_fallthru
          _
        %v590 = vld [vmem:[#allocation2] sm:$0xff]
        %v591 = vld [vmem:[#allocation2 + $0x8] sm:$0xff]
        %v592 = vld [vmem:[#allocation3] sm:$0xff]
        %v593 = vld [vmem:[#allocation3 + $0x8] sm:$0xff]
        %v594 = vld [vmem:[#allocation7] sm:$0xff]
        %v595 = vld [vmem:[#allocation7 + $0x8] sm:$0xff]
        %v596 = vld [vmem:[#allocation7 + $0x10] sm:$0xff]
        %v597 = vld [vmem:[#allocation7 + $0x18] sm:$0xff]
        %v598 = vld [vmem:[#allocation7 + $0x20] sm:$0xff]
        %v599 = vld [vmem:[#allocation7 + $0x28] sm:$0xff]
        %v600 = vld [vmem:[#allocation7 + $0x30] sm:$0xff]
        %v601 = vld [vmem:[#allocation7 + $0x38] sm:$0xff]
        %v602 = vld [vmem:[#allocation7 + $0x40] sm:$0xff]
        %v603 = vld [vmem:[#allocation7 + $0x48] sm:$0xff]
        %v604 = vld [vmem:[#allocation7 + $0x50] sm:$0xff]
        %v605 = vld [vmem:[#allocation7 + $0x58] sm:$0xff]
        %v606 = vld [vmem:[#allocation7 + $0x60] sm:$0xff]
        %v607 = vld [vmem:[#allocation7 + $0x68] sm:$0xff]
        %v608 = vld [vmem:[#allocation7 + $0x70] sm:$0xff]
        %v609 = vld [vmem:[#allocation7 + $0x78] sm:$0xff]
        %v610 = vld [vmem:[#allocation9] sm:$0xff]
        %v611 = vld [vmem:[#allocation9 + $0x8] sm:$0xff]
        %v612 = vld [vmem:[#allocation9 + $0x10] sm:$0xff]
        %v613 = vld [vmem:[#allocation9 + $0x18] sm:$0xff]
        %v614 = vld [vmem:[#allocation9 + $0x20] sm:$0xff]
        %v615 = vld [vmem:[#allocation9 + $0x28] sm:$0xff]
        %v616 = vld [vmem:[#allocation9 + $0x30] sm:$0xff]
        %v617 = vld [vmem:[#allocation9 + $0x38] sm:$0xff]
        %v618 = vld [vmem:[#allocation9 + $0x40] sm:$0xff]
        %v619 = vld [vmem:[#allocation9 + $0x48] sm:$0xff]
        %v620 = vld [vmem:[#allocation9 + $0x50] sm:$0xff]
        %v621 = vld [vmem:[#allocation9 + $0x58] sm:$0xff]
        %v622 = vld [vmem:[#allocation9 + $0x60] sm:$0xff]
        %v623 = vld [vmem:[#allocation9 + $0x68] sm:$0xff]
        %v624 = vld [vmem:[#allocation9 + $0x70] sm:$0xff]
        %v625 = vld [vmem:[#allocation9 + $0x78] sm:$0xff]
        %v626 = vld [vmem:[#allocation9 + $0x80] sm:$0xff]
        %v627 = vld [vmem:[#allocation9 + $0x88] sm:$0xff]
        %v628 = vld [vmem:[#allocation9 + $0x90] sm:$0xff]
        %v629 = vld [vmem:[#allocation9 + $0x98] sm:$0xff]
        %v630 = vld [vmem:[#allocation9 + $0xa0] sm:$0xff]
        %v631 = vld [vmem:[#allocation9 + $0xa8] sm:$0xff]
        %v632 = vld [vmem:[#allocation9 + $0xb0] sm:$0xff]
        %v633 = vld [vmem:[#allocation9 + $0xb8] sm:$0xff]
        %v634 = vld [vmem:[#allocation9 + $0xc0] sm:$0xff]
        %v635 = vld [vmem:[#allocation9 + $0xc8] sm:$0xff]
        %v636 = vld [vmem:[#allocation9 + $0xd0] sm:$0xff]
        %v637 = vld [vmem:[#allocation9 + $0xd8] sm:$0xff]
        %v638 = vld [vmem:[#allocation9 + $0xe0] sm:$0xff]
        %v639 = vld [vmem:[#allocation9 + $0xe8] sm:$0xff]
        %v640 = vld [vmem:[#allocation9 + $0xf0] sm:$0xff]
        %v641 = vld [vmem:[#allocation9 + $0xf8] sm:$0xff]
        %v642 = vld [vmem:[%s436] sm:$0xff]
        %v643 = vld [vmem:[%s436 + $0x8] sm:$0xff]
        %v644 = vld [vmem:[%s436 + $0x10] sm:$0xff]
        %v645 = vld [vmem:[%s436 + $0x18] sm:$0xff]
        %v646 = vld [vmem:[%s436 + $0x20] sm:$0xff]
        %v647 = vld [vmem:[%s436 + $0x28] sm:$0xff]
        %v648 = vld [vmem:[%s436 + $0x30] sm:$0xff]
        %v649 = vld [vmem:[%s436 + $0x38] sm:$0xff]
        %v650 = vld [vmem:[%s436 + $0x40] sm:$0xff]
        %v651 = vld [vmem:[%s436 + $0x48] sm:$0xff]
        %v652 = vld [vmem:[%s436 + $0x50] sm:$0xff]
        %v653 = vld [vmem:[%s436 + $0x58] sm:$0xff]
        %v654 = vld [vmem:[%s436 + $0x60] sm:$0xff]
        %v655 = vld [vmem:[%s436 + $0x68] sm:$0xff]
        %v656 = vld [vmem:[%s436 + $0x70] sm:$0xff]
        %v657 = vld [vmem:[%s436 + $0x78] sm:$0xff]
        %v658 = vld [vmem:[%s492] sm:$0x1]
        %v659 = vld [vmem:[#allocation12] sm:$0xff]
        %v660 = vld [vmem:[#allocation12 + $0x8] sm:$0xff]
        %v661 = vld [vmem:[#allocation12 + $0x10] sm:$0xff]
        %v662 = vld [vmem:[#allocation12 + $0x18] sm:$0xff]
        %v663 = vld [vmem:[#allocation12 + $0x20] sm:$0xff]
        %v664 = vld [vmem:[#allocation12 + $0x28] sm:$0xff]
        %v665 = vld [vmem:[#allocation12 + $0x30] sm:$0xff]
        %v666 = vld [vmem:[#allocation12 + $0x38] sm:$0xff]
        %v667 = vld [vmem:[#allocation12 + $0x40] sm:$0xff]
        %v668 = vld [vmem:[#allocation12 + $0x48] sm:$0xff]
        %v669 = vld [vmem:[#allocation12 + $0x50] sm:$0xff]
        %v670 = vld [vmem:[#allocation12 + $0x58] sm:$0xff]
        %v671 = vld [vmem:[#allocation12 + $0x60] sm:$0xff]
        %v672 = vld [vmem:[#allocation12 + $0x68] sm:$0xff]
        %v673 = vld [vmem:[#allocation12 + $0x70] sm:$0xff]
        %v674 = vld [vmem:[#allocation12 + $0x78] sm:$0xff]
        %s675 = scalar_lea.vmem [#allocation12], 128
        %v676 = vld [vmem:[%s675] sm:$0xff]
        %v677 = vld [vmem:[%s675 + $0x8] sm:$0xff]
        %v678 = vld [vmem:[%s675 + $0x10] sm:$0xff]
        %v679 = vld [vmem:[%s675 + $0x18] sm:$0xff]
        %v680 = vld [vmem:[%s675 + $0x20] sm:$0xff]
        %v681 = vld [vmem:[%s675 + $0x28] sm:$0xff]
        %v682 = vld [vmem:[%s675 + $0x30] sm:$0xff]
        %v683 = vld [vmem:[%s675 + $0x38] sm:$0xff]
        %v684 = vld [vmem:[%s675 + $0x40] sm:$0xff]
        %v685 = vld [vmem:[%s675 + $0x48] sm:$0xff]
        %v686 = vld [vmem:[%s675 + $0x50] sm:$0xff]
        %v687 = vld [vmem:[%s675 + $0x58] sm:$0xff]
        %v688 = vld [vmem:[%s675 + $0x60] sm:$0xff]
        %v689 = vld [vmem:[%s675 + $0x68] sm:$0xff]
        %v690 = vld [vmem:[%s675 + $0x70] sm:$0xff]
        %v691 = vld [vmem:[%s675 + $0x78] sm:$0xff]
        %s692 = scalar_lea.vmem [#allocation12], 256
        %v693 = vld [vmem:[%s692] sm:$0xff]
        %v694 = vld [vmem:[%s692 + $0x8] sm:$0xff]
        %v695 = vld [vmem:[%s692 + $0x10] sm:$0xff]
        %v696 = vld [vmem:[%s692 + $0x18] sm:$0xff]
        %v697 = vld [vmem:[%s692 + $0x20] sm:$0xff]
        %v698 = vld [vmem:[%s692 + $0x28] sm:$0xff]
        %v699 = vld [vmem:[%s692 + $0x30] sm:$0xff]
        %v700 = vld [vmem:[%s692 + $0x38] sm:$0xff]
        %v701 = vld [vmem:[%s692 + $0x40] sm:$0xff]
        %v702 = vld [vmem:[%s692 + $0x48] sm:$0xff]
        %v703 = vld [vmem:[%s692 + $0x50] sm:$0xff]
        %v704 = vld [vmem:[%s692 + $0x58] sm:$0xff]
        %v705 = vld [vmem:[%s692 + $0x60] sm:$0xff]
        %v706 = vld [vmem:[%s692 + $0x68] sm:$0xff]
        %v707 = vld [vmem:[%s692 + $0x70] sm:$0xff]
        %v708 = vld [vmem:[%s692 + $0x78] sm:$0xff]
        %v709 = vld [vmem:[#allocation13] sm:$0xff]
        %v710 = vld [vmem:[#allocation13 + $0x8] sm:$0xff]
        %v711 = vld [vmem:[#allocation13 + $0x10] sm:$0xff]
        %v712 = vld [vmem:[#allocation13 + $0x18] sm:$0xff]
        %v713 = vld [vmem:[#allocation13 + $0x20] sm:$0xff]
        %v714 = vld [vmem:[#allocation13 + $0x28] sm:$0xff]
        %v715 = vld [vmem:[#allocation13 + $0x30] sm:$0xff]
        %v716 = vld [vmem:[#allocation13 + $0x38] sm:$0xff]
        %v717 = vld [vmem:[#allocation13 + $0x40] sm:$0xff]
        %v718 = vld [vmem:[#allocation13 + $0x48] sm:$0xff]
        %v719 = vld [vmem:[#allocation13 + $0x50] sm:$0xff]
        %v720 = vld [vmem:[#allocation13 + $0x58] sm:$0xff]
        %v721 = vld [vmem:[#allocation13 + $0x60] sm:$0xff]
        %v722 = vld [vmem:[#allocation13 + $0x68] sm:$0xff]
        %v723 = vld [vmem:[#allocation13 + $0x70] sm:$0xff]
        %v724 = vld [vmem:[#allocation13 + $0x78] sm:$0xff]
        %v725 = vld [vmem:[#allocation13 + $0x80] sm:$0xff]
        %v726 = vld [vmem:[#allocation13 + $0x88] sm:$0xff]
        %v727 = vld [vmem:[#allocation13 + $0x90] sm:$0xff]
        %v728 = vld [vmem:[#allocation13 + $0x98] sm:$0xff]
        %v729 = vld [vmem:[#allocation13 + $0xa0] sm:$0xff]
        %v730 = vld [vmem:[#allocation13 + $0xa8] sm:$0xff]
        %v731 = vld [vmem:[#allocation13 + $0xb0] sm:$0xff]
        %v732 = vld [vmem:[#allocation13 + $0xb8] sm:$0xff]
        %v733 = vld [vmem:[#allocation13 + $0xc0] sm:$0xff]
        %v734 = vld [vmem:[#allocation13 + $0xc8] sm:$0xff]
        %v735 = vld [vmem:[#allocation13 + $0xd0] sm:$0xff]
        %v736 = vld [vmem:[#allocation13 + $0xd8] sm:$0xff]
        %v737 = vld [vmem:[#allocation13 + $0xe0] sm:$0xff]
        %v738 = vld [vmem:[#allocation13 + $0xe8] sm:$0xff]
        %v739 = vld [vmem:[#allocation13 + $0xf0] sm:$0xff]
        %v740 = vld [vmem:[#allocation13 + $0xf8] sm:$0xff]
        %s741 = scalar_lea.vmem [#allocation13], 256
        %v742 = vld [vmem:[%s741] sm:$0xff]
        %v743 = vld [vmem:[%s741 + $0x8] sm:$0xff]
        %v744 = vld [vmem:[%s741 + $0x10] sm:$0xff]
        %v745 = vld [vmem:[%s741 + $0x18] sm:$0xff]
        %v746 = vld [vmem:[%s741 + $0x20] sm:$0xff]
        %v747 = vld [vmem:[%s741 + $0x28] sm:$0xff]
        %v748 = vld [vmem:[%s741 + $0x30] sm:$0xff]
        %v749 = vld [vmem:[%s741 + $0x38] sm:$0xff]
        %v750 = vld [vmem:[%s741 + $0x40] sm:$0xff]
        %v751 = vld [vmem:[%s741 + $0x48] sm:$0xff]
        %v752 = vld [vmem:[%s741 + $0x50] sm:$0xff]
        %v753 = vld [vmem:[%s741 + $0x58] sm:$0xff]
        %v754 = vld [vmem:[%s741 + $0x60] sm:$0xff]
        %v755 = vld [vmem:[%s741 + $0x68] sm:$0xff]
        %v756 = vld [vmem:[%s741 + $0x70] sm:$0xff]
        %v757 = vld [vmem:[%s741 + $0x78] sm:$0xff]
        %v758 = vld [vmem:[%s741 + $0x80] sm:$0xff]
        %v759 = vld [vmem:[%s741 + $0x88] sm:$0xff]
        %v760 = vld [vmem:[%s741 + $0x90] sm:$0xff]
        %v761 = vld [vmem:[%s741 + $0x98] sm:$0xff]
        %v762 = vld [vmem:[%s741 + $0xa0] sm:$0xff]
        %v763 = vld [vmem:[%s741 + $0xa8] sm:$0xff]
        %v764 = vld [vmem:[%s741 + $0xb0] sm:$0xff]
        %v765 = vld [vmem:[%s741 + $0xb8] sm:$0xff]
        %v766 = vld [vmem:[%s741 + $0xc0] sm:$0xff]
        %v767 = vld [vmem:[%s741 + $0xc8] sm:$0xff]
        %v768 = vld [vmem:[%s741 + $0xd0] sm:$0xff]
        %v769 = vld [vmem:[%s741 + $0xd8] sm:$0xff]
        %v770 = vld [vmem:[%s741 + $0xe0] sm:$0xff]
        %v771 = vld [vmem:[%s741 + $0xe8] sm:$0xff]
        %v772 = vld [vmem:[%s741 + $0xf0] sm:$0xff]
        %v773 = vld [vmem:[%s741 + $0xf8] sm:$0xff]
        %v774 = vld [vmem:[%s7] sm:$0x1f]
        %v776 = vlaneseq
        %v777 = vshrl.u32 %v776, 7
        %v778 = vsub.s32 0, %v777
        %v779 = vrot.slane %v658, %v778
        %v797 = vrot.slane %v496, 7
        %vm798 = vcmask 1041409
        %v799 = vsel %vm798, %v797, %v495
        %v800 = vrot.slane %v497, 6
        %vm801 = vcmask 1042434
        %v802 = vsel %vm801, %v800, %v799
        %v803 = vrot.slane %v498, 5
        %vm804 = vcmask 1043459
        %v805 = vsel %vm804, %v803, %v802
        %v806 = vrot.slane %v499, 4
        %vm807 = vcmask 1044484
        %v808 = vsel %vm807, %v806, %v805
        %v809 = vrot.slane %v500, 3
        %vm810 = vcmask 1045509
        %v811 = vsel %vm810, %v809, %v808
        %v812 = vrot.slane %v501, 2
        %vm813 = vcmask 1046534
        %v814 = vsel %vm813, %v812, %v811
        %v815 = vrot.slane %v502, 1
        %vm816 = vcmask 1047559
        %v817 = vsel %vm816, %v815, %v814
        %v818 = vrot.slane %v504, 7
        %v819 = vsel %vm798, %v818, %v503
        %v820 = vrot.slane %v505, 6
        %v821 = vsel %vm801, %v820, %v819
        %v822 = vrot.slane %v506, 5
        %v823 = vsel %vm804, %v822, %v821
        %v824 = vrot.slane %v507, 4
        %v825 = vsel %vm807, %v824, %v823
        %v826 = vrot.slane %v508, 3
        %v827 = vsel %vm810, %v826, %v825
        %v828 = vrot.slane %v509, 2
        %v829 = vsel %vm813, %v828, %v827
        %v830 = vrot.slane %v510, 1
        %v831 = vsel %vm816, %v830, %v829
        %834 = vmatprep.subr.mxu0 0.0
        %835 = vmatpush1.msra.mxu0 %v657
        %836 = vmatprep.subr.mxu0 0.0
        %837 = vmatpush1.msra.mxu0 %v656
        %838 = vmatprep.subr.mxu0 0.0
        %839 = vmatpush1.msra.mxu0 %v655
        %840 = vmatprep.subr.mxu0 0.0
        %841 = vmatpush1.msra.mxu0 %v654
        %842 = vmatprep.subr.mxu0 0.0
        %843 = vmatpush1.msra.mxu0 %v653
        %844 = vmatprep.subr.mxu0 0.0
        %845 = vmatpush1.msra.mxu0 %v652
        %846 = vmatprep.subr.mxu0 0.0
        %847 = vmatpush1.msra.mxu0 %v651
        %848 = vmatprep.subr.mxu0 0.0
        %849 = vmatpush1.msra.mxu0 %v650
        %850 = vmatprep.subr.mxu0 0.0
        %851 = vmatpush1.msra.mxu0 %v649
        %852 = vmatprep.subr.mxu0 0.0
        %853 = vmatpush1.msra.mxu0 %v648
        %854 = vmatprep.subr.mxu0 0.0
        %855 = vmatpush1.msra.mxu0 %v647
        %856 = vmatprep.subr.mxu0 0.0
        %857 = vmatpush1.msra.mxu0 %v646
        %858 = vmatprep.subr.mxu0 0.0
        %859 = vmatpush1.msra.mxu0 %v645
        %860 = vmatprep.subr.mxu0 0.0
        %861 = vmatpush1.msra.mxu0 %v644
        %862 = vmatprep.subr.mxu0 0.0
        %863 = vmatpush1.msra.mxu0 %v643
        %864 = vmatprep.subr.mxu0 0.0
        %865 = vmatpush1.msra.mxu0 %v642
        %866 = vmatprep.subr.mxu0 0.0
        %867 = vmatpush2.msra.mxu0 0.0
        %868 = vmatprep.subr.mxu0 0.0
        %869 = vmatpush2.msra.mxu0 0.0
        %870 = vmatprep.subr.mxu0 0.0
        %871 = vmatpush2.msra.mxu0 0.0
        %872 = vmatprep.subr.mxu0 0.0
        %873 = vmatpush2.msra.mxu0 0.0
        %874 = vmatprep.subr.mxu0 0.0
        %875 = vmatpush2.msra.mxu0 0.0
        %876 = vmatprep.subr.mxu0 0.0
        %877 = vmatpush2.msra.mxu0 0.0
        %878 = vmatprep.subr.mxu0 0.0
        %879 = vmatpush2.msra.mxu0 0.0
        %880 = vmatprep.subr.mxu0 0.0
        %881 = vmatpush2.msra.mxu0 0.0
        %882 = vmatprep.subr.mxu0 0.0
        %883 = vmatpush2.msra.mxu0 0.0
        %884 = vmatprep.subr.mxu0 0.0
        %885 = vmatpush2.msra.mxu0 0.0
        %886 = vmatprep.subr.mxu0 0.0
        %887 = vmatpush2.msra.mxu0 0.0
        %888 = vmatprep.subr.mxu0 0.0
        %889 = vmatpush2.msra.mxu0 0.0
        %890 = vmatprep.subr.mxu0 0.0
        %891 = vmatpush2.msra.mxu0 0.0
        %892 = vmatprep.subr.mxu0 0.0
        %893 = vmatpush2.msra.mxu0 0.0
        %894 = vmatprep.subr.mxu0 0.0
        %895 = vmatpush2.msra.mxu0 0.0
        %896 = vmatprep.subr.mxu0 0.0
        %897 = vmatpush2.msra.mxu0 0.0
        %898 = vmatprep.mubr.f32.mxu0 0.0
        %899 = vmatmul.mubr.f32.gmra.mxu0 %v817
        %v900 = vpop.f32.mrf.mxu0
        %v901 = vadd.f32 %v779, %v900
        %v902 = vpop.f32.mrf.mxu0
        %903 = vmatprep.mubr.f32.mxu0 0.0
        %904 = vmatmul.mubr.f32.gmra.mxu0 %v831
        %v905 = vpop.f32.mrf.mxu0
        %v906 = vadd.f32 %v779, %v905
        %v907 = vpop.f32.mrf.mxu0
        %908 = vdwg.mxu0
        %v909 = vlaneseq
        %v910 = vshrl.u32 %v909, 7
        %v911 = vsub.s32 0, %v910
        %v912 = vrot.slane %v774, %v911
        %913 = vmatprep.subr.mxu0 0.0
        %914 = vmatpush1.msra.mxu0 %v724
        %915 = vmatprep.subr.mxu0 0.0
        %916 = vmatpush1.msra.mxu0 %v723
        %917 = vmatprep.subr.mxu0 0.0
        %918 = vmatpush1.msra.mxu0 %v722
        %919 = vmatprep.subr.mxu0 0.0
        %920 = vmatpush1.msra.mxu0 %v721
        %921 = vmatprep.subr.mxu0 0.0
        %922 = vmatpush1.msra.mxu0 %v720
        %923 = vmatprep.subr.mxu0 0.0
        %924 = vmatpush1.msra.mxu0 %v719
        %925 = vmatprep.subr.mxu0 0.0
        %926 = vmatpush1.msra.mxu0 %v718
        %927 = vmatprep.subr.mxu0 0.0
        %928 = vmatpush1.msra.mxu0 %v717
        %929 = vmatprep.subr.mxu0 0.0
        %930 = vmatpush1.msra.mxu0 %v716
        %931 = vmatprep.subr.mxu0 0.0
        %932 = vmatpush1.msra.mxu0 %v715
        %933 = vmatprep.subr.mxu0 0.0
        %934 = vmatpush1.msra.mxu0 %v714
        %935 = vmatprep.subr.mxu0 0.0
        %936 = vmatpush1.msra.mxu0 %v713
        %937 = vmatprep.subr.mxu0 0.0
        %938 = vmatpush1.msra.mxu0 %v712
        %939 = vmatprep.subr.mxu0 0.0
        %940 = vmatpush1.msra.mxu0 %v711
        %941 = vmatprep.subr.mxu0 0.0
        %942 = vmatpush1.msra.mxu0 %v710
        %943 = vmatprep.subr.mxu0 0.0
        %944 = vmatpush1.msra.mxu0 %v709
        %945 = vmatprep.subr.mxu0 0.0
        %946 = vmatpush2.msra.mxu0 %v740
        %947 = vmatprep.subr.mxu0 0.0
        %948 = vmatpush2.msra.mxu0 %v739
        %949 = vmatprep.subr.mxu0 0.0
        %950 = vmatpush2.msra.mxu0 %v738
        %951 = vmatprep.subr.mxu0 0.0
        %952 = vmatpush2.msra.mxu0 %v737
        %953 = vmatprep.subr.mxu0 0.0
        %954 = vmatpush2.msra.mxu0 %v736
        %955 = vmatprep.subr.mxu0 0.0
        %956 = vmatpush2.msra.mxu0 %v735
        %957 = vmatprep.subr.mxu0 0.0
        %958 = vmatpush2.msra.mxu0 %v734
        %959 = vmatprep.subr.mxu0 0.0
        %960 = vmatpush2.msra.mxu0 %v733
        %961 = vmatprep.subr.mxu0 0.0
        %962 = vmatpush2.msra.mxu0 %v732
        %963 = vmatprep.subr.mxu0 0.0
        %964 = vmatpush2.msra.mxu0 %v731
        %965 = vmatprep.subr.mxu0 0.0
        %966 = vmatpush2.msra.mxu0 %v730
        %967 = vmatprep.subr.mxu0 0.0
        %968 = vmatpush2.msra.mxu0 %v729
        %969 = vmatprep.subr.mxu0 0.0
        %970 = vmatpush2.msra.mxu0 %v728
        %971 = vmatprep.subr.mxu0 0.0
        %972 = vmatpush2.msra.mxu0 %v727
        %973 = vmatprep.subr.mxu0 0.0
        %974 = vmatpush2.msra.mxu0 %v726
        %975 = vmatprep.subr.mxu0 0.0
        %976 = vmatpush2.msra.mxu0 %v725
        %977 = vmatprep.mubr.f32.mxu0 %v901
        %978 = vmatmul.mubr.f32.gmra.mxu0 %v590
        %v979 = vpop.f32.mrf.mxu0
        %v980 = vadd.f32 %v912, %v979
        %v981 = vpop.f32.mrf.mxu0
        %982 = vmatprep.mubr.f32.mxu0 %v906
        %983 = vmatmul.mubr.f32.gmra.mxu0 %v591
        %v984 = vpop.f32.mrf.mxu0
        %v985 = vadd.f32 %v912, %v984
        %v986 = vpop.f32.mrf.mxu0
        %987 = vdwg.mxu0
        %v988 = vlaneseq
        %v989 = vshrl.u32 %v988, 7
        %v990 = vsub.s32 1, %v989
        %v991 = vrot.slane %v774, %v990
        %v992 = vmul.f32 %v980, %v991
        %v993 = vmul.f32 %v985, %v991
        %v996 = vcombine.high %v992, %v992
        %v998 = vunpack.c.l.s4 1966171168
        %v999 = vunpack.c.0.s8 %v998
        %v1000 = vlaneseq
        %v1001 = vshrl.u32 %v1000, 7
        %v1002 = vsub.s32 %v999, %v1001
        %v1003 = vrot.slane %v992, %v1002
        %v1005 = vunpack.c.l.s4 1966171168
        %v1006 = vunpack.c.0.s8 %v1005
        %v1007 = vlaneseq
        %v1008 = vshrl.u32 %v1007, 7
        %v1009 = vsub.s32 %v1006, %v1008
        %v1010 = vrot.slane %v996, %v1009
        %v1011 = vcombine.high %v1003, %v1003
        %v1012 = vcombine.high %v1010, %v1010
        %v1014 = vunpack.c.l.s4 1966171168
        %v1015 = vunpack.c.0.s8 %v1014
        %v1016 = vlaneseq
        %v1017 = vshrl.u32 %v1016, 7
        %v1018 = vsub.s32 %v1015, %v1017
        %v1019 = vrot.slane %v1003, %v1018
        %v1021 = vunpack.c.l.s4 1966171168
        %v1022 = vunpack.c.0.s8 %v1021
        %v1023 = vlaneseq
        %v1024 = vshrl.u32 %v1023, 7
        %v1025 = vsub.s32 %v1022, %v1024
        %v1026 = vrot.slane %v1010, %v1025
        %v1028 = vunpack.c.l.s4 1966171168
        %v1029 = vunpack.c.0.s8 %v1028
        %v1030 = vlaneseq
        %v1031 = vshrl.u32 %v1030, 7
        %v1032 = vsub.s32 %v1029, %v1031
        %v1033 = vrot.slane %v1011, %v1032
        %v1035 = vunpack.c.l.s4 1966171168
        %v1036 = vunpack.c.0.s8 %v1035
        %v1037 = vlaneseq
        %v1038 = vshrl.u32 %v1037, 7
        %v1039 = vsub.s32 %v1036, %v1038
        %v1040 = vrot.slane %v1012, %v1039
        %v1041 = vcombine.high %v1019, %v1019
        %v1042 = vcombine.high %v1026, %v1026
        %v1043 = vcombine.high %v1033, %v1033
        %v1044 = vcombine.high %v1040, %v1040
        %v1045 = vcombine.high %v993, %v993
        %v1047 = vunpack.c.l.s4 1966171168
        %v1048 = vunpack.c.0.s8 %v1047
        %v1049 = vlaneseq
        %v1050 = vshrl.u32 %v1049, 7
        %v1051 = vsub.s32 %v1048, %v1050
        %v1052 = vrot.slane %v993, %v1051
        %v1054 = vunpack.c.l.s4 1966171168
        %v1055 = vunpack.c.0.s8 %v1054
        %v1056 = vlaneseq
        %v1057 = vshrl.u32 %v1056, 7
        %v1058 = vsub.s32 %v1055, %v1057
        %v1059 = vrot.slane %v1045, %v1058
        %v1060 = vcombine.high %v1052, %v1052
        %v1061 = vcombine.high %v1059, %v1059
        %v1063 = vunpack.c.l.s4 1966171168
        %v1064 = vunpack.c.0.s8 %v1063
        %v1065 = vlaneseq
        %v1066 = vshrl.u32 %v1065, 7
        %v1067 = vsub.s32 %v1064, %v1066
        %v1068 = vrot.slane %v1052, %v1067
        %v1070 = vunpack.c.l.s4 1966171168
        %v1071 = vunpack.c.0.s8 %v1070
        %v1072 = vlaneseq
        %v1073 = vshrl.u32 %v1072, 7
        %v1074 = vsub.s32 %v1071, %v1073
        %v1075 = vrot.slane %v1059, %v1074
        %v1077 = vunpack.c.l.s4 1966171168
        %v1078 = vunpack.c.0.s8 %v1077
        %v1079 = vlaneseq
        %v1080 = vshrl.u32 %v1079, 7
        %v1081 = vsub.s32 %v1078, %v1080
        %v1082 = vrot.slane %v1060, %v1081
        %v1084 = vunpack.c.l.s4 1966171168
        %v1085 = vunpack.c.0.s8 %v1084
        %v1086 = vlaneseq
        %v1087 = vshrl.u32 %v1086, 7
        %v1088 = vsub.s32 %v1085, %v1087
        %v1089 = vrot.slane %v1061, %v1088
        %v1090 = vcombine.high %v1068, %v1068
        %v1091 = vcombine.high %v1075, %v1075
        %v1092 = vcombine.high %v1082, %v1082
        %v1093 = vcombine.high %v1089, %v1089
        %v1094 = vlaneseq
        %v1095 = vshrl.u32 %v1094, 7
        %v1096 = vsub.s32 0, %v1095
        %v1097 = vrot.slane %v1019, %v1096
        %v1098 = vlaneseq
        %v1099 = vshrl.u32 %v1098, 7
        %v1100 = vsub.s32 0, %v1099
        %v1101 = vrot.slane %v1033, %v1100
        %v1102 = vlaneseq
        %v1103 = vshrl.u32 %v1102, 7
        %v1104 = vsub.s32 0, %v1103
        %v1105 = vrot.slane %v1041, %v1104
        %v1106 = vlaneseq
        %v1107 = vshrl.u32 %v1106, 7
        %v1108 = vsub.s32 0, %v1107
        %v1109 = vrot.slane %v1043, %v1108
        %v1110 = vlaneseq
        %v1111 = vshrl.u32 %v1110, 7
        %v1112 = vsub.s32 0, %v1111
        %v1113 = vrot.slane %v1026, %v1112
        %v1114 = vlaneseq
        %v1115 = vshrl.u32 %v1114, 7
        %v1116 = vsub.s32 0, %v1115
        %v1117 = vrot.slane %v1040, %v1116
        %v1118 = vlaneseq
        %v1119 = vshrl.u32 %v1118, 7
        %v1120 = vsub.s32 0, %v1119
        %v1121 = vrot.slane %v1042, %v1120
        %v1122 = vlaneseq
        %v1123 = vshrl.u32 %v1122, 7
        %v1124 = vsub.s32 0, %v1123
        %v1125 = vrot.slane %v1044, %v1124
        %v1126 = vlaneseq
        %v1127 = vshrl.u32 %v1126, 7
        %v1128 = vsub.s32 0, %v1127
        %v1129 = vrot.slane %v1068, %v1128
        %v1130 = vlaneseq
        %v1131 = vshrl.u32 %v1130, 7
        %v1132 = vsub.s32 0, %v1131
        %v1133 = vrot.slane %v1082, %v1132
        %v1134 = vlaneseq
        %v1135 = vshrl.u32 %v1134, 7
        %v1136 = vsub.s32 0, %v1135
        %v1137 = vrot.slane %v1090, %v1136
        %v1138 = vlaneseq
        %v1139 = vshrl.u32 %v1138, 7
        %v1140 = vsub.s32 0, %v1139
        %v1141 = vrot.slane %v1092, %v1140
        %v1142 = vlaneseq
        %v1143 = vshrl.u32 %v1142, 7
        %v1144 = vsub.s32 0, %v1143
        %v1145 = vrot.slane %v1075, %v1144
        %v1146 = vlaneseq
        %v1147 = vshrl.u32 %v1146, 7
        %v1148 = vsub.s32 0, %v1147
        %v1149 = vrot.slane %v1089, %v1148
        %v1150 = vlaneseq
        %v1151 = vshrl.u32 %v1150, 7
        %v1152 = vsub.s32 0, %v1151
        %v1153 = vrot.slane %v1091, %v1152
        %v1154 = vlaneseq
        %v1155 = vshrl.u32 %v1154, 7
        %v1156 = vsub.s32 0, %v1155
        %v1157 = vrot.slane %v1093, %v1156
        %v1174 = vmul.f32 %v594, %v1097
        %v1175 = vmul.f32 %v595, %v1101
        %v1176 = vmul.f32 %v596, %v1105
        %v1177 = vmul.f32 %v597, %v1109
        %v1178 = vmul.f32 %v598, %v1113
        %v1179 = vmul.f32 %v599, %v1117
        %v1180 = vmul.f32 %v600, %v1121
        %v1181 = vmul.f32 %v601, %v1125
        %v1182 = vmul.f32 %v602, %v1129
        %v1183 = vmul.f32 %v603, %v1133
        %v1184 = vmul.f32 %v604, %v1137
        %v1185 = vmul.f32 %v605, %v1141
        %v1186 = vmul.f32 %v606, %v1145
        %v1187 = vmul.f32 %v607, %v1149
        %v1188 = vmul.f32 %v608, %v1153
        %v1189 = vmul.f32 %v609, %v1157
        %1190 = vadd.xlane.f32.xlu0 %v1174
        %v1191 = vpop.xlane.xlu0 %1190
        %1192 = vadd.xlane.f32.xlu0 %v1175
        %v1193 = vpop.xlane.xlu0 %1192
        %1194 = vadd.xlane.f32.xlu0 %v1176
        %v1195 = vpop.xlane.xlu0 %1194
        %1196 = vadd.xlane.f32.xlu0 %v1177
        %v1197 = vpop.xlane.xlu0 %1196
        %1198 = vadd.xlane.f32.xlu0 %v1178
        %v1199 = vpop.xlane.xlu0 %1198
        %1200 = vadd.xlane.f32.xlu0 %v1179
        %v1201 = vpop.xlane.xlu0 %1200
        %1202 = vadd.xlane.f32.xlu0 %v1180
        %v1203 = vpop.xlane.xlu0 %1202
        %1204 = vadd.xlane.f32.xlu0 %v1181
        %v1205 = vpop.xlane.xlu0 %1204
        %1206 = vadd.xlane.f32.xlu0 %v1182
        %v1207 = vpop.xlane.xlu0 %1206
        %1208 = vadd.xlane.f32.xlu0 %v1183
        %v1209 = vpop.xlane.xlu0 %1208
        %1210 = vadd.xlane.f32.xlu0 %v1184
        %v1211 = vpop.xlane.xlu0 %1210
        %1212 = vadd.xlane.f32.xlu0 %v1185
        %v1213 = vpop.xlane.xlu0 %1212
        %1214 = vadd.xlane.f32.xlu0 %v1186
        %v1215 = vpop.xlane.xlu0 %1214
        %1216 = vadd.xlane.f32.xlu0 %v1187
        %v1217 = vpop.xlane.xlu0 %1216
        %1218 = vadd.xlane.f32.xlu0 %v1188
        %v1219 = vpop.xlane.xlu0 %1218
        %1220 = vadd.xlane.f32.xlu0 %v1189
        %v1221 = vpop.xlane.xlu0 %1220
        %v1238 = vlaneseq
        %v1239 = vand.u32 %v1238, 127
        %v1240 = vlaneseq
        %v1241 = vshrl.u32 %v1240, 7
        %v1242 = vsub.s32 %v1239, %v1241
        %v1243 = vrot.slane %v1191, %v1242
        %v1244 = vlaneseq
        %v1245 = vshrl.u32 %v1244, 7
        %v1246 = vsub.s32 %v1239, %v1245
        %v1247 = vrot.slane %v1193, %v1246
        %v1248 = vlaneseq
        %v1249 = vshrl.u32 %v1248, 7
        %v1250 = vsub.s32 %v1239, %v1249
        %v1251 = vrot.slane %v1195, %v1250
        %v1252 = vlaneseq
        %v1253 = vshrl.u32 %v1252, 7
        %v1254 = vsub.s32 %v1239, %v1253
        %v1255 = vrot.slane %v1197, %v1254
        %v1256 = vlaneseq
        %v1257 = vshrl.u32 %v1256, 7
        %v1258 = vsub.s32 %v1239, %v1257
        %v1259 = vrot.slane %v1199, %v1258
        %v1260 = vlaneseq
        %v1261 = vshrl.u32 %v1260, 7
        %v1262 = vsub.s32 %v1239, %v1261
        %v1263 = vrot.slane %v1201, %v1262
        %v1264 = vlaneseq
        %v1265 = vshrl.u32 %v1264, 7
        %v1266 = vsub.s32 %v1239, %v1265
        %v1267 = vrot.slane %v1203, %v1266
        %v1268 = vlaneseq
        %v1269 = vshrl.u32 %v1268, 7
        %v1270 = vsub.s32 %v1239, %v1269
        %v1271 = vrot.slane %v1205, %v1270
        %v1272 = vlaneseq
        %v1273 = vshrl.u32 %v1272, 7
        %v1274 = vsub.s32 %v1239, %v1273
        %v1275 = vrot.slane %v1207, %v1274
        %v1276 = vlaneseq
        %v1277 = vshrl.u32 %v1276, 7
        %v1278 = vsub.s32 %v1239, %v1277
        %v1279 = vrot.slane %v1209, %v1278
        %v1280 = vlaneseq
        %v1281 = vshrl.u32 %v1280, 7
        %v1282 = vsub.s32 %v1239, %v1281
        %v1283 = vrot.slane %v1211, %v1282
        %v1284 = vlaneseq
        %v1285 = vshrl.u32 %v1284, 7
        %v1286 = vsub.s32 %v1239, %v1285
        %v1287 = vrot.slane %v1213, %v1286
        %v1288 = vlaneseq
        %v1289 = vshrl.u32 %v1288, 7
        %v1290 = vsub.s32 %v1239, %v1289
        %v1291 = vrot.slane %v1215, %v1290
        %v1292 = vlaneseq
        %v1293 = vshrl.u32 %v1292, 7
        %v1294 = vsub.s32 %v1239, %v1293
        %v1295 = vrot.slane %v1217, %v1294
        %v1296 = vlaneseq
        %v1297 = vshrl.u32 %v1296, 7
        %v1298 = vsub.s32 %v1239, %v1297
        %v1299 = vrot.slane %v1219, %v1298
        %v1300 = vlaneseq
        %v1301 = vshrl.u32 %v1300, 7
        %v1302 = vsub.s32 %v1239, %v1301
        %v1303 = vrot.slane %v1221, %v1302
        %v1304 = vsel %vm798, %v1247, %v1243
        %v1305 = vsel %vm801, %v1251, %v1304
        %v1306 = vsel %vm804, %v1255, %v1305
        %v1307 = vsel %vm807, %v1259, %v1306
        %v1308 = vsel %vm810, %v1263, %v1307
        %v1309 = vsel %vm813, %v1267, %v1308
        %v1310 = vsel %vm816, %v1271, %v1309
        %v1311 = vsel %vm798, %v1279, %v1275
        %v1312 = vsel %vm801, %v1283, %v1311
        %v1313 = vsel %vm804, %v1287, %v1312
        %v1314 = vsel %vm807, %v1291, %v1313
        %v1315 = vsel %vm810, %v1295, %v1314
        %v1316 = vsel %vm813, %v1299, %v1315
        %v1317 = vsel %vm816, %v1303, %v1316
        %vm1320 = vcmask 64512
        %v1321 = vsel %vm1320, %v1310, -inf
        %1322 = vmax.xlane.f32.xlu0 %v1321
        %v1323 = vpop.xlane.xlu0 %1322
        %v1324 = vsel %vm1320, %v1317, -inf
        %1325 = vmax.xlane.f32.xlu0 %v1324
        %v1326 = vpop.xlane.xlu0 %1325
        %v1329 = vlaneseq
        %v1330 = vshrl.u32 %v1329, 7
        %v1331 = vsub.s32 0, %v1330
        %v1332 = vrot.slane %v1323, %v1331
        %v1333 = vlaneseq
        %v1334 = vshrl.u32 %v1333, 7
        %v1335 = vsub.s32 1, %v1334
        %v1336 = vrot.slane %v1323, %v1335
        %v1337 = vlaneseq
        %v1338 = vshrl.u32 %v1337, 7
        %v1339 = vsub.s32 2, %v1338
        %v1340 = vrot.slane %v1323, %v1339
        %v1341 = vlaneseq
        %v1342 = vshrl.u32 %v1341, 7
        %v1343 = vsub.s32 3, %v1342
        %v1344 = vrot.slane %v1323, %v1343
        %v1345 = vlaneseq
        %v1346 = vshrl.u32 %v1345, 7
        %v1347 = vsub.s32 4, %v1346
        %v1348 = vrot.slane %v1323, %v1347
        %v1349 = vlaneseq
        %v1350 = vshrl.u32 %v1349, 7
        %v1351 = vsub.s32 5, %v1350
        %v1352 = vrot.slane %v1323, %v1351
        %v1353 = vlaneseq
        %v1354 = vshrl.u32 %v1353, 7
        %v1355 = vsub.s32 6, %v1354
        %v1356 = vrot.slane %v1323, %v1355
        %v1357 = vlaneseq
        %v1358 = vshrl.u32 %v1357, 7
        %v1359 = vsub.s32 7, %v1358
        %v1360 = vrot.slane %v1323, %v1359
        %v1361 = vlaneseq
        %v1362 = vshrl.u32 %v1361, 7
        %v1363 = vsub.s32 0, %v1362
        %v1364 = vrot.slane %v1326, %v1363
        %v1365 = vlaneseq
        %v1366 = vshrl.u32 %v1365, 7
        %v1367 = vsub.s32 1, %v1366
        %v1368 = vrot.slane %v1326, %v1367
        %v1369 = vlaneseq
        %v1370 = vshrl.u32 %v1369, 7
        %v1371 = vsub.s32 2, %v1370
        %v1372 = vrot.slane %v1326, %v1371
        %v1373 = vlaneseq
        %v1374 = vshrl.u32 %v1373, 7
        %v1375 = vsub.s32 3, %v1374
        %v1376 = vrot.slane %v1326, %v1375
        %v1377 = vlaneseq
        %v1378 = vshrl.u32 %v1377, 7
        %v1379 = vsub.s32 4, %v1378
        %v1380 = vrot.slane %v1326, %v1379
        %v1381 = vlaneseq
        %v1382 = vshrl.u32 %v1381, 7
        %v1383 = vsub.s32 5, %v1382
        %v1384 = vrot.slane %v1326, %v1383
        %v1385 = vlaneseq
        %v1386 = vshrl.u32 %v1385, 7
        %v1387 = vsub.s32 6, %v1386
        %v1388 = vrot.slane %v1326, %v1387
        %v1389 = vlaneseq
        %v1390 = vshrl.u32 %v1389, 7
        %v1391 = vsub.s32 7, %v1390
        %v1392 = vrot.slane %v1326, %v1391
        %v1409 = vsub.f32 %v1191, %v1332
        %v1410 = vsub.f32 %v1193, %v1336
        %v1411 = vsub.f32 %v1195, %v1340
        %v1412 = vsub.f32 %v1197, %v1344
        %v1413 = vsub.f32 %v1199, %v1348
        %v1414 = vsub.f32 %v1201, %v1352
        %v1415 = vsub.f32 %v1203, %v1356
        %v1416 = vsub.f32 %v1205, %v1360
        %v1417 = vsub.f32 %v1207, %v1364
        %v1418 = vsub.f32 %v1209, %v1368
        %v1419 = vsub.f32 %v1211, %v1372
        %v1420 = vsub.f32 %v1213, %v1376
        %v1421 = vsub.f32 %v1215, %v1380
        %v1422 = vsub.f32 %v1217, %v1384
        %v1423 = vsub.f32 %v1219, %v1388
        %v1424 = vsub.f32 %v1221, %v1392
        %v1425 = vmul.f32 %v1409, 1.442695
        %v1426 = vpow.pop %v1425
        %v1427 = vmul.f32 %v1410, 1.442695
        %v1428 = vpow.pop %v1427
        %v1429 = vmul.f32 %v1411, 1.442695
        %v1430 = vpow.pop %v1429
        %v1431 = vmul.f32 %v1412, 1.442695
        %v1432 = vpow.pop %v1431
        %v1433 = vmul.f32 %v1413, 1.442695
        %v1434 = vpow.pop %v1433
        %v1435 = vmul.f32 %v1414, 1.442695
        %v1436 = vpow.pop %v1435
        %v1437 = vmul.f32 %v1415, 1.442695
        %v1438 = vpow.pop %v1437
        %v1439 = vmul.f32 %v1416, 1.442695
        %v1440 = vpow.pop %v1439
        %v1441 = vmul.f32 %v1417, 1.442695
        %v1442 = vpow.pop %v1441
        %v1443 = vmul.f32 %v1418, 1.442695
        %v1444 = vpow.pop %v1443
        %v1445 = vmul.f32 %v1419, 1.442695
        %v1446 = vpow.pop %v1445
        %v1447 = vmul.f32 %v1420, 1.442695
        %v1448 = vpow.pop %v1447
        %v1449 = vmul.f32 %v1421, 1.442695
        %v1450 = vpow.pop %v1449
        %v1451 = vmul.f32 %v1422, 1.442695
        %v1452 = vpow.pop %v1451
        %v1453 = vmul.f32 %v1423, 1.442695
        %v1454 = vpow.pop %v1453
        %v1455 = vmul.f32 %v1424, 1.442695
        %v1456 = vpow.pop %v1455
        %1473 = vset.pattern.permute.xlu0 0
        %1474 = vperm.xlu0 %1473, %v1426
        %v1475 = vpop.permute.xlu0 %1474
        %1476 = vset.pattern.permute.xlu0 0
        %1477 = vperm.xlu0 %1476, %v1428
        %v1478 = vpop.permute.xlu0 %1477
        %1479 = vset.pattern.permute.xlu0 0
        %1480 = vperm.xlu0 %1479, %v1430
        %v1481 = vpop.permute.xlu0 %1480
        %1482 = vset.pattern.permute.xlu0 0
        %1483 = vperm.xlu0 %1482, %v1432
        %v1484 = vpop.permute.xlu0 %1483
        %1485 = vset.pattern.permute.xlu0 0
        %1486 = vperm.xlu0 %1485, %v1434
        %v1487 = vpop.permute.xlu0 %1486
        %1488 = vset.pattern.permute.xlu0 0
        %1489 = vperm.xlu0 %1488, %v1436
        %v1490 = vpop.permute.xlu0 %1489
        %1491 = vset.pattern.permute.xlu0 0
        %1492 = vperm.xlu0 %1491, %v1438
        %v1493 = vpop.permute.xlu0 %1492
        %1494 = vset.pattern.permute.xlu0 0
        %1495 = vperm.xlu0 %1494, %v1440
        %v1496 = vpop.permute.xlu0 %1495
        %1497 = vset.pattern.permute.xlu0 0
        %1498 = vperm.xlu0 %1497, %v1442
        %v1499 = vpop.permute.xlu0 %1498
        %1500 = vset.pattern.permute.xlu0 0
        %1501 = vperm.xlu0 %1500, %v1444
        %v1502 = vpop.permute.xlu0 %1501
        %1503 = vset.pattern.permute.xlu0 0
        %1504 = vperm.xlu0 %1503, %v1446
        %v1505 = vpop.permute.xlu0 %1504
        %1506 = vset.pattern.permute.xlu0 0
        %1507 = vperm.xlu0 %1506, %v1448
        %v1508 = vpop.permute.xlu0 %1507
        %1509 = vset.pattern.permute.xlu0 0
        %1510 = vperm.xlu0 %1509, %v1450
        %v1511 = vpop.permute.xlu0 %1510
        %1512 = vset.pattern.permute.xlu0 0
        %1513 = vperm.xlu0 %1512, %v1452
        %v1514 = vpop.permute.xlu0 %1513
        %1515 = vset.pattern.permute.xlu0 0
        %1516 = vperm.xlu0 %1515, %v1454
        %v1517 = vpop.permute.xlu0 %1516
        %1518 = vset.pattern.permute.xlu0 0
        %1519 = vperm.xlu0 %1518, %v1456
        %v1520 = vpop.permute.xlu0 %1519
        %v1521 = vlaneseq
        %v1522 = vshrl.u32 %v1521, 7
        %v1523 = vsub.s32 %v1239, %v1522
        %v1524 = vrot.slane %v1475, %v1523
        %v1525 = vlaneseq
        %v1526 = vshrl.u32 %v1525, 7
        %v1527 = vsub.s32 %v1239, %v1526
        %v1528 = vrot.slane %v1478, %v1527
        %v1529 = vlaneseq
        %v1530 = vshrl.u32 %v1529, 7
        %v1531 = vsub.s32 %v1239, %v1530
        %v1532 = vrot.slane %v1481, %v1531
        %v1533 = vlaneseq
        %v1534 = vshrl.u32 %v1533, 7
        %v1535 = vsub.s32 %v1239, %v1534
        %v1536 = vrot.slane %v1484, %v1535
        %v1537 = vlaneseq
        %v1538 = vshrl.u32 %v1537, 7
        %v1539 = vsub.s32 %v1239, %v1538
        %v1540 = vrot.slane %v1487, %v1539
        %v1541 = vlaneseq
        %v1542 = vshrl.u32 %v1541, 7
        %v1543 = vsub.s32 %v1239, %v1542
        %v1544 = vrot.slane %v1490, %v1543
        %v1545 = vlaneseq
        %v1546 = vshrl.u32 %v1545, 7
        %v1547 = vsub.s32 %v1239, %v1546
        %v1548 = vrot.slane %v1493, %v1547
        %v1549 = vlaneseq
        %v1550 = vshrl.u32 %v1549, 7
        %v1551 = vsub.s32 %v1239, %v1550
        %v1552 = vrot.slane %v1496, %v1551
        %v1553 = vlaneseq
        %v1554 = vshrl.u32 %v1553, 7
        %v1555 = vsub.s32 %v1239, %v1554
        %v1556 = vrot.slane %v1499, %v1555
        %v1557 = vlaneseq
        %v1558 = vshrl.u32 %v1557, 7
        %v1559 = vsub.s32 %v1239, %v1558
        %v1560 = vrot.slane %v1502, %v1559
        %v1561 = vlaneseq
        %v1562 = vshrl.u32 %v1561, 7
        %v1563 = vsub.s32 %v1239, %v1562
        %v1564 = vrot.slane %v1505, %v1563
        %v1565 = vlaneseq
        %v1566 = vshrl.u32 %v1565, 7
        %v1567 = vsub.s32 %v1239, %v1566
        %v1568 = vrot.slane %v1508, %v1567
        %v1569 = vlaneseq
        %v1570 = vshrl.u32 %v1569, 7
        %v1571 = vsub.s32 %v1239, %v1570
        %v1572 = vrot.slane %v1511, %v1571
        %v1573 = vlaneseq
        %v1574 = vshrl.u32 %v1573, 7
        %v1575 = vsub.s32 %v1239, %v1574
        %v1576 = vrot.slane %v1514, %v1575
        %v1577 = vlaneseq
        %v1578 = vshrl.u32 %v1577, 7
        %v1579 = vsub.s32 %v1239, %v1578
        %v1580 = vrot.slane %v1517, %v1579
        %v1581 = vlaneseq
        %v1582 = vshrl.u32 %v1581, 7
        %v1583 = vsub.s32 %v1239, %v1582
        %v1584 = vrot.slane %v1520, %v1583
        %v1585 = vsel %vm798, %v1528, %v1524
        %v1586 = vsel %vm801, %v1532, %v1585
        %v1587 = vsel %vm804, %v1536, %v1586
        %v1588 = vsel %vm807, %v1540, %v1587
        %v1589 = vsel %vm810, %v1544, %v1588
        %v1590 = vsel %vm813, %v1548, %v1589
        %v1591 = vsel %vm816, %v1552, %v1590
        %v1592 = vsel %vm798, %v1560, %v1556
        %v1593 = vsel %vm801, %v1564, %v1592
        %v1594 = vsel %vm804, %v1568, %v1593
        %v1595 = vsel %vm807, %v1572, %v1594
        %v1596 = vsel %vm810, %v1576, %v1595
        %v1597 = vsel %vm813, %v1580, %v1596
        %v1598 = vsel %vm816, %v1584, %v1597
        %v1601 = vsel %vm1320, %v1591, 0.0
        %1602 = vadd.xlane.f32.xlu0 %v1601
        %v1603 = vpop.xlane.xlu0 %1602
        %v1604 = vsel %vm1320, %v1598, 0.0
        %1605 = vadd.xlane.f32.xlu0 %v1604
        %v1606 = vpop.xlane.xlu0 %1605
        %v1609 = vlaneseq
        %v1610 = vshrl.u32 %v1609, 7
        %v1611 = vsub.s32 0, %v1610
        %v1612 = vrot.slane %v1603, %v1611
        %v1613 = vlaneseq
        %v1614 = vshrl.u32 %v1613, 7
        %v1615 = vsub.s32 1, %v1614
        %v1616 = vrot.slane %v1603, %v1615
        %v1617 = vlaneseq
        %v1618 = vshrl.u32 %v1617, 7
        %v1619 = vsub.s32 2, %v1618
        %v1620 = vrot.slane %v1603, %v1619
        %v1621 = vlaneseq
        %v1622 = vshrl.u32 %v1621, 7
        %v1623 = vsub.s32 3, %v1622
        %v1624 = vrot.slane %v1603, %v1623
        %v1625 = vlaneseq
        %v1626 = vshrl.u32 %v1625, 7
        %v1627 = vsub.s32 4, %v1626
        %v1628 = vrot.slane %v1603, %v1627
        %v1629 = vlaneseq
        %v1630 = vshrl.u32 %v1629, 7
        %v1631 = vsub.s32 5, %v1630
        %v1632 = vrot.slane %v1603, %v1631
        %v1633 = vlaneseq
        %v1634 = vshrl.u32 %v1633, 7
        %v1635 = vsub.s32 6, %v1634
        %v1636 = vrot.slane %v1603, %v1635
        %v1637 = vlaneseq
        %v1638 = vshrl.u32 %v1637, 7
        %v1639 = vsub.s32 7, %v1638
        %v1640 = vrot.slane %v1603, %v1639
        %v1641 = vlaneseq
        %v1642 = vshrl.u32 %v1641, 7
        %v1643 = vsub.s32 0, %v1642
        %v1644 = vrot.slane %v1606, %v1643
        %v1645 = vlaneseq
        %v1646 = vshrl.u32 %v1645, 7
        %v1647 = vsub.s32 1, %v1646
        %v1648 = vrot.slane %v1606, %v1647
        %v1649 = vlaneseq
        %v1650 = vshrl.u32 %v1649, 7
        %v1651 = vsub.s32 2, %v1650
        %v1652 = vrot.slane %v1606, %v1651
        %v1653 = vlaneseq
        %v1654 = vshrl.u32 %v1653, 7
        %v1655 = vsub.s32 3, %v1654
        %v1656 = vrot.slane %v1606, %v1655
        %v1657 = vlaneseq
        %v1658 = vshrl.u32 %v1657, 7
        %v1659 = vsub.s32 4, %v1658
        %v1660 = vrot.slane %v1606, %v1659
        %v1661 = vlaneseq
        %v1662 = vshrl.u32 %v1661, 7
        %v1663 = vsub.s32 5, %v1662
        %v1664 = vrot.slane %v1606, %v1663
        %v1665 = vlaneseq
        %v1666 = vshrl.u32 %v1665, 7
        %v1667 = vsub.s32 6, %v1666
        %v1668 = vrot.slane %v1606, %v1667
        %v1669 = vlaneseq
        %v1670 = vshrl.u32 %v1669, 7
        %v1671 = vsub.s32 7, %v1670
        %v1672 = vrot.slane %v1606, %v1671
        %v1689 = vrcp.pop %v1612
        %v1690 = vmul.f32 %v1426, %v1689
        %v1691 = vrcp.pop %v1616
        %v1692 = vmul.f32 %v1428, %v1691
        %v1693 = vrcp.pop %v1620
        %v1694 = vmul.f32 %v1430, %v1693
        %v1695 = vrcp.pop %v1624
        %v1696 = vmul.f32 %v1432, %v1695
        %v1697 = vrcp.pop %v1628
        %v1698 = vmul.f32 %v1434, %v1697
        %v1699 = vrcp.pop %v1632
        %v1700 = vmul.f32 %v1436, %v1699
        %v1701 = vrcp.pop %v1636
        %v1702 = vmul.f32 %v1438, %v1701
        %v1703 = vrcp.pop %v1640
        %v1704 = vmul.f32 %v1440, %v1703
        %v1705 = vrcp.pop %v1644
        %v1706 = vmul.f32 %v1442, %v1705
        %v1707 = vrcp.pop %v1648
        %v1708 = vmul.f32 %v1444, %v1707
        %v1709 = vrcp.pop %v1652
        %v1710 = vmul.f32 %v1446, %v1709
        %v1711 = vrcp.pop %v1656
        %v1712 = vmul.f32 %v1448, %v1711
        %v1713 = vrcp.pop %v1660
        %v1714 = vmul.f32 %v1450, %v1713
        %v1715 = vrcp.pop %v1664
        %v1716 = vmul.f32 %v1452, %v1715
        %v1717 = vrcp.pop %v1668
        %v1718 = vmul.f32 %v1454, %v1717
        %v1719 = vrcp.pop %v1672
        %v1720 = vmul.f32 %v1456, %v1719
        %1722 = vset.pattern.permute.xlu0 0
        %1723 = vperm.xlu0 %1722, %v1690
        %v1724 = vpop.permute.xlu0 %1723
        %1727 = vset.pattern.permute.xlu0 0
        %1728 = vperm.xlu0 %1727, %v1692
        %v1729 = vpop.permute.xlu0 %1728
        %1732 = vset.pattern.permute.xlu0 0
        %1733 = vperm.xlu0 %1732, %v1694
        %v1734 = vpop.permute.xlu0 %1733
        %1737 = vset.pattern.permute.xlu0 0
        %1738 = vperm.xlu0 %1737, %v1696
        %v1739 = vpop.permute.xlu0 %1738
        %1742 = vset.pattern.permute.xlu0 0
        %1743 = vperm.xlu0 %1742, %v1698
        %v1744 = vpop.permute.xlu0 %1743
        %1747 = vset.pattern.permute.xlu0 0
        %1748 = vperm.xlu0 %1747, %v1700
        %v1749 = vpop.permute.xlu0 %1748
        %1752 = vset.pattern.permute.xlu0 0
        %1753 = vperm.xlu0 %1752, %v1702
        %v1754 = vpop.permute.xlu0 %1753
        %1757 = vset.pattern.permute.xlu0 0
        %1758 = vperm.xlu0 %1757, %v1704
        %v1759 = vpop.permute.xlu0 %1758
        %1762 = vset.pattern.permute.xlu0 0
        %1763 = vperm.xlu0 %1762, %v1706
        %v1764 = vpop.permute.xlu0 %1763
        %1767 = vset.pattern.permute.xlu0 0
        %1768 = vperm.xlu0 %1767, %v1708
        %v1769 = vpop.permute.xlu0 %1768
        %1772 = vset.pattern.permute.xlu0 0
        %1773 = vperm.xlu0 %1772, %v1710
        %v1774 = vpop.permute.xlu0 %1773
        %1777 = vset.pattern.permute.xlu0 0
        %1778 = vperm.xlu0 %1777, %v1712
        %v1779 = vpop.permute.xlu0 %1778
        %1782 = vset.pattern.permute.xlu0 0
        %1783 = vperm.xlu0 %1782, %v1714
        %v1784 = vpop.permute.xlu0 %1783
        %1787 = vset.pattern.permute.xlu0 0
        %1788 = vperm.xlu0 %1787, %v1716
        %v1789 = vpop.permute.xlu0 %1788
        %1792 = vset.pattern.permute.xlu0 0
        %1793 = vperm.xlu0 %1792, %v1718
        %v1794 = vpop.permute.xlu0 %1793
        %1797 = vset.pattern.permute.xlu0 0
        %1798 = vperm.xlu0 %1797, %v1720
        %v1799 = vpop.permute.xlu0 %1798
        %v1801 = vmul.f32 %v1724, %v594
        %v1802 = vmul.f32 %v1729, %v595
        %v1803 = vmul.f32 %v1734, %v596
        %v1804 = vmul.f32 %v1739, %v597
        %v1805 = vmul.f32 %v1744, %v598
        %v1806 = vmul.f32 %v1749, %v599
        %v1807 = vmul.f32 %v1754, %v600
        %v1808 = vmul.f32 %v1759, %v601
        %v1809 = vmul.f32 %v1764, %v602
        %v1810 = vmul.f32 %v1769, %v603
        %v1811 = vmul.f32 %v1774, %v604
        %v1812 = vmul.f32 %v1779, %v605
        %v1813 = vmul.f32 %v1784, %v606
        %v1814 = vmul.f32 %v1789, %v607
        %v1815 = vmul.f32 %v1794, %v608
        %v1816 = vmul.f32 %v1799, %v609
        %v1817 = vrot.slane %v1801, 4
        %v1818 = vadd.f32 %v1801, %v1817
        %v1819 = vrot.slane %v1818, 2
        %v1820 = vadd.f32 %v1818, %v1819
        %v1821 = vrot.slane %v1820, 1
        %v1822 = vadd.f32 %v1820, %v1821
        %v1823 = vrot.slane %v1802, 4
        %v1824 = vadd.f32 %v1802, %v1823
        %v1825 = vrot.slane %v1824, 2
        %v1826 = vadd.f32 %v1824, %v1825
        %v1827 = vrot.slane %v1826, 1
        %v1828 = vadd.f32 %v1826, %v1827
        %v1829 = vrot.slane %v1803, 4
        %v1830 = vadd.f32 %v1803, %v1829
        %v1831 = vrot.slane %v1830, 2
        %v1832 = vadd.f32 %v1830, %v1831
        %v1833 = vrot.slane %v1832, 1
        %v1834 = vadd.f32 %v1832, %v1833
        %v1835 = vrot.slane %v1804, 4
        %v1836 = vadd.f32 %v1804, %v1835
        %v1837 = vrot.slane %v1836, 2
        %v1838 = vadd.f32 %v1836, %v1837
        %v1839 = vrot.slane %v1838, 1
        %v1840 = vadd.f32 %v1838, %v1839
        %v1841 = vrot.slane %v1805, 4
        %v1842 = vadd.f32 %v1805, %v1841
        %v1843 = vrot.slane %v1842, 2
        %v1844 = vadd.f32 %v1842, %v1843
        %v1845 = vrot.slane %v1844, 1
        %v1846 = vadd.f32 %v1844, %v1845
        %v1847 = vrot.slane %v1806, 4
        %v1848 = vadd.f32 %v1806, %v1847
        %v1849 = vrot.slane %v1848, 2
        %v1850 = vadd.f32 %v1848, %v1849
        %v1851 = vrot.slane %v1850, 1
        %v1852 = vadd.f32 %v1850, %v1851
        %v1853 = vrot.slane %v1807, 4
        %v1854 = vadd.f32 %v1807, %v1853
        %v1855 = vrot.slane %v1854, 2
        %v1856 = vadd.f32 %v1854, %v1855
        %v1857 = vrot.slane %v1856, 1
        %v1858 = vadd.f32 %v1856, %v1857
        %v1859 = vrot.slane %v1808, 4
        %v1860 = vadd.f32 %v1808, %v1859
        %v1861 = vrot.slane %v1860, 2
        %v1862 = vadd.f32 %v1860, %v1861
        %v1863 = vrot.slane %v1862, 1
        %v1864 = vadd.f32 %v1862, %v1863
        %v1865 = vrot.slane %v1809, 4
        %v1866 = vadd.f32 %v1809, %v1865
        %v1867 = vrot.slane %v1866, 2
        %v1868 = vadd.f32 %v1866, %v1867
        %v1869 = vrot.slane %v1868, 1
        %v1870 = vadd.f32 %v1868, %v1869
        %v1871 = vrot.slane %v1810, 4
        %v1872 = vadd.f32 %v1810, %v1871
        %v1873 = vrot.slane %v1872, 2
        %v1874 = vadd.f32 %v1872, %v1873
        %v1875 = vrot.slane %v1874, 1
        %v1876 = vadd.f32 %v1874, %v1875
        %v1877 = vrot.slane %v1811, 4
        %v1878 = vadd.f32 %v1811, %v1877
        %v1879 = vrot.slane %v1878, 2
        %v1880 = vadd.f32 %v1878, %v1879
        %v1881 = vrot.slane %v1880, 1
        %v1882 = vadd.f32 %v1880, %v1881
        %v1883 = vrot.slane %v1812, 4
        %v1884 = vadd.f32 %v1812, %v1883
        %v1885 = vrot.slane %v1884, 2
        %v1886 = vadd.f32 %v1884, %v1885
        %v1887 = vrot.slane %v1886, 1
        %v1888 = vadd.f32 %v1886, %v1887
        %v1889 = vrot.slane %v1813, 4
        %v1890 = vadd.f32 %v1813, %v1889
        %v1891 = vrot.slane %v1890, 2
        %v1892 = vadd.f32 %v1890, %v1891
        %v1893 = vrot.slane %v1892, 1
        %v1894 = vadd.f32 %v1892, %v1893
        %v1895 = vrot.slane %v1814, 4
        %v1896 = vadd.f32 %v1814, %v1895
        %v1897 = vrot.slane %v1896, 2
        %v1898 = vadd.f32 %v1896, %v1897
        %v1899 = vrot.slane %v1898, 1
        %v1900 = vadd.f32 %v1898, %v1899
        %v1901 = vrot.slane %v1815, 4
        %v1902 = vadd.f32 %v1815, %v1901
        %v1903 = vrot.slane %v1902, 2
        %v1904 = vadd.f32 %v1902, %v1903
        %v1905 = vrot.slane %v1904, 1
        %v1906 = vadd.f32 %v1904, %v1905
        %v1907 = vrot.slane %v1816, 4
        %v1908 = vadd.f32 %v1816, %v1907
        %v1909 = vrot.slane %v1908, 2
        %v1910 = vadd.f32 %v1908, %v1909
        %v1911 = vrot.slane %v1910, 1
        %v1912 = vadd.f32 %v1910, %v1911
        %v1913 = vrot.slane %v495, 3
        %v1914 = vrot.slane %v496, 2
        %v1915 = vsel %vm798, %v1914, %v1913
        %v1916 = vrot.slane %v497, 1
        %v1917 = vsel %vm801, %v1916, %v1915
        %v1918 = vsel %vm804, %v498, %v1917
        %v1919 = vrot.slane %v499, 7
        %v1920 = vsel %vm807, %v1919, %v1918
        %v1921 = vrot.slane %v500, 6
        %v1922 = vsel %vm810, %v1921, %v1920
        %v1923 = vrot.slane %v501, 5
        %v1924 = vsel %vm813, %v1923, %v1922
        %v1925 = vrot.slane %v502, 4
        %v1926 = vsel %vm816, %v1925, %v1924
        %v1927 = vrot.slane %v503, 3
        %v1928 = vrot.slane %v504, 2
        %v1929 = vsel %vm798, %v1928, %v1927
        %v1930 = vrot.slane %v505, 1
        %v1931 = vsel %vm801, %v1930, %v1929
        %v1932 = vsel %vm804, %v506, %v1931
        %v1933 = vrot.slane %v507, 7
        %v1934 = vsel %vm807, %v1933, %v1932
        %v1935 = vrot.slane %v508, 6
        %v1936 = vsel %vm810, %v1935, %v1934
        %v1937 = vrot.slane %v509, 5
        %v1938 = vsel %vm813, %v1937, %v1936
        %v1939 = vrot.slane %v510, 4
        %v1940 = vsel %vm816, %v1939, %v1938
        %v1943 = vmul.f32 %v592, %v1926
        %v1944 = vmul.f32 %v593, %v1940
        %v1945 = vlaneseq
        %v1946 = vshrl.u32 %v1945, 7
        %v1947 = vsub.s32 2, %v1946
        %v1948 = vrot.slane %v774, %v1947
        %1949 = vmatprep.subr.mxu0 0.0
        %1950 = vmatpush1.msra.mxu0 %v674
        %1951 = vmatprep.subr.mxu0 0.0
        %1952 = vmatpush1.msra.mxu0 %v673
        %1953 = vmatprep.subr.mxu0 0.0
        %1954 = vmatpush1.msra.mxu0 %v672
        %1955 = vmatprep.subr.mxu0 0.0
        %1956 = vmatpush1.msra.mxu0 %v671
        %1957 = vmatprep.subr.mxu0 0.0
        %1958 = vmatpush1.msra.mxu0 %v670
        %1959 = vmatprep.subr.mxu0 0.0
        %1960 = vmatpush1.msra.mxu0 %v669
        %1961 = vmatprep.subr.mxu0 0.0
        %1962 = vmatpush1.msra.mxu0 %v668
        %1963 = vmatprep.subr.mxu0 0.0
        %1964 = vmatpush1.msra.mxu0 %v667
        %1965 = vmatprep.subr.mxu0 0.0
        %1966 = vmatpush1.msra.mxu0 %v666
        %1967 = vmatprep.subr.mxu0 0.0
        %1968 = vmatpush1.msra.mxu0 %v665
        %1969 = vmatprep.subr.mxu0 0.0
        %1970 = vmatpush1.msra.mxu0 %v664
        %1971 = vmatprep.subr.mxu0 0.0
        %1972 = vmatpush1.msra.mxu0 %v663
        %1973 = vmatprep.subr.mxu0 0.0
        %1974 = vmatpush1.msra.mxu0 %v662
        %1975 = vmatprep.subr.mxu0 0.0
        %1976 = vmatpush1.msra.mxu0 %v661
        %1977 = vmatprep.subr.mxu0 0.0
        %1978 = vmatpush1.msra.mxu0 %v660
        %1979 = vmatprep.subr.mxu0 0.0
        %1980 = vmatpush1.msra.mxu0 %v659
        %1981 = vmatprep.subr.mxu0 0.0
        %1982 = vmatpush2.msra.mxu0 0.0
        %1983 = vmatprep.subr.mxu0 0.0
        %1984 = vmatpush2.msra.mxu0 0.0
        %1985 = vmatprep.subr.mxu0 0.0
        %1986 = vmatpush2.msra.mxu0 0.0
        %1987 = vmatprep.subr.mxu0 0.0
        %1988 = vmatpush2.msra.mxu0 0.0
        %1989 = vmatprep.subr.mxu0 0.0
        %1990 = vmatpush2.msra.mxu0 0.0
        %1991 = vmatprep.subr.mxu0 0.0
        %1992 = vmatpush2.msra.mxu0 0.0
        %1993 = vmatprep.subr.mxu0 0.0
        %1994 = vmatpush2.msra.mxu0 0.0
        %1995 = vmatprep.subr.mxu0 0.0
        %1996 = vmatpush2.msra.mxu0 0.0
        %1997 = vmatprep.subr.mxu0 0.0
        %1998 = vmatpush2.msra.mxu0 0.0
        %1999 = vmatprep.subr.mxu0 0.0
        %2000 = vmatpush2.msra.mxu0 0.0
        %2001 = vmatprep.subr.mxu0 0.0
        %2002 = vmatpush2.msra.mxu0 0.0
        %2003 = vmatprep.subr.mxu0 0.0
        %2004 = vmatpush2.msra.mxu0 0.0
        %2005 = vmatprep.subr.mxu0 0.0
        %2006 = vmatpush2.msra.mxu0 0.0
        %2007 = vmatprep.subr.mxu0 0.0
        %2008 = vmatpush2.msra.mxu0 0.0
        %2009 = vmatprep.subr.mxu0 0.0
        %2010 = vmatpush2.msra.mxu0 0.0
        %2011 = vmatprep.subr.mxu0 0.0
        %2012 = vmatpush2.msra.mxu0 0.0
        %2013 = vmatprep.mubr.f32.mxu0 0.0
        %2014 = vmatmul.mubr.f32.gmra.mxu0 %v1943
        %v2015 = vpop.f32.mrf.mxu0
        %v2016 = vadd.f32 %v1948, %v2015
        %v2017 = vpop.f32.mrf.mxu0
        %2018 = vmatprep.mubr.f32.mxu0 0.0
        %2019 = vmatmul.mubr.f32.gmra.mxu0 %v1944
        %v2020 = vpop.f32.mrf.mxu0
        %v2021 = vadd.f32 %v1948, %v2020
        %v2022 = vpop.f32.mrf.mxu0
        %2023 = vdwg.mxu0
        %v2024 = vlaneseq
        %v2025 = vshrl.u32 %v2024, 7
        %v2026 = vsub.s32 3, %v2025
        %v2027 = vrot.slane %v774, %v2026
        %v2028 = vmul.f32 %v1822, %v2027
        %v2029 = vmul.f32 %v1828, %v2027
        %v2030 = vmul.f32 %v1834, %v2027
        %v2031 = vmul.f32 %v1840, %v2027
        %v2032 = vmul.f32 %v1846, %v2027
        %v2033 = vmul.f32 %v1852, %v2027
        %v2034 = vmul.f32 %v1858, %v2027
        %v2035 = vmul.f32 %v1864, %v2027
        %v2036 = vmul.f32 %v1870, %v2027
        %v2037 = vmul.f32 %v1876, %v2027
        %v2038 = vmul.f32 %v1882, %v2027
        %v2039 = vmul.f32 %v1888, %v2027
        %v2040 = vmul.f32 %v1894, %v2027
        %v2041 = vmul.f32 %v1900, %v2027
        %v2042 = vmul.f32 %v1906, %v2027
        %v2043 = vmul.f32 %v1912, %v2027
        %v2060 = vrot.slane %v2029, 7
        %v2061 = vsel %vm798, %v2060, %v2028
        %v2062 = vrot.slane %v2030, 6
        %v2063 = vsel %vm801, %v2062, %v2061
        %v2064 = vrot.slane %v2031, 5
        %v2065 = vsel %vm804, %v2064, %v2063
        %v2066 = vrot.slane %v2032, 4
        %v2067 = vsel %vm807, %v2066, %v2065
        %v2068 = vrot.slane %v2033, 3
        %v2069 = vsel %vm810, %v2068, %v2067
        %v2070 = vrot.slane %v2034, 2
        %v2071 = vsel %vm813, %v2070, %v2069
        %v2072 = vrot.slane %v2035, 1
        %v2073 = vsel %vm816, %v2072, %v2071
        %v2074 = vrot.slane %v2037, 7
        %v2075 = vsel %vm798, %v2074, %v2036
        %v2076 = vrot.slane %v2038, 6
        %v2077 = vsel %vm801, %v2076, %v2075
        %v2078 = vrot.slane %v2039, 5
        %v2079 = vsel %vm804, %v2078, %v2077
        %v2080 = vrot.slane %v2040, 4
        %v2081 = vsel %vm807, %v2080, %v2079
        %v2082 = vrot.slane %v2041, 3
        %v2083 = vsel %vm810, %v2082, %v2081
        %v2084 = vrot.slane %v2042, 2
        %v2085 = vsel %vm813, %v2084, %v2083
        %v2086 = vrot.slane %v2043, 1
        %v2087 = vsel %vm816, %v2086, %v2085
        %2090 = vmatprep.subr.mxu0 0.0
        %2091 = vmatpush1.msra.mxu0 %v691
        %2092 = vmatprep.subr.mxu0 0.0
        %2093 = vmatpush1.msra.mxu0 %v690
        %2094 = vmatprep.subr.mxu0 0.0
        %2095 = vmatpush1.msra.mxu0 %v689
        %2096 = vmatprep.subr.mxu0 0.0
        %2097 = vmatpush1.msra.mxu0 %v688
        %2098 = vmatprep.subr.mxu0 0.0
        %2099 = vmatpush1.msra.mxu0 %v687
        %2100 = vmatprep.subr.mxu0 0.0
        %2101 = vmatpush1.msra.mxu0 %v686
        %2102 = vmatprep.subr.mxu0 0.0
        %2103 = vmatpush1.msra.mxu0 %v685
        %2104 = vmatprep.subr.mxu0 0.0
        %2105 = vmatpush1.msra.mxu0 %v684
        %2106 = vmatprep.subr.mxu0 0.0
        %2107 = vmatpush1.msra.mxu0 %v683
        %2108 = vmatprep.subr.mxu0 0.0
        %2109 = vmatpush1.msra.mxu0 %v682
        %2110 = vmatprep.subr.mxu0 0.0
        %2111 = vmatpush1.msra.mxu0 %v681
        %2112 = vmatprep.subr.mxu0 0.0
        %2113 = vmatpush1.msra.mxu0 %v680
        %2114 = vmatprep.subr.mxu0 0.0
        %2115 = vmatpush1.msra.mxu0 %v679
        %2116 = vmatprep.subr.mxu0 0.0
        %2117 = vmatpush1.msra.mxu0 %v678
        %2118 = vmatprep.subr.mxu0 0.0
        %2119 = vmatpush1.msra.mxu0 %v677
        %2120 = vmatprep.subr.mxu0 0.0
        %2121 = vmatpush1.msra.mxu0 %v676
        %2122 = vmatprep.subr.mxu0 0.0
        %2123 = vmatpush2.msra.mxu0 0.0
        %2124 = vmatprep.subr.mxu0 0.0
        %2125 = vmatpush2.msra.mxu0 0.0
        %2126 = vmatprep.subr.mxu0 0.0
        %2127 = vmatpush2.msra.mxu0 0.0
        %2128 = vmatprep.subr.mxu0 0.0
        %2129 = vmatpush2.msra.mxu0 0.0
        %2130 = vmatprep.subr.mxu0 0.0
        %2131 = vmatpush2.msra.mxu0 0.0
        %2132 = vmatprep.subr.mxu0 0.0
        %2133 = vmatpush2.msra.mxu0 0.0
        %2134 = vmatprep.subr.mxu0 0.0
        %2135 = vmatpush2.msra.mxu0 0.0
        %2136 = vmatprep.subr.mxu0 0.0
        %2137 = vmatpush2.msra.mxu0 0.0
        %2138 = vmatprep.subr.mxu0 0.0
        %2139 = vmatpush2.msra.mxu0 0.0
        %2140 = vmatprep.subr.mxu0 0.0
        %2141 = vmatpush2.msra.mxu0 0.0
        %2142 = vmatprep.subr.mxu0 0.0
        %2143 = vmatpush2.msra.mxu0 0.0
        %2144 = vmatprep.subr.mxu0 0.0
        %2145 = vmatpush2.msra.mxu0 0.0
        %2146 = vmatprep.subr.mxu0 0.0
        %2147 = vmatpush2.msra.mxu0 0.0
        %2148 = vmatprep.subr.mxu0 0.0
        %2149 = vmatpush2.msra.mxu0 0.0
        %2150 = vmatprep.subr.mxu0 0.0
        %2151 = vmatpush2.msra.mxu0 0.0
        %2152 = vmatprep.subr.mxu0 0.0
        %2153 = vmatpush2.msra.mxu0 0.0
        %2154 = vmatprep.mubr.f32.mxu0 0.0
        %2155 = vmatmul.mubr.f32.gmra.mxu0 %v2073
        %v2156 = vpop.f32.mrf.mxu0
        %v2157 = vadd.f32 0.0, %v2156
        %v2158 = vpop.f32.mrf.mxu0
        %2159 = vmatprep.mubr.f32.mxu0 0.0
        %2160 = vmatmul.mubr.f32.gmra.mxu0 %v2087
        %v2161 = vpop.f32.mrf.mxu0
        %v2162 = vadd.f32 0.0, %v2161
        %v2163 = vpop.f32.mrf.mxu0
        %2164 = vdwg.mxu0
        %2165 = vmatprep.subr.mxu0 0.0
        %2166 = vmatpush1.msra.mxu0 %v708
        %2167 = vmatprep.subr.mxu0 0.0
        %2168 = vmatpush1.msra.mxu0 %v707
        %2169 = vmatprep.subr.mxu0 0.0
        %2170 = vmatpush1.msra.mxu0 %v706
        %2171 = vmatprep.subr.mxu0 0.0
        %2172 = vmatpush1.msra.mxu0 %v705
        %2173 = vmatprep.subr.mxu0 0.0
        %2174 = vmatpush1.msra.mxu0 %v704
        %2175 = vmatprep.subr.mxu0 0.0
        %2176 = vmatpush1.msra.mxu0 %v703
        %2177 = vmatprep.subr.mxu0 0.0
        %2178 = vmatpush1.msra.mxu0 %v702
        %2179 = vmatprep.subr.mxu0 0.0
        %2180 = vmatpush1.msra.mxu0 %v701
        %2181 = vmatprep.subr.mxu0 0.0
        %2182 = vmatpush1.msra.mxu0 %v700
        %2183 = vmatprep.subr.mxu0 0.0
        %2184 = vmatpush1.msra.mxu0 %v699
        %2185 = vmatprep.subr.mxu0 0.0
        %2186 = vmatpush1.msra.mxu0 %v698
        %2187 = vmatprep.subr.mxu0 0.0
        %2188 = vmatpush1.msra.mxu0 %v697
        %2189 = vmatprep.subr.mxu0 0.0
        %2190 = vmatpush1.msra.mxu0 %v696
        %2191 = vmatprep.subr.mxu0 0.0
        %2192 = vmatpush1.msra.mxu0 %v695
        %2193 = vmatprep.subr.mxu0 0.0
        %2194 = vmatpush1.msra.mxu0 %v694
        %2195 = vmatprep.subr.mxu0 0.0
        %2196 = vmatpush1.msra.mxu0 %v693
        %2197 = vmatprep.subr.mxu0 0.0
        %2198 = vmatpush2.msra.mxu0 0.0
        %2199 = vmatprep.subr.mxu0 0.0
        %2200 = vmatpush2.msra.mxu0 0.0
        %2201 = vmatprep.subr.mxu0 0.0
        %2202 = vmatpush2.msra.mxu0 0.0
        %2203 = vmatprep.subr.mxu0 0.0
        %2204 = vmatpush2.msra.mxu0 0.0
        %2205 = vmatprep.subr.mxu0 0.0
        %2206 = vmatpush2.msra.mxu0 0.0
        %2207 = vmatprep.subr.mxu0 0.0
        %2208 = vmatpush2.msra.mxu0 0.0
        %2209 = vmatprep.subr.mxu0 0.0
        %2210 = vmatpush2.msra.mxu0 0.0
        %2211 = vmatprep.subr.mxu0 0.0
        %2212 = vmatpush2.msra.mxu0 0.0
        %2213 = vmatprep.subr.mxu0 0.0
        %2214 = vmatpush2.msra.mxu0 0.0
        %2215 = vmatprep.subr.mxu0 0.0
        %2216 = vmatpush2.msra.mxu0 0.0
        %2217 = vmatprep.subr.mxu0 0.0
        %2218 = vmatpush2.msra.mxu0 0.0
        %2219 = vmatprep.subr.mxu0 0.0
        %2220 = vmatpush2.msra.mxu0 0.0
        %2221 = vmatprep.subr.mxu0 0.0
        %2222 = vmatpush2.msra.mxu0 0.0
        %2223 = vmatprep.subr.mxu0 0.0
        %2224 = vmatpush2.msra.mxu0 0.0
        %2225 = vmatprep.subr.mxu0 0.0
        %2226 = vmatpush2.msra.mxu0 0.0
        %2227 = vmatprep.subr.mxu0 0.0
        %2228 = vmatpush2.msra.mxu0 0.0
        %2229 = vmatprep.mubr.f32.mxu0 0.0
        %2230 = vmatmul.mubr.f32.gmra.mxu0 %v2073
        %v2231 = vpop.f32.mrf.mxu0
        %v2232 = vadd.f32 0.0, %v2231
        %v2233 = vpop.f32.mrf.mxu0
        %2234 = vmatprep.mubr.f32.mxu0 0.0
        %2235 = vmatmul.mubr.f32.gmra.mxu0 %v2087
        %v2236 = vpop.f32.mrf.mxu0
        %v2237 = vadd.f32 0.0, %v2236
        %v2238 = vpop.f32.mrf.mxu0
        %2239 = vdwg.mxu0
        %v2240 = vmul.f32 %v2016, %v2157
        %v2241 = vmul.f32 %v2021, %v2162
        %v2242 = vadd.f32 %v2240, %v2232
        %v2243 = vadd.f32 %v2241, %v2237
        %v2246 = vcombine.high %v2242, %v2242
        %v2248 = vunpack.c.l.s4 1966171168
        %v2249 = vunpack.c.0.s8 %v2248
        %v2250 = vlaneseq
        %v2251 = vshrl.u32 %v2250, 7
        %v2252 = vsub.s32 %v2249, %v2251
        %v2253 = vrot.slane %v2242, %v2252
        %v2255 = vunpack.c.l.s4 1966171168
        %v2256 = vunpack.c.0.s8 %v2255
        %v2257 = vlaneseq
        %v2258 = vshrl.u32 %v2257, 7
        %v2259 = vsub.s32 %v2256, %v2258
        %v2260 = vrot.slane %v2246, %v2259
        %v2261 = vcombine.high %v2253, %v2253
        %v2262 = vcombine.high %v2260, %v2260
        %v2264 = vunpack.c.l.s4 1966171168
        %v2265 = vunpack.c.0.s8 %v2264
        %v2266 = vlaneseq
        %v2267 = vshrl.u32 %v2266, 7
        %v2268 = vsub.s32 %v2265, %v2267
        %v2269 = vrot.slane %v2253, %v2268
        %v2271 = vunpack.c.l.s4 1966171168
        %v2272 = vunpack.c.0.s8 %v2271
        %v2273 = vlaneseq
        %v2274 = vshrl.u32 %v2273, 7
        %v2275 = vsub.s32 %v2272, %v2274
        %v2276 = vrot.slane %v2260, %v2275
        %v2278 = vunpack.c.l.s4 1966171168
        %v2279 = vunpack.c.0.s8 %v2278
        %v2280 = vlaneseq
        %v2281 = vshrl.u32 %v2280, 7
        %v2282 = vsub.s32 %v2279, %v2281
        %v2283 = vrot.slane %v2261, %v2282
        %v2285 = vunpack.c.l.s4 1966171168
        %v2286 = vunpack.c.0.s8 %v2285
        %v2287 = vlaneseq
        %v2288 = vshrl.u32 %v2287, 7
        %v2289 = vsub.s32 %v2286, %v2288
        %v2290 = vrot.slane %v2262, %v2289
        %v2291 = vcombine.high %v2269, %v2269
        %v2292 = vcombine.high %v2276, %v2276
        %v2293 = vcombine.high %v2283, %v2283
        %v2294 = vcombine.high %v2290, %v2290
        %v2295 = vcombine.high %v2243, %v2243
        %v2297 = vunpack.c.l.s4 1966171168
        %v2298 = vunpack.c.0.s8 %v2297
        %v2299 = vlaneseq
        %v2300 = vshrl.u32 %v2299, 7
        %v2301 = vsub.s32 %v2298, %v2300
        %v2302 = vrot.slane %v2243, %v2301
        %v2304 = vunpack.c.l.s4 1966171168
        %v2305 = vunpack.c.0.s8 %v2304
        %v2306 = vlaneseq
        %v2307 = vshrl.u32 %v2306, 7
        %v2308 = vsub.s32 %v2305, %v2307
        %v2309 = vrot.slane %v2295, %v2308
        %v2310 = vcombine.high %v2302, %v2302
        %v2311 = vcombine.high %v2309, %v2309
        %v2313 = vunpack.c.l.s4 1966171168
        %v2314 = vunpack.c.0.s8 %v2313
        %v2315 = vlaneseq
        %v2316 = vshrl.u32 %v2315, 7
        %v2317 = vsub.s32 %v2314, %v2316
        %v2318 = vrot.slane %v2302, %v2317
        %v2320 = vunpack.c.l.s4 1966171168
        %v2321 = vunpack.c.0.s8 %v2320
        %v2322 = vlaneseq
        %v2323 = vshrl.u32 %v2322, 7
        %v2324 = vsub.s32 %v2321, %v2323
        %v2325 = vrot.slane %v2309, %v2324
        %v2327 = vunpack.c.l.s4 1966171168
        %v2328 = vunpack.c.0.s8 %v2327
        %v2329 = vlaneseq
        %v2330 = vshrl.u32 %v2329, 7
        %v2331 = vsub.s32 %v2328, %v2330
        %v2332 = vrot.slane %v2310, %v2331
        %v2334 = vunpack.c.l.s4 1966171168
        %v2335 = vunpack.c.0.s8 %v2334
        %v2336 = vlaneseq
        %v2337 = vshrl.u32 %v2336, 7
        %v2338 = vsub.s32 %v2335, %v2337
        %v2339 = vrot.slane %v2311, %v2338
        %v2340 = vcombine.high %v2318, %v2318
        %v2341 = vcombine.high %v2325, %v2325
        %v2342 = vcombine.high %v2332, %v2332
        %v2343 = vcombine.high %v2339, %v2339
        %v2344 = vlaneseq
        %v2345 = vshrl.u32 %v2344, 7
        %v2346 = vsub.s32 0, %v2345
        %v2347 = vrot.slane %v2269, %v2346
        %v2348 = vlaneseq
        %v2349 = vshrl.u32 %v2348, 7
        %v2350 = vsub.s32 0, %v2349
        %v2351 = vrot.slane %v2283, %v2350
        %v2352 = vlaneseq
        %v2353 = vshrl.u32 %v2352, 7
        %v2354 = vsub.s32 0, %v2353
        %v2355 = vrot.slane %v2291, %v2354
        %v2356 = vlaneseq
        %v2357 = vshrl.u32 %v2356, 7
        %v2358 = vsub.s32 0, %v2357
        %v2359 = vrot.slane %v2293, %v2358
        %v2360 = vlaneseq
        %v2361 = vshrl.u32 %v2360, 7
        %v2362 = vsub.s32 0, %v2361
        %v2363 = vrot.slane %v2276, %v2362
        %v2364 = vlaneseq
        %v2365 = vshrl.u32 %v2364, 7
        %v2366 = vsub.s32 0, %v2365
        %v2367 = vrot.slane %v2290, %v2366
        %v2368 = vlaneseq
        %v2369 = vshrl.u32 %v2368, 7
        %v2370 = vsub.s32 0, %v2369
        %v2371 = vrot.slane %v2292, %v2370
        %v2372 = vlaneseq
        %v2373 = vshrl.u32 %v2372, 7
        %v2374 = vsub.s32 0, %v2373
        %v2375 = vrot.slane %v2294, %v2374
        %v2376 = vlaneseq
        %v2377 = vshrl.u32 %v2376, 7
        %v2378 = vsub.s32 0, %v2377
        %v2379 = vrot.slane %v2318, %v2378
        %v2380 = vlaneseq
        %v2381 = vshrl.u32 %v2380, 7
        %v2382 = vsub.s32 0, %v2381
        %v2383 = vrot.slane %v2332, %v2382
        %v2384 = vlaneseq
        %v2385 = vshrl.u32 %v2384, 7
        %v2386 = vsub.s32 0, %v2385
        %v2387 = vrot.slane %v2340, %v2386
        %v2388 = vlaneseq
        %v2389 = vshrl.u32 %v2388, 7
        %v2390 = vsub.s32 0, %v2389
        %v2391 = vrot.slane %v2342, %v2390
        %v2392 = vlaneseq
        %v2393 = vshrl.u32 %v2392, 7
        %v2394 = vsub.s32 0, %v2393
        %v2395 = vrot.slane %v2325, %v2394
        %v2396 = vlaneseq
        %v2397 = vshrl.u32 %v2396, 7
        %v2398 = vsub.s32 0, %v2397
        %v2399 = vrot.slane %v2339, %v2398
        %v2400 = vlaneseq
        %v2401 = vshrl.u32 %v2400, 7
        %v2402 = vsub.s32 0, %v2401
        %v2403 = vrot.slane %v2341, %v2402
        %v2404 = vlaneseq
        %v2405 = vshrl.u32 %v2404, 7
        %v2406 = vsub.s32 0, %v2405
        %v2407 = vrot.slane %v2343, %v2406
        %v2424 = vmul.f32 %v610, %v2347
        %v2425 = vmul.f32 %v611, %v2347
        %v2426 = vmul.f32 %v612, %v2351
        %v2427 = vmul.f32 %v613, %v2351
        %v2428 = vmul.f32 %v614, %v2355
        %v2429 = vmul.f32 %v615, %v2355
        %v2430 = vmul.f32 %v616, %v2359
        %v2431 = vmul.f32 %v617, %v2359
        %v2432 = vmul.f32 %v618, %v2363
        %v2433 = vmul.f32 %v619, %v2363
        %v2434 = vmul.f32 %v620, %v2367
        %v2435 = vmul.f32 %v621, %v2367
        %v2436 = vmul.f32 %v622, %v2371
        %v2437 = vmul.f32 %v623, %v2371
        %v2438 = vmul.f32 %v624, %v2375
        %v2439 = vmul.f32 %v625, %v2375
        %v2440 = vmul.f32 %v626, %v2379
        %v2441 = vmul.f32 %v627, %v2379
        %v2442 = vmul.f32 %v628, %v2383
        %v2443 = vmul.f32 %v629, %v2383
        %v2444 = vmul.f32 %v630, %v2387
        %v2445 = vmul.f32 %v631, %v2387
        %v2446 = vmul.f32 %v632, %v2391
        %v2447 = vmul.f32 %v633, %v2391
        %v2448 = vmul.f32 %v634, %v2395
        %v2449 = vmul.f32 %v635, %v2395
        %v2450 = vmul.f32 %v636, %v2399
        %v2451 = vmul.f32 %v637, %v2399
        %v2452 = vmul.f32 %v638, %v2403
        %v2453 = vmul.f32 %v639, %v2403
        %v2454 = vmul.f32 %v640, %v2407
        %v2455 = vmul.f32 %v641, %v2407
        %2456 = vadd.xlane.f32.xlu0 %v2424
        %v2457 = vpop.xlane.xlu0 %2456
        %2458 = vadd.xlane.f32.xlu0 %v2425
        %v2459 = vpop.xlane.xlu0 %2458
        %2460 = vadd.xlane.f32.xlu0 %v2426
        %v2461 = vpop.xlane.xlu0 %2460
        %2462 = vadd.xlane.f32.xlu0 %v2427
        %v2463 = vpop.xlane.xlu0 %2462
        %2464 = vadd.xlane.f32.xlu0 %v2428
        %v2465 = vpop.xlane.xlu0 %2464
        %2466 = vadd.xlane.f32.xlu0 %v2429
        %v2467 = vpop.xlane.xlu0 %2466
        %2468 = vadd.xlane.f32.xlu0 %v2430
        %v2469 = vpop.xlane.xlu0 %2468
        %2470 = vadd.xlane.f32.xlu0 %v2431
        %v2471 = vpop.xlane.xlu0 %2470
        %2472 = vadd.xlane.f32.xlu0 %v2432
        %v2473 = vpop.xlane.xlu0 %2472
        %2474 = vadd.xlane.f32.xlu0 %v2433
        %v2475 = vpop.xlane.xlu0 %2474
        %2476 = vadd.xlane.f32.xlu0 %v2434
        %v2477 = vpop.xlane.xlu0 %2476
        %2478 = vadd.xlane.f32.xlu0 %v2435
        %v2479 = vpop.xlane.xlu0 %2478
        %2480 = vadd.xlane.f32.xlu0 %v2436
        %v2481 = vpop.xlane.xlu0 %2480
        %2482 = vadd.xlane.f32.xlu0 %v2437
        %v2483 = vpop.xlane.xlu0 %2482
        %2484 = vadd.xlane.f32.xlu0 %v2438
        %v2485 = vpop.xlane.xlu0 %2484
        %2486 = vadd.xlane.f32.xlu0 %v2439
        %v2487 = vpop.xlane.xlu0 %2486
        %2488 = vadd.xlane.f32.xlu0 %v2440
        %v2489 = vpop.xlane.xlu0 %2488
        %2490 = vadd.xlane.f32.xlu0 %v2441
        %v2491 = vpop.xlane.xlu0 %2490
        %2492 = vadd.xlane.f32.xlu0 %v2442
        %v2493 = vpop.xlane.xlu0 %2492
        %2494 = vadd.xlane.f32.xlu0 %v2443
        %v2495 = vpop.xlane.xlu0 %2494
        %2496 = vadd.xlane.f32.xlu0 %v2444
        %v2497 = vpop.xlane.xlu0 %2496
        %2498 = vadd.xlane.f32.xlu0 %v2445
        %v2499 = vpop.xlane.xlu0 %2498
        %2500 = vadd.xlane.f32.xlu0 %v2446
        %v2501 = vpop.xlane.xlu0 %2500
        %2502 = vadd.xlane.f32.xlu0 %v2447
        %v2503 = vpop.xlane.xlu0 %2502
        %2504 = vadd.xlane.f32.xlu0 %v2448
        %v2505 = vpop.xlane.xlu0 %2504
        %2506 = vadd.xlane.f32.xlu0 %v2449
        %v2507 = vpop.xlane.xlu0 %2506
        %2508 = vadd.xlane.f32.xlu0 %v2450
        %v2509 = vpop.xlane.xlu0 %2508
        %2510 = vadd.xlane.f32.xlu0 %v2451
        %v2511 = vpop.xlane.xlu0 %2510
        %2512 = vadd.xlane.f32.xlu0 %v2452
        %v2513 = vpop.xlane.xlu0 %2512
        %2514 = vadd.xlane.f32.xlu0 %v2453
        %v2515 = vpop.xlane.xlu0 %2514
        %2516 = vadd.xlane.f32.xlu0 %v2454
        %v2517 = vpop.xlane.xlu0 %2516
        %2518 = vadd.xlane.f32.xlu0 %v2455
        %v2519 = vpop.xlane.xlu0 %2518
        %v2552 = vlaneseq
        %v2553 = vshrl.u32 %v2552, 7
        %v2554 = vsub.s32 %v1239, %v2553
        %v2555 = vrot.slane %v2457, %v2554
        %v2556 = vadd.s32 %v1239, 4294967288
        %v2557 = vlaneseq
        %v2558 = vshrl.u32 %v2557, 7
        %v2559 = vsub.s32 %v2556, %v2558
        %v2560 = vrot.slane %v2459, %v2559
        %vm2561 = vcmask 130112
        %v2562 = vsel %vm2561, %v2560, %v2555
        %v2563 = vlaneseq
        %v2564 = vshrl.u32 %v2563, 7
        %v2565 = vsub.s32 %v1239, %v2564
        %v2566 = vrot.slane %v2461, %v2565
        %v2567 = vlaneseq
        %v2568 = vshrl.u32 %v2567, 7
        %v2569 = vsub.s32 %v2556, %v2568
        %v2570 = vrot.slane %v2463, %v2569
        %v2571 = vsel %vm2561, %v2570, %v2566
        %v2572 = vlaneseq
        %v2573 = vshrl.u32 %v2572, 7
        %v2574 = vsub.s32 %v1239, %v2573
        %v2575 = vrot.slane %v2465, %v2574
        %v2576 = vlaneseq
        %v2577 = vshrl.u32 %v2576, 7
        %v2578 = vsub.s32 %v2556, %v2577
        %v2579 = vrot.slane %v2467, %v2578
        %v2580 = vsel %vm2561, %v2579, %v2575
        %v2581 = vlaneseq
        %v2582 = vshrl.u32 %v2581, 7
        %v2583 = vsub.s32 %v1239, %v2582
        %v2584 = vrot.slane %v2469, %v2583
        %v2585 = vlaneseq
        %v2586 = vshrl.u32 %v2585, 7
        %v2587 = vsub.s32 %v2556, %v2586
        %v2588 = vrot.slane %v2471, %v2587
        %v2589 = vsel %vm2561, %v2588, %v2584
        %v2590 = vlaneseq
        %v2591 = vshrl.u32 %v2590, 7
        %v2592 = vsub.s32 %v1239, %v2591
        %v2593 = vrot.slane %v2473, %v2592
        %v2594 = vlaneseq
        %v2595 = vshrl.u32 %v2594, 7
        %v2596 = vsub.s32 %v2556, %v2595
        %v2597 = vrot.slane %v2475, %v2596
        %v2598 = vsel %vm2561, %v2597, %v2593
        %v2599 = vlaneseq
        %v2600 = vshrl.u32 %v2599, 7
        %v2601 = vsub.s32 %v1239, %v2600
        %v2602 = vrot.slane %v2477, %v2601
        %v2603 = vlaneseq
        %v2604 = vshrl.u32 %v2603, 7
        %v2605 = vsub.s32 %v2556, %v2604
        %v2606 = vrot.slane %v2479, %v2605
        %v2607 = vsel %vm2561, %v2606, %v2602
        %v2608 = vlaneseq
        %v2609 = vshrl.u32 %v2608, 7
        %v2610 = vsub.s32 %v1239, %v2609
        %v2611 = vrot.slane %v2481, %v2610
        %v2612 = vlaneseq
        %v2613 = vshrl.u32 %v2612, 7
        %v2614 = vsub.s32 %v2556, %v2613
        %v2615 = vrot.slane %v2483, %v2614
        %v2616 = vsel %vm2561, %v2615, %v2611
        %v2617 = vlaneseq
        %v2618 = vshrl.u32 %v2617, 7
        %v2619 = vsub.s32 %v1239, %v2618
        %v2620 = vrot.slane %v2485, %v2619
        %v2621 = vlaneseq
        %v2622 = vshrl.u32 %v2621, 7
        %v2623 = vsub.s32 %v2556, %v2622
        %v2624 = vrot.slane %v2487, %v2623
        %v2625 = vsel %vm2561, %v2624, %v2620
        %v2626 = vlaneseq
        %v2627 = vshrl.u32 %v2626, 7
        %v2628 = vsub.s32 %v1239, %v2627
        %v2629 = vrot.slane %v2489, %v2628
        %v2630 = vlaneseq
        %v2631 = vshrl.u32 %v2630, 7
        %v2632 = vsub.s32 %v2556, %v2631
        %v2633 = vrot.slane %v2491, %v2632
        %v2634 = vsel %vm2561, %v2633, %v2629
        %v2635 = vlaneseq
        %v2636 = vshrl.u32 %v2635, 7
        %v2637 = vsub.s32 %v1239, %v2636
        %v2638 = vrot.slane %v2493, %v2637
        %v2639 = vlaneseq
        %v2640 = vshrl.u32 %v2639, 7
        %v2641 = vsub.s32 %v2556, %v2640
        %v2642 = vrot.slane %v2495, %v2641
        %v2643 = vsel %vm2561, %v2642, %v2638
        %v2644 = vlaneseq
        %v2645 = vshrl.u32 %v2644, 7
        %v2646 = vsub.s32 %v1239, %v2645
        %v2647 = vrot.slane %v2497, %v2646
        %v2648 = vlaneseq
        %v2649 = vshrl.u32 %v2648, 7
        %v2650 = vsub.s32 %v2556, %v2649
        %v2651 = vrot.slane %v2499, %v2650
        %v2652 = vsel %vm2561, %v2651, %v2647
        %v2653 = vlaneseq
        %v2654 = vshrl.u32 %v2653, 7
        %v2655 = vsub.s32 %v1239, %v2654
        %v2656 = vrot.slane %v2501, %v2655
        %v2657 = vlaneseq
        %v2658 = vshrl.u32 %v2657, 7
        %v2659 = vsub.s32 %v2556, %v2658
        %v2660 = vrot.slane %v2503, %v2659
        %v2661 = vsel %vm2561, %v2660, %v2656
        %v2662 = vlaneseq
        %v2663 = vshrl.u32 %v2662, 7
        %v2664 = vsub.s32 %v1239, %v2663
        %v2665 = vrot.slane %v2505, %v2664
        %v2666 = vlaneseq
        %v2667 = vshrl.u32 %v2666, 7
        %v2668 = vsub.s32 %v2556, %v2667
        %v2669 = vrot.slane %v2507, %v2668
        %v2670 = vsel %vm2561, %v2669, %v2665
        %v2671 = vlaneseq
        %v2672 = vshrl.u32 %v2671, 7
        %v2673 = vsub.s32 %v1239, %v2672
        %v2674 = vrot.slane %v2509, %v2673
        %v2675 = vlaneseq
        %v2676 = vshrl.u32 %v2675, 7
        %v2677 = vsub.s32 %v2556, %v2676
        %v2678 = vrot.slane %v2511, %v2677
        %v2679 = vsel %vm2561, %v2678, %v2674
        %v2680 = vlaneseq
        %v2681 = vshrl.u32 %v2680, 7
        %v2682 = vsub.s32 %v1239, %v2681
        %v2683 = vrot.slane %v2513, %v2682
        %v2684 = vlaneseq
        %v2685 = vshrl.u32 %v2684, 7
        %v2686 = vsub.s32 %v2556, %v2685
        %v2687 = vrot.slane %v2515, %v2686
        %v2688 = vsel %vm2561, %v2687, %v2683
        %v2689 = vlaneseq
        %v2690 = vshrl.u32 %v2689, 7
        %v2691 = vsub.s32 %v1239, %v2690
        %v2692 = vrot.slane %v2517, %v2691
        %v2693 = vlaneseq
        %v2694 = vshrl.u32 %v2693, 7
        %v2695 = vsub.s32 %v2556, %v2694
        %v2696 = vrot.slane %v2519, %v2695
        %v2697 = vsel %vm2561, %v2696, %v2692
        %v2698 = vsel %vm798, %v2571, %v2562
        %v2699 = vsel %vm801, %v2580, %v2698
        %v2700 = vsel %vm804, %v2589, %v2699
        %v2701 = vsel %vm807, %v2598, %v2700
        %v2702 = vsel %vm810, %v2607, %v2701
        %v2703 = vsel %vm813, %v2616, %v2702
        %v2704 = vsel %vm816, %v2625, %v2703
        %v2705 = vsel %vm798, %v2643, %v2634
        %v2706 = vsel %vm801, %v2652, %v2705
        %v2707 = vsel %vm804, %v2661, %v2706
        %v2708 = vsel %vm807, %v2670, %v2707
        %v2709 = vsel %vm810, %v2679, %v2708
        %v2710 = vsel %vm813, %v2688, %v2709
        %v2711 = vsel %vm816, %v2697, %v2710
        %vm2714 = vcmask 130048
        %v2715 = vsel %vm2714, %v2704, -inf
        %2716 = vmax.xlane.f32.xlu0 %v2715
        %v2717 = vpop.xlane.xlu0 %2716
        %v2718 = vsel %vm2714, %v2711, -inf
        %2719 = vmax.xlane.f32.xlu0 %v2718
        %v2720 = vpop.xlane.xlu0 %2719
        %v2723 = vlaneseq
        %v2724 = vshrl.u32 %v2723, 7
        %v2725 = vsub.s32 0, %v2724
        %v2726 = vrot.slane %v2717, %v2725
        %v2727 = vlaneseq
        %v2728 = vshrl.u32 %v2727, 7
        %v2729 = vsub.s32 1, %v2728
        %v2730 = vrot.slane %v2717, %v2729
        %v2731 = vlaneseq
        %v2732 = vshrl.u32 %v2731, 7
        %v2733 = vsub.s32 2, %v2732
        %v2734 = vrot.slane %v2717, %v2733
        %v2735 = vlaneseq
        %v2736 = vshrl.u32 %v2735, 7
        %v2737 = vsub.s32 3, %v2736
        %v2738 = vrot.slane %v2717, %v2737
        %v2739 = vlaneseq
        %v2740 = vshrl.u32 %v2739, 7
        %v2741 = vsub.s32 4, %v2740
        %v2742 = vrot.slane %v2717, %v2741
        %v2743 = vlaneseq
        %v2744 = vshrl.u32 %v2743, 7
        %v2745 = vsub.s32 5, %v2744
        %v2746 = vrot.slane %v2717, %v2745
        %v2747 = vlaneseq
        %v2748 = vshrl.u32 %v2747, 7
        %v2749 = vsub.s32 6, %v2748
        %v2750 = vrot.slane %v2717, %v2749
        %v2751 = vlaneseq
        %v2752 = vshrl.u32 %v2751, 7
        %v2753 = vsub.s32 7, %v2752
        %v2754 = vrot.slane %v2717, %v2753
        %v2755 = vlaneseq
        %v2756 = vshrl.u32 %v2755, 7
        %v2757 = vsub.s32 0, %v2756
        %v2758 = vrot.slane %v2720, %v2757
        %v2759 = vlaneseq
        %v2760 = vshrl.u32 %v2759, 7
        %v2761 = vsub.s32 1, %v2760
        %v2762 = vrot.slane %v2720, %v2761
        %v2763 = vlaneseq
        %v2764 = vshrl.u32 %v2763, 7
        %v2765 = vsub.s32 2, %v2764
        %v2766 = vrot.slane %v2720, %v2765
        %v2767 = vlaneseq
        %v2768 = vshrl.u32 %v2767, 7
        %v2769 = vsub.s32 3, %v2768
        %v2770 = vrot.slane %v2720, %v2769
        %v2771 = vlaneseq
        %v2772 = vshrl.u32 %v2771, 7
        %v2773 = vsub.s32 4, %v2772
        %v2774 = vrot.slane %v2720, %v2773
        %v2775 = vlaneseq
        %v2776 = vshrl.u32 %v2775, 7
        %v2777 = vsub.s32 5, %v2776
        %v2778 = vrot.slane %v2720, %v2777
        %v2779 = vlaneseq
        %v2780 = vshrl.u32 %v2779, 7
        %v2781 = vsub.s32 6, %v2780
        %v2782 = vrot.slane %v2720, %v2781
        %v2783 = vlaneseq
        %v2784 = vshrl.u32 %v2783, 7
        %v2785 = vsub.s32 7, %v2784
        %v2786 = vrot.slane %v2720, %v2785
        %v2803 = vsub.f32 %v2457, %v2726
        %v2804 = vsub.f32 %v2459, %v2726
        %v2805 = vsub.f32 %v2461, %v2730
        %v2806 = vsub.f32 %v2463, %v2730
        %v2807 = vsub.f32 %v2465, %v2734
        %v2808 = vsub.f32 %v2467, %v2734
        %v2809 = vsub.f32 %v2469, %v2738
        %v2810 = vsub.f32 %v2471, %v2738
        %v2811 = vsub.f32 %v2473, %v2742
        %v2812 = vsub.f32 %v2475, %v2742
        %v2813 = vsub.f32 %v2477, %v2746
        %v2814 = vsub.f32 %v2479, %v2746
        %v2815 = vsub.f32 %v2481, %v2750
        %v2816 = vsub.f32 %v2483, %v2750
        %v2817 = vsub.f32 %v2485, %v2754
        %v2818 = vsub.f32 %v2487, %v2754
        %v2819 = vsub.f32 %v2489, %v2758
        %v2820 = vsub.f32 %v2491, %v2758
        %v2821 = vsub.f32 %v2493, %v2762
        %v2822 = vsub.f32 %v2495, %v2762
        %v2823 = vsub.f32 %v2497, %v2766
        %v2824 = vsub.f32 %v2499, %v2766
        %v2825 = vsub.f32 %v2501, %v2770
        %v2826 = vsub.f32 %v2503, %v2770
        %v2827 = vsub.f32 %v2505, %v2774
        %v2828 = vsub.f32 %v2507, %v2774
        %v2829 = vsub.f32 %v2509, %v2778
        %v2830 = vsub.f32 %v2511, %v2778
        %v2831 = vsub.f32 %v2513, %v2782
        %v2832 = vsub.f32 %v2515, %v2782
        %v2833 = vsub.f32 %v2517, %v2786
        %v2834 = vsub.f32 %v2519, %v2786
        %v2835 = vmul.f32 %v2803, 1.442695
        %v2836 = vpow.pop %v2835
        %v2837 = vmul.f32 %v2804, 1.442695
        %v2838 = vpow.pop %v2837
        %v2839 = vmul.f32 %v2805, 1.442695
        %v2840 = vpow.pop %v2839
        %v2841 = vmul.f32 %v2806, 1.442695
        %v2842 = vpow.pop %v2841
        %v2843 = vmul.f32 %v2807, 1.442695
        %v2844 = vpow.pop %v2843
        %v2845 = vmul.f32 %v2808, 1.442695
        %v2846 = vpow.pop %v2845
        %v2847 = vmul.f32 %v2809, 1.442695
        %v2848 = vpow.pop %v2847
        %v2849 = vmul.f32 %v2810, 1.442695
        %v2850 = vpow.pop %v2849
        %v2851 = vmul.f32 %v2811, 1.442695
        %v2852 = vpow.pop %v2851
        %v2853 = vmul.f32 %v2812, 1.442695
        %v2854 = vpow.pop %v2853
        %v2855 = vmul.f32 %v2813, 1.442695
        %v2856 = vpow.pop %v2855
        %v2857 = vmul.f32 %v2814, 1.442695
        %v2858 = vpow.pop %v2857
        %v2859 = vmul.f32 %v2815, 1.442695
        %v2860 = vpow.pop %v2859
        %v2861 = vmul.f32 %v2816, 1.442695
        %v2862 = vpow.pop %v2861
        %v2863 = vmul.f32 %v2817, 1.442695
        %v2864 = vpow.pop %v2863
        %v2865 = vmul.f32 %v2818, 1.442695
        %v2866 = vpow.pop %v2865
        %v2867 = vmul.f32 %v2819, 1.442695
        %v2868 = vpow.pop %v2867
        %v2869 = vmul.f32 %v2820, 1.442695
        %v2870 = vpow.pop %v2869
        %v2871 = vmul.f32 %v2821, 1.442695
        %v2872 = vpow.pop %v2871
        %v2873 = vmul.f32 %v2822, 1.442695
        %v2874 = vpow.pop %v2873
        %v2875 = vmul.f32 %v2823, 1.442695
        %v2876 = vpow.pop %v2875
        %v2877 = vmul.f32 %v2824, 1.442695
        %v2878 = vpow.pop %v2877
        %v2879 = vmul.f32 %v2825, 1.442695
        %v2880 = vpow.pop %v2879
        %v2881 = vmul.f32 %v2826, 1.442695
        %v2882 = vpow.pop %v2881
        %v2883 = vmul.f32 %v2827, 1.442695
        %v2884 = vpow.pop %v2883
        %v2885 = vmul.f32 %v2828, 1.442695
        %v2886 = vpow.pop %v2885
        %v2887 = vmul.f32 %v2829, 1.442695
        %v2888 = vpow.pop %v2887
        %v2889 = vmul.f32 %v2830, 1.442695
        %v2890 = vpow.pop %v2889
        %v2891 = vmul.f32 %v2831, 1.442695
        %v2892 = vpow.pop %v2891
        %v2893 = vmul.f32 %v2832, 1.442695
        %v2894 = vpow.pop %v2893
        %v2895 = vmul.f32 %v2833, 1.442695
        %v2896 = vpow.pop %v2895
        %v2897 = vmul.f32 %v2834, 1.442695
        %v2898 = vpow.pop %v2897
        %2931 = vset.pattern.permute.xlu0 0
        %2932 = vperm.xlu0 %2931, %v2836
        %v2933 = vpop.permute.xlu0 %2932
        %2934 = vset.pattern.permute.xlu0 0
        %2935 = vperm.xlu0 %2934, %v2838
        %v2936 = vpop.permute.xlu0 %2935
        %2937 = vset.pattern.permute.xlu0 0
        %2938 = vperm.xlu0 %2937, %v2840
        %v2939 = vpop.permute.xlu0 %2938
        %2940 = vset.pattern.permute.xlu0 0
        %2941 = vperm.xlu0 %2940, %v2842
        %v2942 = vpop.permute.xlu0 %2941
        %2943 = vset.pattern.permute.xlu0 0
        %2944 = vperm.xlu0 %2943, %v2844
        %v2945 = vpop.permute.xlu0 %2944
        %2946 = vset.pattern.permute.xlu0 0
        %2947 = vperm.xlu0 %2946, %v2846
        %v2948 = vpop.permute.xlu0 %2947
        %2949 = vset.pattern.permute.xlu0 0
        %2950 = vperm.xlu0 %2949, %v2848
        %v2951 = vpop.permute.xlu0 %2950
        %2952 = vset.pattern.permute.xlu0 0
        %2953 = vperm.xlu0 %2952, %v2850
        %v2954 = vpop.permute.xlu0 %2953
        %2955 = vset.pattern.permute.xlu0 0
        %2956 = vperm.xlu0 %2955, %v2852
        %v2957 = vpop.permute.xlu0 %2956
        %2958 = vset.pattern.permute.xlu0 0
        %2959 = vperm.xlu0 %2958, %v2854
        %v2960 = vpop.permute.xlu0 %2959
        %2961 = vset.pattern.permute.xlu0 0
        %2962 = vperm.xlu0 %2961, %v2856
        %v2963 = vpop.permute.xlu0 %2962
        %2964 = vset.pattern.permute.xlu0 0
        %2965 = vperm.xlu0 %2964, %v2858
        %v2966 = vpop.permute.xlu0 %2965
        %2967 = vset.pattern.permute.xlu0 0
        %2968 = vperm.xlu0 %2967, %v2860
        %v2969 = vpop.permute.xlu0 %2968
        %2970 = vset.pattern.permute.xlu0 0
        %2971 = vperm.xlu0 %2970, %v2862
        %v2972 = vpop.permute.xlu0 %2971
        %2973 = vset.pattern.permute.xlu0 0
        %2974 = vperm.xlu0 %2973, %v2864
        %v2975 = vpop.permute.xlu0 %2974
        %2976 = vset.pattern.permute.xlu0 0
        %2977 = vperm.xlu0 %2976, %v2866
        %v2978 = vpop.permute.xlu0 %2977
        %2979 = vset.pattern.permute.xlu0 0
        %2980 = vperm.xlu0 %2979, %v2868
        %v2981 = vpop.permute.xlu0 %2980
        %2982 = vset.pattern.permute.xlu0 0
        %2983 = vperm.xlu0 %2982, %v2870
        %v2984 = vpop.permute.xlu0 %2983
        %2985 = vset.pattern.permute.xlu0 0
        %2986 = vperm.xlu0 %2985, %v2872
        %v2987 = vpop.permute.xlu0 %2986
        %2988 = vset.pattern.permute.xlu0 0
        %2989 = vperm.xlu0 %2988, %v2874
        %v2990 = vpop.permute.xlu0 %2989
        %2991 = vset.pattern.permute.xlu0 0
        %2992 = vperm.xlu0 %2991, %v2876
        %v2993 = vpop.permute.xlu0 %2992
        %2994 = vset.pattern.permute.xlu0 0
        %2995 = vperm.xlu0 %2994, %v2878
        %v2996 = vpop.permute.xlu0 %2995
        %2997 = vset.pattern.permute.xlu0 0
        %2998 = vperm.xlu0 %2997, %v2880
        %v2999 = vpop.permute.xlu0 %2998
        %3000 = vset.pattern.permute.xlu0 0
        %3001 = vperm.xlu0 %3000, %v2882
        %v3002 = vpop.permute.xlu0 %3001
        %3003 = vset.pattern.permute.xlu0 0
        %3004 = vperm.xlu0 %3003, %v2884
        %v3005 = vpop.permute.xlu0 %3004
        %3006 = vset.pattern.permute.xlu0 0
        %3007 = vperm.xlu0 %3006, %v2886
        %v3008 = vpop.permute.xlu0 %3007
        %3009 = vset.pattern.permute.xlu0 0
        %3010 = vperm.xlu0 %3009, %v2888
        %v3011 = vpop.permute.xlu0 %3010
        %3012 = vset.pattern.permute.xlu0 0
        %3013 = vperm.xlu0 %3012, %v2890
        %v3014 = vpop.permute.xlu0 %3013
        %3015 = vset.pattern.permute.xlu0 0
        %3016 = vperm.xlu0 %3015, %v2892
        %v3017 = vpop.permute.xlu0 %3016
        %3018 = vset.pattern.permute.xlu0 0
        %3019 = vperm.xlu0 %3018, %v2894
        %v3020 = vpop.permute.xlu0 %3019
        %3021 = vset.pattern.permute.xlu0 0
        %3022 = vperm.xlu0 %3021, %v2896
        %v3023 = vpop.permute.xlu0 %3022
        %3024 = vset.pattern.permute.xlu0 0
        %3025 = vperm.xlu0 %3024, %v2898
        %v3026 = vpop.permute.xlu0 %3025
        %v3027 = vlaneseq
        %v3028 = vshrl.u32 %v3027, 7
        %v3029 = vsub.s32 %v1239, %v3028
        %v3030 = vrot.slane %v2933, %v3029
        %v3031 = vlaneseq
        %v3032 = vshrl.u32 %v3031, 7
        %v3033 = vsub.s32 %v2556, %v3032
        %v3034 = vrot.slane %v2936, %v3033
        %v3035 = vsel %vm2561, %v3034, %v3030
        %v3036 = vlaneseq
        %v3037 = vshrl.u32 %v3036, 7
        %v3038 = vsub.s32 %v1239, %v3037
        %v3039 = vrot.slane %v2939, %v3038
        %v3040 = vlaneseq
        %v3041 = vshrl.u32 %v3040, 7
        %v3042 = vsub.s32 %v2556, %v3041
        %v3043 = vrot.slane %v2942, %v3042
        %v3044 = vsel %vm2561, %v3043, %v3039
        %v3045 = vlaneseq
        %v3046 = vshrl.u32 %v3045, 7
        %v3047 = vsub.s32 %v1239, %v3046
        %v3048 = vrot.slane %v2945, %v3047
        %v3049 = vlaneseq
        %v3050 = vshrl.u32 %v3049, 7
        %v3051 = vsub.s32 %v2556, %v3050
        %v3052 = vrot.slane %v2948, %v3051
        %v3053 = vsel %vm2561, %v3052, %v3048
        %v3054 = vlaneseq
        %v3055 = vshrl.u32 %v3054, 7
        %v3056 = vsub.s32 %v1239, %v3055
        %v3057 = vrot.slane %v2951, %v3056
        %v3058 = vlaneseq
        %v3059 = vshrl.u32 %v3058, 7
        %v3060 = vsub.s32 %v2556, %v3059
        %v3061 = vrot.slane %v2954, %v3060
        %v3062 = vsel %vm2561, %v3061, %v3057
        %v3063 = vlaneseq
        %v3064 = vshrl.u32 %v3063, 7
        %v3065 = vsub.s32 %v1239, %v3064
        %v3066 = vrot.slane %v2957, %v3065
        %v3067 = vlaneseq
        %v3068 = vshrl.u32 %v3067, 7
        %v3069 = vsub.s32 %v2556, %v3068
        %v3070 = vrot.slane %v2960, %v3069
        %v3071 = vsel %vm2561, %v3070, %v3066
        %v3072 = vlaneseq
        %v3073 = vshrl.u32 %v3072, 7
        %v3074 = vsub.s32 %v1239, %v3073
        %v3075 = vrot.slane %v2963, %v3074
        %v3076 = vlaneseq
        %v3077 = vshrl.u32 %v3076, 7
        %v3078 = vsub.s32 %v2556, %v3077
        %v3079 = vrot.slane %v2966, %v3078
        %v3080 = vsel %vm2561, %v3079, %v3075
        %v3081 = vlaneseq
        %v3082 = vshrl.u32 %v3081, 7
        %v3083 = vsub.s32 %v1239, %v3082
        %v3084 = vrot.slane %v2969, %v3083
        %v3085 = vlaneseq
        %v3086 = vshrl.u32 %v3085, 7
        %v3087 = vsub.s32 %v2556, %v3086
        %v3088 = vrot.slane %v2972, %v3087
        %v3089 = vsel %vm2561, %v3088, %v3084
        %v3090 = vlaneseq
        %v3091 = vshrl.u32 %v3090, 7
        %v3092 = vsub.s32 %v1239, %v3091
        %v3093 = vrot.slane %v2975, %v3092
        %v3094 = vlaneseq
        %v3095 = vshrl.u32 %v3094, 7
        %v3096 = vsub.s32 %v2556, %v3095
        %v3097 = vrot.slane %v2978, %v3096
        %v3098 = vsel %vm2561, %v3097, %v3093
        %v3099 = vlaneseq
        %v3100 = vshrl.u32 %v3099, 7
        %v3101 = vsub.s32 %v1239, %v3100
        %v3102 = vrot.slane %v2981, %v3101
        %v3103 = vlaneseq
        %v3104 = vshrl.u32 %v3103, 7
        %v3105 = vsub.s32 %v2556, %v3104
        %v3106 = vrot.slane %v2984, %v3105
        %v3107 = vsel %vm2561, %v3106, %v3102
        %v3108 = vlaneseq
        %v3109 = vshrl.u32 %v3108, 7
        %v3110 = vsub.s32 %v1239, %v3109
        %v3111 = vrot.slane %v2987, %v3110
        %v3112 = vlaneseq
        %v3113 = vshrl.u32 %v3112, 7
        %v3114 = vsub.s32 %v2556, %v3113
        %v3115 = vrot.slane %v2990, %v3114
        %v3116 = vsel %vm2561, %v3115, %v3111
        %v3117 = vlaneseq
        %v3118 = vshrl.u32 %v3117, 7
        %v3119 = vsub.s32 %v1239, %v3118
        %v3120 = vrot.slane %v2993, %v3119
        %v3121 = vlaneseq
        %v3122 = vshrl.u32 %v3121, 7
        %v3123 = vsub.s32 %v2556, %v3122
        %v3124 = vrot.slane %v2996, %v3123
        %v3125 = vsel %vm2561, %v3124, %v3120
        %v3126 = vlaneseq
        %v3127 = vshrl.u32 %v3126, 7
        %v3128 = vsub.s32 %v1239, %v3127
        %v3129 = vrot.slane %v2999, %v3128
        %v3130 = vlaneseq
        %v3131 = vshrl.u32 %v3130, 7
        %v3132 = vsub.s32 %v2556, %v3131
        %v3133 = vrot.slane %v3002, %v3132
        %v3134 = vsel %vm2561, %v3133, %v3129
        %v3135 = vlaneseq
        %v3136 = vshrl.u32 %v3135, 7
        %v3137 = vsub.s32 %v1239, %v3136
        %v3138 = vrot.slane %v3005, %v3137
        %v3139 = vlaneseq
        %v3140 = vshrl.u32 %v3139, 7
        %v3141 = vsub.s32 %v2556, %v3140
        %v3142 = vrot.slane %v3008, %v3141
        %v3143 = vsel %vm2561, %v3142, %v3138
        %v3144 = vlaneseq
        %v3145 = vshrl.u32 %v3144, 7
        %v3146 = vsub.s32 %v1239, %v3145
        %v3147 = vrot.slane %v3011, %v3146
        %v3148 = vlaneseq
        %v3149 = vshrl.u32 %v3148, 7
        %v3150 = vsub.s32 %v2556, %v3149
        %v3151 = vrot.slane %v3014, %v3150
        %v3152 = vsel %vm2561, %v3151, %v3147
        %v3153 = vlaneseq
        %v3154 = vshrl.u32 %v3153, 7
        %v3155 = vsub.s32 %v1239, %v3154
        %v3156 = vrot.slane %v3017, %v3155
        %v3157 = vlaneseq
        %v3158 = vshrl.u32 %v3157, 7
        %v3159 = vsub.s32 %v2556, %v3158
        %v3160 = vrot.slane %v3020, %v3159
        %v3161 = vsel %vm2561, %v3160, %v3156
        %v3162 = vlaneseq
        %v3163 = vshrl.u32 %v3162, 7
        %v3164 = vsub.s32 %v1239, %v3163
        %v3165 = vrot.slane %v3023, %v3164
        %v3166 = vlaneseq
        %v3167 = vshrl.u32 %v3166, 7
        %v3168 = vsub.s32 %v2556, %v3167
        %v3169 = vrot.slane %v3026, %v3168
        %v3170 = vsel %vm2561, %v3169, %v3165
        %v3171 = vsel %vm798, %v3044, %v3035
        %v3172 = vsel %vm801, %v3053, %v3171
        %v3173 = vsel %vm804, %v3062, %v3172
        %v3174 = vsel %vm807, %v3071, %v3173
        %v3175 = vsel %vm810, %v3080, %v3174
        %v3176 = vsel %vm813, %v3089, %v3175
        %v3177 = vsel %vm816, %v3098, %v3176
        %v3178 = vsel %vm798, %v3116, %v3107
        %v3179 = vsel %vm801, %v3125, %v3178
        %v3180 = vsel %vm804, %v3134, %v3179
        %v3181 = vsel %vm807, %v3143, %v3180
        %v3182 = vsel %vm810, %v3152, %v3181
        %v3183 = vsel %vm813, %v3161, %v3182
        %v3184 = vsel %vm816, %v3170, %v3183
        %v3187 = vsel %vm2714, %v3177, 0.0
        %3188 = vadd.xlane.f32.xlu0 %v3187
        %v3189 = vpop.xlane.xlu0 %3188
        %v3190 = vsel %vm2714, %v3184, 0.0
        %3191 = vadd.xlane.f32.xlu0 %v3190
        %v3192 = vpop.xlane.xlu0 %3191
        %v3195 = vlaneseq
        %v3196 = vshrl.u32 %v3195, 7
        %v3197 = vsub.s32 0, %v3196
        %v3198 = vrot.slane %v3189, %v3197
        %v3199 = vlaneseq
        %v3200 = vshrl.u32 %v3199, 7
        %v3201 = vsub.s32 1, %v3200
        %v3202 = vrot.slane %v3189, %v3201
        %v3203 = vlaneseq
        %v3204 = vshrl.u32 %v3203, 7
        %v3205 = vsub.s32 2, %v3204
        %v3206 = vrot.slane %v3189, %v3205
        %v3207 = vlaneseq
        %v3208 = vshrl.u32 %v3207, 7
        %v3209 = vsub.s32 3, %v3208
        %v3210 = vrot.slane %v3189, %v3209
        %v3211 = vlaneseq
        %v3212 = vshrl.u32 %v3211, 7
        %v3213 = vsub.s32 4, %v3212
        %v3214 = vrot.slane %v3189, %v3213
        %v3215 = vlaneseq
        %v3216 = vshrl.u32 %v3215, 7
        %v3217 = vsub.s32 5, %v3216
        %v3218 = vrot.slane %v3189, %v3217
        %v3219 = vlaneseq
        %v3220 = vshrl.u32 %v3219, 7
        %v3221 = vsub.s32 6, %v3220
        %v3222 = vrot.slane %v3189, %v3221
        %v3223 = vlaneseq
        %v3224 = vshrl.u32 %v3223, 7
        %v3225 = vsub.s32 7, %v3224
        %v3226 = vrot.slane %v3189, %v3225
        %v3227 = vlaneseq
        %v3228 = vshrl.u32 %v3227, 7
        %v3229 = vsub.s32 0, %v3228
        %v3230 = vrot.slane %v3192, %v3229
        %v3231 = vlaneseq
        %v3232 = vshrl.u32 %v3231, 7
        %v3233 = vsub.s32 1, %v3232
        %v3234 = vrot.slane %v3192, %v3233
        %v3235 = vlaneseq
        %v3236 = vshrl.u32 %v3235, 7
        %v3237 = vsub.s32 2, %v3236
        %v3238 = vrot.slane %v3192, %v3237
        %v3239 = vlaneseq
        %v3240 = vshrl.u32 %v3239, 7
        %v3241 = vsub.s32 3, %v3240
        %v3242 = vrot.slane %v3192, %v3241
        %v3243 = vlaneseq
        %v3244 = vshrl.u32 %v3243, 7
        %v3245 = vsub.s32 4, %v3244
        %v3246 = vrot.slane %v3192, %v3245
        %v3247 = vlaneseq
        %v3248 = vshrl.u32 %v3247, 7
        %v3249 = vsub.s32 5, %v3248
        %v3250 = vrot.slane %v3192, %v3249
        %v3251 = vlaneseq
        %v3252 = vshrl.u32 %v3251, 7
        %v3253 = vsub.s32 6, %v3252
        %v3254 = vrot.slane %v3192, %v3253
        %v3255 = vlaneseq
        %v3256 = vshrl.u32 %v3255, 7
        %v3257 = vsub.s32 7, %v3256
        %v3258 = vrot.slane %v3192, %v3257
        %v3275 = vrcp.pop %v3198
        %v3276 = vmul.f32 %v2836, %v3275
        %v3277 = vmul.f32 %v2838, %v3275
        %v3278 = vrcp.pop %v3202
        %v3279 = vmul.f32 %v2840, %v3278
        %v3280 = vmul.f32 %v2842, %v3278
        %v3281 = vrcp.pop %v3206
        %v3282 = vmul.f32 %v2844, %v3281
        %v3283 = vmul.f32 %v2846, %v3281
        %v3284 = vrcp.pop %v3210
        %v3285 = vmul.f32 %v2848, %v3284
        %v3286 = vmul.f32 %v2850, %v3284
        %v3287 = vrcp.pop %v3214
        %v3288 = vmul.f32 %v2852, %v3287
        %v3289 = vmul.f32 %v2854, %v3287
        %v3290 = vrcp.pop %v3218
        %v3291 = vmul.f32 %v2856, %v3290
        %v3292 = vmul.f32 %v2858, %v3290
        %v3293 = vrcp.pop %v3222
        %v3294 = vmul.f32 %v2860, %v3293
        %v3295 = vmul.f32 %v2862, %v3293
        %v3296 = vrcp.pop %v3226
        %v3297 = vmul.f32 %v2864, %v3296
        %v3298 = vmul.f32 %v2866, %v3296
        %v3299 = vrcp.pop %v3230
        %v3300 = vmul.f32 %v2868, %v3299
        %v3301 = vmul.f32 %v2870, %v3299
        %v3302 = vrcp.pop %v3234
        %v3303 = vmul.f32 %v2872, %v3302
        %v3304 = vmul.f32 %v2874, %v3302
        %v3305 = vrcp.pop %v3238
        %v3306 = vmul.f32 %v2876, %v3305
        %v3307 = vmul.f32 %v2878, %v3305
        %v3308 = vrcp.pop %v3242
        %v3309 = vmul.f32 %v2880, %v3308
        %v3310 = vmul.f32 %v2882, %v3308
        %v3311 = vrcp.pop %v3246
        %v3312 = vmul.f32 %v2884, %v3311
        %v3313 = vmul.f32 %v2886, %v3311
        %v3314 = vrcp.pop %v3250
        %v3315 = vmul.f32 %v2888, %v3314
        %v3316 = vmul.f32 %v2890, %v3314
        %v3317 = vrcp.pop %v3254
        %v3318 = vmul.f32 %v2892, %v3317
        %v3319 = vmul.f32 %v2894, %v3317
        %v3320 = vrcp.pop %v3258
        %v3321 = vmul.f32 %v2896, %v3320
        %v3322 = vmul.f32 %v2898, %v3320
        %3324 = vset.pattern.permute.xlu0 0
        %3325 = vperm.xlu0 %3324, %v3276
        %v3326 = vpop.permute.xlu0 %3325
        %3329 = vset.pattern.permute.xlu0 0
        %3330 = vperm.xlu0 %3329, %v3277
        %v3331 = vpop.permute.xlu0 %3330
        %3334 = vset.pattern.permute.xlu0 0
        %3335 = vperm.xlu0 %3334, %v3279
        %v3336 = vpop.permute.xlu0 %3335
        %3339 = vset.pattern.permute.xlu0 0
        %3340 = vperm.xlu0 %3339, %v3280
        %v3341 = vpop.permute.xlu0 %3340
        %3344 = vset.pattern.permute.xlu0 0
        %3345 = vperm.xlu0 %3344, %v3282
        %v3346 = vpop.permute.xlu0 %3345
        %3349 = vset.pattern.permute.xlu0 0
        %3350 = vperm.xlu0 %3349, %v3283
        %v3351 = vpop.permute.xlu0 %3350
        %3354 = vset.pattern.permute.xlu0 0
        %3355 = vperm.xlu0 %3354, %v3285
        %v3356 = vpop.permute.xlu0 %3355
        %3359 = vset.pattern.permute.xlu0 0
        %3360 = vperm.xlu0 %3359, %v3286
        %v3361 = vpop.permute.xlu0 %3360
        %3364 = vset.pattern.permute.xlu0 0
        %3365 = vperm.xlu0 %3364, %v3288
        %v3366 = vpop.permute.xlu0 %3365
        %3369 = vset.pattern.permute.xlu0 0
        %3370 = vperm.xlu0 %3369, %v3289
        %v3371 = vpop.permute.xlu0 %3370
        %3374 = vset.pattern.permute.xlu0 0
        %3375 = vperm.xlu0 %3374, %v3291
        %v3376 = vpop.permute.xlu0 %3375
        %3379 = vset.pattern.permute.xlu0 0
        %3380 = vperm.xlu0 %3379, %v3292
        %v3381 = vpop.permute.xlu0 %3380
        %3384 = vset.pattern.permute.xlu0 0
        %3385 = vperm.xlu0 %3384, %v3294
        %v3386 = vpop.permute.xlu0 %3385
        %3389 = vset.pattern.permute.xlu0 0
        %3390 = vperm.xlu0 %3389, %v3295
        %v3391 = vpop.permute.xlu0 %3390
        %3394 = vset.pattern.permute.xlu0 0
        %3395 = vperm.xlu0 %3394, %v3297
        %v3396 = vpop.permute.xlu0 %3395
        %3399 = vset.pattern.permute.xlu0 0
        %3400 = vperm.xlu0 %3399, %v3298
        %v3401 = vpop.permute.xlu0 %3400
        %3404 = vset.pattern.permute.xlu0 0
        %3405 = vperm.xlu0 %3404, %v3300
        %v3406 = vpop.permute.xlu0 %3405
        %3409 = vset.pattern.permute.xlu0 0
        %3410 = vperm.xlu0 %3409, %v3301
        %v3411 = vpop.permute.xlu0 %3410
        %3414 = vset.pattern.permute.xlu0 0
        %3415 = vperm.xlu0 %3414, %v3303
        %v3416 = vpop.permute.xlu0 %3415
        %3419 = vset.pattern.permute.xlu0 0
        %3420 = vperm.xlu0 %3419, %v3304
        %v3421 = vpop.permute.xlu0 %3420
        %3424 = vset.pattern.permute.xlu0 0
        %3425 = vperm.xlu0 %3424, %v3306
        %v3426 = vpop.permute.xlu0 %3425
        %3429 = vset.pattern.permute.xlu0 0
        %3430 = vperm.xlu0 %3429, %v3307
        %v3431 = vpop.permute.xlu0 %3430
        %3434 = vset.pattern.permute.xlu0 0
        %3435 = vperm.xlu0 %3434, %v3309
        %v3436 = vpop.permute.xlu0 %3435
        %3439 = vset.pattern.permute.xlu0 0
        %3440 = vperm.xlu0 %3439, %v3310
        %v3441 = vpop.permute.xlu0 %3440
        %3444 = vset.pattern.permute.xlu0 0
        %3445 = vperm.xlu0 %3444, %v3312
        %v3446 = vpop.permute.xlu0 %3445
        %3449 = vset.pattern.permute.xlu0 0
        %3450 = vperm.xlu0 %3449, %v3313
        %v3451 = vpop.permute.xlu0 %3450
        %3454 = vset.pattern.permute.xlu0 0
        %3455 = vperm.xlu0 %3454, %v3315
        %v3456 = vpop.permute.xlu0 %3455
        %3459 = vset.pattern.permute.xlu0 0
        %3460 = vperm.xlu0 %3459, %v3316
        %v3461 = vpop.permute.xlu0 %3460
        %3464 = vset.pattern.permute.xlu0 0
        %3465 = vperm.xlu0 %3464, %v3318
        %v3466 = vpop.permute.xlu0 %3465
        %3469 = vset.pattern.permute.xlu0 0
        %3470 = vperm.xlu0 %3469, %v3319
        %v3471 = vpop.permute.xlu0 %3470
        %3474 = vset.pattern.permute.xlu0 0
        %3475 = vperm.xlu0 %3474, %v3321
        %v3476 = vpop.permute.xlu0 %3475
        %3479 = vset.pattern.permute.xlu0 0
        %3480 = vperm.xlu0 %3479, %v3322
        %v3481 = vpop.permute.xlu0 %3480
        %v3483 = vmul.f32 %v3326, %v610
        %v3484 = vmul.f32 %v3331, %v611
        %v3485 = vmul.f32 %v3336, %v612
        %v3486 = vmul.f32 %v3341, %v613
        %v3487 = vmul.f32 %v3346, %v614
        %v3488 = vmul.f32 %v3351, %v615
        %v3489 = vmul.f32 %v3356, %v616
        %v3490 = vmul.f32 %v3361, %v617
        %v3491 = vmul.f32 %v3366, %v618
        %v3492 = vmul.f32 %v3371, %v619
        %v3493 = vmul.f32 %v3376, %v620
        %v3494 = vmul.f32 %v3381, %v621
        %v3495 = vmul.f32 %v3386, %v622
        %v3496 = vmul.f32 %v3391, %v623
        %v3497 = vmul.f32 %v3396, %v624
        %v3498 = vmul.f32 %v3401, %v625
        %v3499 = vmul.f32 %v3406, %v626
        %v3500 = vmul.f32 %v3411, %v627
        %v3501 = vmul.f32 %v3416, %v628
        %v3502 = vmul.f32 %v3421, %v629
        %v3503 = vmul.f32 %v3426, %v630
        %v3504 = vmul.f32 %v3431, %v631
        %v3505 = vmul.f32 %v3436, %v632
        %v3506 = vmul.f32 %v3441, %v633
        %v3507 = vmul.f32 %v3446, %v634
        %v3508 = vmul.f32 %v3451, %v635
        %v3509 = vmul.f32 %v3456, %v636
        %v3510 = vmul.f32 %v3461, %v637
        %v3511 = vmul.f32 %v3466, %v638
        %v3512 = vmul.f32 %v3471, %v639
        %v3513 = vmul.f32 %v3476, %v640
        %v3514 = vmul.f32 %v3481, %v641
        %v3515 = vadd.f32 %v3483, %v3484
        %v3516 = vrot.slane %v3515, 4
        %v3517 = vadd.f32 %v3515, %v3516
        %v3518 = vrot.slane %v3517, 2
        %v3519 = vadd.f32 %v3517, %v3518
        %v3520 = vrot.slane %v3519, 1
        %v3521 = vadd.f32 %v3519, %v3520
        %v3522 = vadd.f32 %v3485, %v3486
        %v3523 = vrot.slane %v3522, 4
        %v3524 = vadd.f32 %v3522, %v3523
        %v3525 = vrot.slane %v3524, 2
        %v3526 = vadd.f32 %v3524, %v3525
        %v3527 = vrot.slane %v3526, 1
        %v3528 = vadd.f32 %v3526, %v3527
        %v3529 = vadd.f32 %v3487, %v3488
        %v3530 = vrot.slane %v3529, 4
        %v3531 = vadd.f32 %v3529, %v3530
        %v3532 = vrot.slane %v3531, 2
        %v3533 = vadd.f32 %v3531, %v3532
        %v3534 = vrot.slane %v3533, 1
        %v3535 = vadd.f32 %v3533, %v3534
        %v3536 = vadd.f32 %v3489, %v3490
        %v3537 = vrot.slane %v3536, 4
        %v3538 = vadd.f32 %v3536, %v3537
        %v3539 = vrot.slane %v3538, 2
        %v3540 = vadd.f32 %v3538, %v3539
        %v3541 = vrot.slane %v3540, 1
        %v3542 = vadd.f32 %v3540, %v3541
        %v3543 = vadd.f32 %v3491, %v3492
        %v3544 = vrot.slane %v3543, 4
        %v3545 = vadd.f32 %v3543, %v3544
        %v3546 = vrot.slane %v3545, 2
        %v3547 = vadd.f32 %v3545, %v3546
        %v3548 = vrot.slane %v3547, 1
        %v3549 = vadd.f32 %v3547, %v3548
        %v3550 = vadd.f32 %v3493, %v3494
        %v3551 = vrot.slane %v3550, 4
        %v3552 = vadd.f32 %v3550, %v3551
        %v3553 = vrot.slane %v3552, 2
        %v3554 = vadd.f32 %v3552, %v3553
        %v3555 = vrot.slane %v3554, 1
        %v3556 = vadd.f32 %v3554, %v3555
        %v3557 = vadd.f32 %v3495, %v3496
        %v3558 = vrot.slane %v3557, 4
        %v3559 = vadd.f32 %v3557, %v3558
        %v3560 = vrot.slane %v3559, 2
        %v3561 = vadd.f32 %v3559, %v3560
        %v3562 = vrot.slane %v3561, 1
        %v3563 = vadd.f32 %v3561, %v3562
        %v3564 = vadd.f32 %v3497, %v3498
        %v3565 = vrot.slane %v3564, 4
        %v3566 = vadd.f32 %v3564, %v3565
        %v3567 = vrot.slane %v3566, 2
        %v3568 = vadd.f32 %v3566, %v3567
        %v3569 = vrot.slane %v3568, 1
        %v3570 = vadd.f32 %v3568, %v3569
        %v3571 = vadd.f32 %v3499, %v3500
        %v3572 = vrot.slane %v3571, 4
        %v3573 = vadd.f32 %v3571, %v3572
        %v3574 = vrot.slane %v3573, 2
        %v3575 = vadd.f32 %v3573, %v3574
        %v3576 = vrot.slane %v3575, 1
        %v3577 = vadd.f32 %v3575, %v3576
        %v3578 = vadd.f32 %v3501, %v3502
        %v3579 = vrot.slane %v3578, 4
        %v3580 = vadd.f32 %v3578, %v3579
        %v3581 = vrot.slane %v3580, 2
        %v3582 = vadd.f32 %v3580, %v3581
        %v3583 = vrot.slane %v3582, 1
        %v3584 = vadd.f32 %v3582, %v3583
        %v3585 = vadd.f32 %v3503, %v3504
        %v3586 = vrot.slane %v3585, 4
        %v3587 = vadd.f32 %v3585, %v3586
        %v3588 = vrot.slane %v3587, 2
        %v3589 = vadd.f32 %v3587, %v3588
        %v3590 = vrot.slane %v3589, 1
        %v3591 = vadd.f32 %v3589, %v3590
        %v3592 = vadd.f32 %v3505, %v3506
        %v3593 = vrot.slane %v3592, 4
        %v3594 = vadd.f32 %v3592, %v3593
        %v3595 = vrot.slane %v3594, 2
        %v3596 = vadd.f32 %v3594, %v3595
        %v3597 = vrot.slane %v3596, 1
        %v3598 = vadd.f32 %v3596, %v3597
        %v3599 = vadd.f32 %v3507, %v3508
        %v3600 = vrot.slane %v3599, 4
        %v3601 = vadd.f32 %v3599, %v3600
        %v3602 = vrot.slane %v3601, 2
        %v3603 = vadd.f32 %v3601, %v3602
        %v3604 = vrot.slane %v3603, 1
        %v3605 = vadd.f32 %v3603, %v3604
        %v3606 = vadd.f32 %v3509, %v3510
        %v3607 = vrot.slane %v3606, 4
        %v3608 = vadd.f32 %v3606, %v3607
        %v3609 = vrot.slane %v3608, 2
        %v3610 = vadd.f32 %v3608, %v3609
        %v3611 = vrot.slane %v3610, 1
        %v3612 = vadd.f32 %v3610, %v3611
        %v3613 = vadd.f32 %v3511, %v3512
        %v3614 = vrot.slane %v3613, 4
        %v3615 = vadd.f32 %v3613, %v3614
        %v3616 = vrot.slane %v3615, 2
        %v3617 = vadd.f32 %v3615, %v3616
        %v3618 = vrot.slane %v3617, 1
        %v3619 = vadd.f32 %v3617, %v3618
        %v3620 = vadd.f32 %v3513, %v3514
        %v3621 = vrot.slane %v3620, 4
        %v3622 = vadd.f32 %v3620, %v3621
        %v3623 = vrot.slane %v3622, 2
        %v3624 = vadd.f32 %v3622, %v3623
        %v3625 = vrot.slane %v3624, 1
        %v3626 = vadd.f32 %v3624, %v3625
        %v3643 = vsel %vm798, %v3528, %v3521
        %v3644 = vsel %vm801, %v3535, %v3643
        %v3645 = vsel %vm804, %v3542, %v3644
        %v3646 = vsel %vm807, %v3549, %v3645
        %v3647 = vsel %vm810, %v3556, %v3646
        %v3648 = vsel %vm813, %v3563, %v3647
        %v3649 = vsel %vm816, %v3570, %v3648
        %v3650 = vsel %vm798, %v3584, %v3577
        %v3651 = vsel %vm801, %v3591, %v3650
        %v3652 = vsel %vm804, %v3598, %v3651
        %v3653 = vsel %vm807, %v3605, %v3652
        %v3654 = vsel %vm810, %v3612, %v3653
        %v3655 = vsel %vm813, %v3619, %v3654
        %v3656 = vsel %vm816, %v3626, %v3655
        %v3659 = vlaneseq
        %v3660 = vshrl.u32 %v3659, 7
        %v3661 = vsub.s32 4, %v3660
        %v3662 = vrot.slane %v774, %v3661
        %3663 = vmatprep.subr.mxu0 0.0
        %3664 = vmatpush1.msra.mxu0 %v757
        %3665 = vmatprep.subr.mxu0 0.0
        %3666 = vmatpush1.msra.mxu0 %v756
        %3667 = vmatprep.subr.mxu0 0.0
        %3668 = vmatpush1.msra.mxu0 %v755
        %3669 = vmatprep.subr.mxu0 0.0
        %3670 = vmatpush1.msra.mxu0 %v754
        %3671 = vmatprep.subr.mxu0 0.0
        %3672 = vmatpush1.msra.mxu0 %v753
        %3673 = vmatprep.subr.mxu0 0.0
        %3674 = vmatpush1.msra.mxu0 %v752
        %3675 = vmatprep.subr.mxu0 0.0
        %3676 = vmatpush1.msra.mxu0 %v751
        %3677 = vmatprep.subr.mxu0 0.0
        %3678 = vmatpush1.msra.mxu0 %v750
        %3679 = vmatprep.subr.mxu0 0.0
        %3680 = vmatpush1.msra.mxu0 %v749
        %3681 = vmatprep.subr.mxu0 0.0
        %3682 = vmatpush1.msra.mxu0 %v748
        %3683 = vmatprep.subr.mxu0 0.0
        %3684 = vmatpush1.msra.mxu0 %v747
        %3685 = vmatprep.subr.mxu0 0.0
        %3686 = vmatpush1.msra.mxu0 %v746
        %3687 = vmatprep.subr.mxu0 0.0
        %3688 = vmatpush1.msra.mxu0 %v745
        %3689 = vmatprep.subr.mxu0 0.0
        %3690 = vmatpush1.msra.mxu0 %v744
        %3691 = vmatprep.subr.mxu0 0.0
        %3692 = vmatpush1.msra.mxu0 %v743
        %3693 = vmatprep.subr.mxu0 0.0
        %3694 = vmatpush1.msra.mxu0 %v742
        %3695 = vmatprep.subr.mxu0 0.0
        %3696 = vmatpush2.msra.mxu0 %v773
        %3697 = vmatprep.subr.mxu0 0.0
        %3698 = vmatpush2.msra.mxu0 %v772
        %3699 = vmatprep.subr.mxu0 0.0
        %3700 = vmatpush2.msra.mxu0 %v771
        %3701 = vmatprep.subr.mxu0 0.0
        %3702 = vmatpush2.msra.mxu0 %v770
        %3703 = vmatprep.subr.mxu0 0.0
        %3704 = vmatpush2.msra.mxu0 %v769
        %3705 = vmatprep.subr.mxu0 0.0
        %3706 = vmatpush2.msra.mxu0 %v768
        %3707 = vmatprep.subr.mxu0 0.0
        %3708 = vmatpush2.msra.mxu0 %v767
        %3709 = vmatprep.subr.mxu0 0.0
        %3710 = vmatpush2.msra.mxu0 %v766
        %3711 = vmatprep.subr.mxu0 0.0
        %3712 = vmatpush2.msra.mxu0 %v765
        %3713 = vmatprep.subr.mxu0 0.0
        %3714 = vmatpush2.msra.mxu0 %v764
        %3715 = vmatprep.subr.mxu0 0.0
        %3716 = vmatpush2.msra.mxu0 %v763
        %3717 = vmatprep.subr.mxu0 0.0
        %3718 = vmatpush2.msra.mxu0 %v762
        %3719 = vmatprep.subr.mxu0 0.0
        %3720 = vmatpush2.msra.mxu0 %v761
        %3721 = vmatprep.subr.mxu0 0.0
        %3722 = vmatpush2.msra.mxu0 %v760
        %3723 = vmatprep.subr.mxu0 0.0
        %3724 = vmatpush2.msra.mxu0 %v759
        %3725 = vmatprep.subr.mxu0 0.0
        %3726 = vmatpush2.msra.mxu0 %v758
        %3727 = vmatprep.mubr.f32.mxu0 %v592
        %3728 = vmatmul.mubr.f32.gmra.mxu0 %v3649
        %v3729 = vpop.f32.mrf.mxu0
        %v3730 = vadd.f32 %v3662, %v3729
        %v3731 = vpop.f32.mrf.mxu0
        %3732 = vmatprep.mubr.f32.mxu0 %v593
        %3733 = vmatmul.mubr.f32.gmra.mxu0 %v3656
        %v3734 = vpop.f32.mrf.mxu0
        %v3735 = vadd.f32 %v3662, %v3734
        %v3736 = vpop.f32.mrf.mxu0
        %3737 = vdwg.mxu0
        %v3754 = vsel %vm798, %v1828, %v1822
        %v3755 = vsel %vm801, %v1834, %v3754
        %v3756 = vsel %vm804, %v1840, %v3755
        %v3757 = vsel %vm807, %v1846, %v3756
        %v3758 = vsel %vm810, %v1852, %v3757
        %v3759 = vsel %vm813, %v1858, %v3758
        %v3760 = vsel %vm816, %v1864, %v3759
        %v3761 = vsel %vm798, %v1876, %v1870
        %v3762 = vsel %vm801, %v1882, %v3761
        %v3763 = vsel %vm804, %v1888, %v3762
        %v3764 = vsel %vm807, %v1894, %v3763
        %v3765 = vsel %vm810, %v1900, %v3764
        %v3766 = vsel %vm813, %v1906, %v3765
        %v3767 = vsel %vm816, %v1912, %v3766
        %3770 = vst [vmem:[#allocation2] sm:$0xff] %v3760
        %3771 = vst [vmem:[#allocation2 + $0x8] sm:$0xff] %v3767
        %3772 = vst [vmem:[#allocation3] sm:$0xff] %v3730
        %3773 = vst [vmem:[#allocation3 + $0x8] sm:$0xff] %v3735
        %3774 = vst [vmem:[%s479] sm:$0xff] %v3760
        %3775 = vst [vmem:[%s479 + $0x8] sm:$0xff] %v3767
        %3776 = vst [vmem:[%s486] sm:$0xff] %v3730
        %3777 = vst [vmem:[%s486 + $0x8] sm:$0xff] %v3735
        %s3778 = sand.u32 %s248, 1
        %s3779 = scalar_lea.sflag [#allocation6], %s3778
        %s3780 = sand.u32 %s248, 1
        %s3781 = smul.addr %s3780, 16
        %s3782 = scalar_lea.vmem [#allocation15], %s3781
        %s3783 = sand.u32 %s276, 1
        %s3784 = scalar_lea.sflag [#allocation17], %s3783
        %s3785 = sand.u32 %s276, 1
        %s3786 = smul.addr %s3785, 16
        %s3787 = scalar_lea.vmem [#allocation16], %s3786
        // Predicated region
        $region81: #{tpu_custom_call.1} parent=51 // pred_check
          %p3788 = pneg %p258
        $region82: #{tpu_custom_call.1} parent=51 // pred_check_branch
          %3790 = sbr.rel (%p3788) target = $region84
        $region83: #{tpu_custom_call.1} parent=51 // pred_region
          %s3791 = smul.u32 2, %s37
          %s3793 = ssub.s32 256, 256
          %3794 = vsyncadd %s3779, %s3793
          %s3795 = smul.addr %s38, 2
          %s3796 = sadd.s32 %s3791, %s3795
          %s3797 = smul.addr %s3796, 128
          %s3798 = scalar_lea.hbm %s8, %s3797
          %s3799 = sshll.u32 %s3782, 4
          %s3800 = int_to_ptr.vmem [resolvable:$true] %s3799
          %3805 = dma.vmem_to_hbm [thread:$0]  %s3800, 256, %s3798, %s3779, 128, 128, 8
        $region84: #{tpu_custom_call.1} parent=51 // pred_fallthru
          _
        // Predicated region
        $region85: #{tpu_custom_call.1} parent=51 // pred_check
          %p3806 = pneg %p286
        $region86: #{tpu_custom_call.1} parent=51 // pred_check_branch
          %3808 = sbr.rel (%p3806) target = $region88
        $region87: #{tpu_custom_call.1} parent=51 // pred_region
          %s3809 = smul.u32 2, %s37
          %s3811 = ssub.s32 256, 256
          %3812 = vsyncadd %s3784, %s3811
          %s3813 = smul.addr %s38, 2
          %s3814 = sadd.s32 %s3809, %s3813
          %s3815 = smul.addr %s3814, 128
          %s3816 = scalar_lea.hbm %s9, %s3815
          %s3817 = sshll.u32 %s3787, 4
          %s3818 = int_to_ptr.vmem [resolvable:$true] %s3817
          %3823 = dma.vmem_to_hbm [thread:$0]  %s3818, 256, %s3816, %s3784, 128, 128, 8
        $region88: #{tpu_custom_call.1} parent=51 // pred_fallthru
          _
      $region52: #{tpu_custom_call.1} parent=5 // pred_fallthru
        _
      %p3824 = scmp.le.s32.totalorder 2, %s28
      // Predicated region
      $region89: #{tpu_custom_call.1} parent=5 // pred_check
        %p3825 = pneg %p3824
      $region90: #{tpu_custom_call.1} parent=5 // pred_check_branch
        %3827 = sbr.rel (%p3825) target = $region92
      $region91: #{tpu_custom_call.1} parent=5 // pred_region
        %s3828 = ssub.s32 %s28, 2
        // Predicated region
        $region93: #{tpu_custom_call.1} parent=91 // pred_check
          %p3829 = pneg %p264
        $region94: #{tpu_custom_call.1} parent=91 // pred_check_branch
          %3831 = sbr.rel (%p3829) target = $region96
        $region95: #{tpu_custom_call.1} parent=91 // pred_region
          %s3832 = sand.u32 %s249, 1
          %s3833 = scalar_lea.sflag [#allocation6], %s3832
          %s3834 = sand.u32 %s249, 1
          %s3835 = smul.addr %s3834, 16
          %s3836 = scalar_lea.vmem [#allocation15], %s3835
          %3837 = dma.done %s3833, 256
        $region96: #{tpu_custom_call.1} parent=91 // pred_fallthru
          _
        // Predicated region
        $region97: #{tpu_custom_call.1} parent=91 // pred_check
          %p3838 = pneg %p292
        $region98: #{tpu_custom_call.1} parent=91 // pred_check_branch
          %3840 = sbr.rel (%p3838) target = $region100
        $region99: #{tpu_custom_call.1} parent=91 // pred_region
          %s3841 = sand.u32 %s277, 1
          %s3842 = scalar_lea.sflag [#allocation17], %s3841
          %s3843 = sand.u32 %s277, 1
          %s3844 = smul.addr %s3843, 16
          %s3845 = scalar_lea.vmem [#allocation16], %s3844
          %3846 = dma.done %s3842, 256
        $region100: #{tpu_custom_call.1} parent=91 // pred_fallthru
          _
      $region92: #{tpu_custom_call.1} parent=5 // pred_fallthru
        _
    $region6: #{tpu_custom_call.1} parent=1 // loop_footer
      %s32 = sadd.s32 1, %s28
    $region7: #{tpu_custom_call.1} parent=1 // loop_footer_branch
      %27 = sbr.rel target = $region3
    $region8: #{tpu_custom_call.1} parent=1 // loop_exit
      _
    %3847 = vsyncpa [#allocation5], 1
    %s3848 = scalar_lea.sflag [#allocation5], 1
    %3849 = vsyncpa %s3848, 1
    %3850 = vsyncpa [#allocation8], 1
    %3851 = vsyncpa [#allocation11], 1
    %s3852 = scalar_lea.sflag [#allocation11], 1
    %3853 = vsyncpa %s3852, 1
    %3854 = vsyncpa [#allocation14], 1
    %3855 = vsyncpa [#allocation6], 1
    %s3856 = scalar_lea.sflag [#allocation6], 1
    %3857 = vsyncpa %s3856, 1
    %3858 = vsyncpa [#allocation17], 1
    %s3859 = scalar_lea.sflag [#allocation17], 1
    %3860 = vsyncpa %s3859, 1

</llo_original>
